<compile_context>
chip_gen: v5e
topology: v5e:2x2
jax: 0.10.0
libtpu: 0.0.40
codegen_flags: <defaults>
</compile_context>

<pallas_src>
import jax
import jax.numpy as jnp
from jax import lax
from jax.experimental import pallas as pl
from jax.experimental.pallas import tpu as pltpu


def _round_up(x, m):
    return (x + m - 1) // m * m


# ---------------------------------------------------------------------------
# Kernel helpers (traced inline inside the single fused kernel)
# ---------------------------------------------------------------------------
def _gru_bidir_layer(gi_f, gi_b, whh_f_ref, whh_b_ref, bhn_f_ref, bhn_b_ref,
                     T, Bp, H, seq_ref=None):
    """Interleaved fwd/bwd GRU recurrence for one bidirectional layer.

    gi_f / gi_b : (T*Bp, 3H) f32 hoisted projections, gate-stacked columns [r | z | n],
                  with b_ih (all gates) and b_hh (r, z gates) already folded in.
    whh_*_ref   : (H, 3H) gate-stacked hidden weights (matmul dtype).
    bhn_*_ref   : (1, H) hidden bias of the n gate (must stay in the loop: gated by r).
    seq_ref     : optional (T*Bp, 2H) scratch; fwd h -> cols [:H], bwd h -> cols [H:2H],
                  both written time-aligned.
    Returns (h_fwd_final, h_bwd_final), each (Bp, H) f32.
    """
    wdt = whh_f_ref.dtype
    whh_f = whh_f_ref[...]
    whh_b = whh_b_ref[...]
    # hoist the bias broadcast out of the unrolled loop (JAX does not CSE broadcast_in_dim)
    bhn_f = jnp.broadcast_to(bhn_f_ref[...], (Bp, H))
    bhn_b = jnp.broadcast_to(bhn_b_ref[...], (Bp, H))

    h_f = jnp.zeros((Bp, H), jnp.float32)
    h_b = jnp.zeros((Bp, H), jnp.float32)

    def gru_cell(gi_t, gh, bhn, h_prev):
        # PyTorch GRU cell; gi_t already contains b_ih (all gates) + b_hh (r, z gates)
        r = jax.nn.sigmoid(gi_t[:, 0:H] + gh[:, 0:H])
        z = jax.nn.sigmoid(gi_t[:, H:2 * H] + gh[:, H:2 * H])
        n = jnp.tanh(gi_t[:, 2 * H:3 * H] + r * (gh[:, 2 * H:3 * H] + bhn))
        return (1.0 - z) * n + z * h_prev

    # TODO(synk): replace the full Python unroll with lax.fori_loop(..., unroll=4) and a
    #             (T, Bp, 3H) VMEM gi scratch once T grows past ~32 (bounds live ranges).
    for s in range(T):
        tf = s                 # forward time index
        tb = T - 1 - s         # backward time index (in-kernel reversal, no flip copies)
        lof = tf * Bp
        lob = tb * Bp
        # one gate-stacked MXU push per direction per step; the two directions are
        # independent chains so their MXU latency and gate math can overlap
        gh_f = jnp.dot(h_f.astype(wdt), whh_f, preferred_element_type=jnp.float32)
        gh_b = jnp.dot(h_b.astype(wdt), whh_b, preferred_element_type=jnp.float32)
        h_f = gru_cell(gi_f[lof:lof + Bp, :], gh_f, bhn_f, h_f)
        h_b = gru_cell(gi_b[lob:lob + Bp, :], gh_b, bhn_b, h_b)
        if seq_ref is not None:        # layer 0 only; layer 1 never materializes its sequence
            seq_ref[lof:lof + Bp, 0:H] = h_f
            seq_ref[lob:lob + Bp, H:2 * H] = h_b
    return h_f, h_b


def _encoder_kernel(
    x_ref,                               # (T*Bp, F) f32, time-major, batch padded to Bp
    w0f_ih, w0f_hh, b0f_i, b0f_nh,       # layer0 fwd: (F,3H) (H,3H) (1,3H) (1,H)
    w0b_ih, w0b_hh, b0b_i, b0b_nh,       # layer0 bwd
    w1f_ih, w1f_hh, b1f_i, b1f_nh,       # layer1 fwd: (2H,3H) (H,3H) (1,3H) (1,H)
    w1b_ih, w1b_hh, b1b_i, b1b_nh,       # layer1 bwd
    out_ref,                             # (Bp, 4H)
    seq0_ref,                            # VMEM scratch (T*Bp, 2H): layer-0 [fwd | bwd] outputs
):
    Bp = out_ref.shape[0]
    H = w0f_hh.shape[0]
    T = x_ref.shape[0] // Bp
    wdt = w0f_ih.dtype                   # matmul operand dtype (f32 or bf16); gate math stays f32

    x = x_ref[...].astype(wdt)           # (T*Bp, F)

    # ---- hoisted input projection, layer 0: one gate-stacked matmul per direction ----------
    gi0f = jnp.dot(x, w0f_ih[...], preferred_element_type=jnp.float32) + b0f_i[...]
    gi0b = jnp.dot(x, w0b_ih[...], preferred_element_type=jnp.float32) + b0b_i[...]

    # ---- layer 0: interleaved fwd/bwd recurrence; per-step outputs kept in VMEM scratch ----
    h_f0, h_b0 = _gru_bidir_layer(gi0f, gi0b, w0f_hh, w0b_hh, b0f_nh, b0b_nh,
                                  T, Bp, H, seq_ref=seq0_ref)

    # inter-layer dropout is identity at inference time (training-only in nn.GRU)
    seq01 = seq0_ref[...].astype(wdt)    # (T*Bp, 2H) = [fwd | bwd]

    # ---- hoisted input projection, layer 1: single K=2H matmul per direction ---------------
    gi1f = jnp.dot(seq01, w1f_ih[...], preferred_element_type=jnp.float32) + b1f_i[...]
    gi1b = jnp.dot(seq01, w1b_ih[...], preferred_element_type=jnp.float32) + b1b_i[...]

    # ---- layer 1: only the final hidden states are needed -----------------------------------
    h_f1, h_b1 = _gru_bidir_layer(gi1f, gi1b, w1f_hh, w1b_hh, b1f_nh, b1b_nh, T, Bp, H)

    # direct slab stores (no in-kernel lane concat);
    # matches torch.cat((hidden[0], hidden[1], hidden[2], hidden[3]), 1)
    out_ref[:, 0 * H:1 * H] = h_f0
    out_ref[:, 1 * H:2 * H] = h_b0
    out_ref[:, 2 * H:3 * H] = h_f1
    out_ref[:, 3 * H:4 * H] = h_b1


# ---------------------------------------------------------------------------
# Wrapper
# ---------------------------------------------------------------------------
def encoder_forward(inputs_btf, kparams):
    """inputs_btf: (B, T, NUM_FEATURES). Returns (B, 4 * hidden_size_layer_1)."""
    B, T, F = inputs_btf.shape
    H = kparams["l0_fwd"]["w_hh"].shape[0]
    Bp = _round_up(B, 8)                 # fill the 8 sublanes; keeps per-step slices tile-aligned

    # time-major, batch padded to Bp, flattened -> clean 2-D, sublane-aligned row blocks
    x = jnp.transpose(inputs_btf, (1, 0, 2)).astype(jnp.float32)       # (T, B, F)
    x = jnp.pad(x, ((0, 0), (0, Bp - B), (0, 0))).reshape(T * Bp, F)   # (T*Bp, F)

    args = [x]
    for name in ("l0_fwd", "l0_bwd", "l1_fwd", "l1_bwd"):
        p = kparams[name]
        args += [p["w_ih"], p["w_hh"], p["b_i"], p["b_nh"]]

    vmem = pl.BlockSpec(memory_space=pltpu.MemorySpace.VMEM)
    out = pl.pallas_call(
        _encoder_kernel,
        out_shape=jax.ShapeDtypeStruct((Bp, 4 * H), jnp.float32),
        in_specs=[vmem] * len(args),
        out_specs=vmem,
        scratch_shapes=[pltpu.VMEM((T * Bp, 2 * H), jnp.float32)],     # layer-0 [fwd|bwd] seq
    )(*args)
    return out[:B]


# ---------------------------------------------------------------------------
# Parameter handling: PyTorch nn.GRU layout -> gate-stacked kernel layout.
# nn.GRU stores weight_ih (3H, D_in), weight_hh (3H, H), biases (3H,), gate order [r, z, n],
# all initialized U(-1/sqrt(H), 1/sqrt(H)).
# ---------------------------------------------------------------------------
def init_raw_gru_direction(key, input_size, hidden_size):
    k = 1.0 / jnp.sqrt(jnp.float32(hidden_size))
    k1, k2, k3, k4 = jax.random.split(key, 4)
    w_ih = jax.random.uniform(k1, (3 * hidden_size, input_size), jnp.float32, -k, k)
    w_hh = jax.random.uniform(k2, (3 * hidden_size, hidden_size), jnp.float32, -k, k)
    b_ih = jax.random.uniform(k3, (3 * hidden_size,), jnp.float32, -k, k)
    b_hh = jax.random.uniform(k4, (3 * hidden_size,), jnp.float32, -k, k)
    return (w_ih, w_hh, b_ih, b_hh)


def _convert_direction(w_ih, w_hh, b_ih, b_hh, matmul_dtype):
    H = w_hh.shape[1]
    w_ih_s = w_ih.T.astype(matmul_dtype)                      # (D_in, 3H), gate cols [r|z|n]
    w_hh_s = w_hh.T.astype(matmul_dtype)                      # (H, 3H)
    b_i = jnp.concatenate([
        b_ih[0:H] + b_hh[0:H],           # r: both biases folded into the hoisted projection
        b_ih[H:2 * H] + b_hh[H:2 * H],   # z: both biases folded
        b_ih[2 * H:3 * H],               # n: input bias only (hidden bias is gated by r)
    ])[None, :].astype(jnp.float32)                            # (1, 3H)
    b_nh = b_hh[2 * H:3 * H][None, :].astype(jnp.float32)      # (1, H)
    return {"w_ih": w_ih_s, "w_hh": w_hh_s, "b_i": b_i, "b_nh": b_nh}


def convert_params(raw, matmul_dtype=jnp.float32):
    return {name: _convert_direction(*raw[name], matmul_dtype) for name in
            ("l0_fwd", "l0_bwd", "l1_fwd", "l1_bwd")}


# ---------------------------------------------------------------------------
# Pure-JAX reference on the RAW (PyTorch-layout) params -> validates both the
# weight conversion and the kernel numerics.
# ---------------------------------------------------------------------------
def _gru_layer_ref(x_tbd, w_ih, w_hh, b_ih, b_hh, reverse=False):
    H = w_hh.shape[1]
    xs = x_tbd[::-1] if reverse else x_tbd

    def step(h, x_t):
        gi = x_t @ w_ih.T + b_ih
        gh = h @ w_hh.T + b_hh
        r = jax.nn.sigmoid(gi[:, :H] + gh[:, :H])
        z = jax.nn.sigmoid(gi[:, H:2 * H] + gh[:, H:2 * H])
        n = jnp.tanh(gi[:, 2 * H:] + r * gh[:, 2 * H:])
        h_new = (1.0 - z) * n + z * h
        return h_new, h_new

    h0 = jnp.zeros((x_tbd.shape[1], H), jnp.float32)
    h_fin, out = lax.scan(step, h0, xs)
    if reverse:
        out = out[::-1]
    return out, h_fin


def encoder_forward_ref(inputs_btf, raw_params):
    x = jnp.transpose(inputs_btf, (1, 0, 2)).astype(jnp.float32)
    out_f0, h_f0 = _gru_layer_ref(x, *raw_params["l0_fwd"], reverse=False)
    out_b0, h_b0 = _gru_layer_ref(x, *raw_params["l0_bwd"], reverse=True)
    layer0_out = jnp.concatenate([out_f0, out_b0], axis=-1)
    _, h_f1 = _gru_layer_ref(layer0_out, *raw_params["l1_fwd"], reverse=False)
    _, h_b1 = _gru_layer_ref(layer0_out, *raw_params["l1_bwd"], reverse=True)
    return jnp.concatenate([h_f0, h_b0, h_f1, h_b1], axis=1)


if __name__ == "__main__":
    NUM_FEATURES = 4          # Encoder input_size
    HIDDEN_1 = 16             # hidden_size_layer_1
    # hidden_size_layer_2 / dropout_encoder are stored by the module but unused in forward
    B, T = 2, 8

    key = jax.random.PRNGKey(0)
    k_p, k_x = jax.random.split(key)
    kp = jax.random.split(k_p, 4)
    raw = {
        "l0_fwd": init_raw_gru_direction(kp[0], NUM_FEATURES, HIDDEN_1),
        "l0_bwd": init_raw_gru_direction(kp[1], NUM_FEATURES, HIDDEN_1),
        "l1_fwd": init_raw_gru_direction(kp[2], 2 * HIDDEN_1, HIDDEN_1),
        "l1_bwd": init_raw_gru_direction(kp[3], 2 * HIDDEN_1, HIDDEN_1),
    }
    inputs = jax.random.normal(k_x, (B, T, NUM_FEATURES), jnp.float32)

    hidden_ref = jax.block_until_ready(encoder_forward_ref(inputs, raw))

    # f32 matmul operands: strict check against the pure-JAX reference
    kparams_f32 = convert_params(raw, matmul_dtype=jnp.float32)
    hidden = jax.block_until_ready(jax.jit(encoder_forward)(inputs, kparams_f32))
    assert hidden.shape == (B, 4 * HIDDEN_1), hidden.shape
    assert jnp.allclose(hidden, hidden_ref, atol=1e-5, rtol=1e-5), "f32 mismatch vs JAX reference"

    # bf16 matmul operands (v6e/v7x MXU native rate), f32 accumulation + f32 gate math
    kparams_bf16 = convert_params(raw, matmul_dtype=jnp.bfloat16)
    hidden_bf16 = jax.block_until_ready(jax.jit(encoder_forward)(inputs, kparams_bf16))
    assert jnp.allclose(hidden_bf16, hidden_ref, atol=5e-2, rtol=5e-2), "bf16 mismatch vs reference"

    print("KERNEL_OK")
</pallas_src>

<mosaic_0001>
module attributes {stable_mosaic.version = 11 : i64} {
  func.func @_encoder_kernel(%arg0: memref<64x4xf32, #tpu.memory_space<vmem>>, %arg1: memref<4x48xf32, #tpu.memory_space<vmem>>, %arg2: memref<16x48xf32, #tpu.memory_space<vmem>>, %arg3: memref<1x48xf32, #tpu.memory_space<vmem>>, %arg4: memref<1x16xf32, #tpu.memory_space<vmem>>, %arg5: memref<4x48xf32, #tpu.memory_space<vmem>>, %arg6: memref<16x48xf32, #tpu.memory_space<vmem>>, %arg7: memref<1x48xf32, #tpu.memory_space<vmem>>, %arg8: memref<1x16xf32, #tpu.memory_space<vmem>>, %arg9: memref<32x48xf32, #tpu.memory_space<vmem>>, %arg10: memref<16x48xf32, #tpu.memory_space<vmem>>, %arg11: memref<1x48xf32, #tpu.memory_space<vmem>>, %arg12: memref<1x16xf32, #tpu.memory_space<vmem>>, %arg13: memref<32x48xf32, #tpu.memory_space<vmem>>, %arg14: memref<16x48xf32, #tpu.memory_space<vmem>>, %arg15: memref<1x48xf32, #tpu.memory_space<vmem>>, %arg16: memref<1x16xf32, #tpu.memory_space<vmem>>, %arg17: memref<8x64xf32, #tpu.memory_space<vmem>>, %arg18: memref<64x32xf32, #tpu.memory_space<vmem>>) attributes {dimension_semantics = [], scalar_prefetch = 0 : i64, scratch_operands = 1 : i64, tpu.core_type = #tpu.core_type<tc>} {
    %c0 = arith.constant 0 : index
    %c0_0 = arith.constant 0 : index
    %0 = vector.load %arg0[%c0, %c0_0] : memref<64x4xf32, #tpu.memory_space<vmem>>, vector<64x4xf32>
    %c0_1 = arith.constant 0 : index
    %c0_2 = arith.constant 0 : index
    %1 = vector.load %arg1[%c0_1, %c0_2] : memref<4x48xf32, #tpu.memory_space<vmem>>, vector<4x48xf32>
    %cst = arith.constant dense<0.000000e+00> : vector<64x48xf32>
    %2 = tpu.matmul %0, %1, %cst {dimension_numbers = #tpu.dot_dimension_numbers<[1], [0], [0], [1], [0, 0, 1, 1], [], []>} : vector<64x4xf32>, vector<4x48xf32>, vector<64x48xf32> -> vector<64x48xf32>
    %c0_3 = arith.constant 0 : index
    %c0_4 = arith.constant 0 : index
    %3 = vector.load %arg3[%c0_3, %c0_4] : memref<1x48xf32, #tpu.memory_space<vmem>>, vector<1x48xf32>
    %4 = vector.broadcast %3 : vector<1x48xf32> to vector<64x48xf32>
    %5 = arith.addf %2, %4 : vector<64x48xf32>
    %c0_5 = arith.constant 0 : index
    %c0_6 = arith.constant 0 : index
    %6 = vector.load %arg5[%c0_5, %c0_6] : memref<4x48xf32, #tpu.memory_space<vmem>>, vector<4x48xf32>
    %cst_7 = arith.constant dense<0.000000e+00> : vector<64x48xf32>
    %7 = tpu.matmul %0, %6, %cst_7 {dimension_numbers = #tpu.dot_dimension_numbers<[1], [0], [0], [1], [0, 0, 1, 1], [], []>} : vector<64x4xf32>, vector<4x48xf32>, vector<64x48xf32> -> vector<64x48xf32>
    %c0_8 = arith.constant 0 : index
    %c0_9 = arith.constant 0 : index
    %8 = vector.load %arg7[%c0_8, %c0_9] : memref<1x48xf32, #tpu.memory_space<vmem>>, vector<1x48xf32>
    %9 = vector.broadcast %8 : vector<1x48xf32> to vector<64x48xf32>
    %10 = arith.addf %7, %9 : vector<64x48xf32>
    %c0_10 = arith.constant 0 : index
    %c0_11 = arith.constant 0 : index
    %11 = vector.load %arg2[%c0_10, %c0_11] : memref<16x48xf32, #tpu.memory_space<vmem>>, vector<16x48xf32>
    %c0_12 = arith.constant 0 : index
    %c0_13 = arith.constant 0 : index
    %12 = vector.load %arg6[%c0_12, %c0_13] : memref<16x48xf32, #tpu.memory_space<vmem>>, vector<16x48xf32>
    %c0_14 = arith.constant 0 : index
    %c0_15 = arith.constant 0 : index
    %13 = vector.load %arg4[%c0_14, %c0_15] : memref<1x16xf32, #tpu.memory_space<vmem>>, vector<1x16xf32>
    %14 = vector.shape_cast %13 : vector<1x16xf32> to vector<1x16xf32>
    %15 = vector.broadcast %14 : vector<1x16xf32> to vector<8x16xf32>
    %c0_16 = arith.constant 0 : index
    %c0_17 = arith.constant 0 : index
    %16 = vector.load %arg8[%c0_16, %c0_17] : memref<1x16xf32, #tpu.memory_space<vmem>>, vector<1x16xf32>
    %17 = vector.shape_cast %16 : vector<1x16xf32> to vector<1x16xf32>
    %18 = vector.broadcast %17 : vector<1x16xf32> to vector<8x16xf32>
    %cst_18 = arith.constant 0.000000e+00 : f32
    %19 = vector.broadcast %cst_18 : f32 to vector<8x16xf32>
    %cst_19 = arith.constant 0.000000e+00 : f32
    %20 = vector.broadcast %cst_19 : f32 to vector<8x16xf32>
    %cst_20 = arith.constant dense<0.000000e+00> : vector<8x48xf32>
    %21 = tpu.matmul %19, %11, %cst_20 {dimension_numbers = #tpu.dot_dimension_numbers<[1], [0], [0], [1], [0, 0, 1, 1], [], []>} : vector<8x16xf32>, vector<16x48xf32>, vector<8x48xf32> -> vector<8x48xf32>
    %cst_21 = arith.constant dense<0.000000e+00> : vector<8x48xf32>
    %22 = tpu.matmul %20, %12, %cst_21 {dimension_numbers = #tpu.dot_dimension_numbers<[1], [0], [0], [1], [0, 0, 1, 1], [], []>} : vector<8x16xf32>, vector<16x48xf32>, vector<8x48xf32> -> vector<8x48xf32>
    %23 = vector.extract_strided_slice %5 {offsets = [0, 0], sizes = [8, 48], strides = [1, 1]} : vector<64x48xf32> to vector<8x48xf32>
    %24 = vector.extract_strided_slice %23 {offsets = [0, 0], sizes = [8, 16], strides = [1, 1]} : vector<8x48xf32> to vector<8x16xf32>
    %25 = vector.extract_strided_slice %21 {offsets = [0, 0], sizes = [8, 16], strides = [1, 1]} : vector<8x48xf32> to vector<8x16xf32>
    %26 = arith.addf %24, %25 : vector<8x16xf32>
    %27 = arith.negf %26 : vector<8x16xf32>
    %28 = math.exp %27 : vector<8x16xf32>
    %cst_22 = arith.constant 1.000000e+00 : f32
    %29 = vector.broadcast %cst_22 : f32 to vector<8x16xf32>
    %30 = arith.addf %29, %28 : vector<8x16xf32>
    %31 = arith.divf %29, %30 : vector<8x16xf32>
    %32 = vector.extract_strided_slice %23 {offsets = [0, 16], sizes = [8, 16], strides = [1, 1]} : vector<8x48xf32> to vector<8x16xf32>
    %33 = vector.extract_strided_slice %21 {offsets = [0, 16], sizes = [8, 16], strides = [1, 1]} : vector<8x48xf32> to vector<8x16xf32>
    %34 = arith.addf %32, %33 : vector<8x16xf32>
    %35 = arith.negf %34 : vector<8x16xf32>
    %36 = math.exp %35 : vector<8x16xf32>
    %cst_23 = arith.constant 1.000000e+00 : f32
    %37 = vector.broadcast %cst_23 : f32 to vector<8x16xf32>
    %38 = arith.addf %37, %36 : vector<8x16xf32>
    %39 = arith.divf %37, %38 : vector<8x16xf32>
    %40 = vector.extract_strided_slice %23 {offsets = [0, 32], sizes = [8, 16], strides = [1, 1]} : vector<8x48xf32> to vector<8x16xf32>
    %41 = vector.extract_strided_slice %21 {offsets = [0, 32], sizes = [8, 16], strides = [1, 1]} : vector<8x48xf32> to vector<8x16xf32>
    %42 = arith.addf %41, %15 : vector<8x16xf32>
    %43 = arith.mulf %31, %42 : vector<8x16xf32>
    %44 = arith.addf %40, %43 : vector<8x16xf32>
    %45 = math.tanh %44 : vector<8x16xf32>
    %cst_24 = arith.constant 1.000000e+00 : f32
    %46 = vector.broadcast %cst_24 : f32 to vector<8x16xf32>
    %47 = arith.subf %46, %39 : vector<8x16xf32>
    %48 = arith.mulf %47, %45 : vector<8x16xf32>
    %49 = arith.mulf %39, %19 : vector<8x16xf32>
    %50 = arith.addf %48, %49 : vector<8x16xf32>
    %51 = vector.extract_strided_slice %10 {offsets = [56, 0], sizes = [8, 48], strides = [1, 1]} : vector<64x48xf32> to vector<8x48xf32>
    %52 = vector.extract_strided_slice %51 {offsets = [0, 0], sizes = [8, 16], strides = [1, 1]} : vector<8x48xf32> to vector<8x16xf32>
    %53 = vector.extract_strided_slice %22 {offsets = [0, 0], sizes = [8, 16], strides = [1, 1]} : vector<8x48xf32> to vector<8x16xf32>
    %54 = arith.addf %52, %53 : vector<8x16xf32>
    %55 = arith.negf %54 : vector<8x16xf32>
    %56 = math.exp %55 : vector<8x16xf32>
    %cst_25 = arith.constant 1.000000e+00 : f32
    %57 = vector.broadcast %cst_25 : f32 to vector<8x16xf32>
    %58 = arith.addf %57, %56 : vector<8x16xf32>
    %59 = arith.divf %57, %58 : vector<8x16xf32>
    %60 = vector.extract_strided_slice %51 {offsets = [0, 16], sizes = [8, 16], strides = [1, 1]} : vector<8x48xf32> to vector<8x16xf32>
    %61 = vector.extract_strided_slice %22 {offsets = [0, 16], sizes = [8, 16], strides = [1, 1]} : vector<8x48xf32> to vector<8x16xf32>
    %62 = arith.addf %60, %61 : vector<8x16xf32>
    %63 = arith.negf %62 : vector<8x16xf32>
    %64 = math.exp %63 : vector<8x16xf32>
    %cst_26 = arith.constant 1.000000e+00 : f32
    %65 = vector.broadcast %cst_26 : f32 to vector<8x16xf32>
    %66 = arith.addf %65, %64 : vector<8x16xf32>
    %67 = arith.divf %65, %66 : vector<8x16xf32>
    %68 = vector.extract_strided_slice %51 {offsets = [0, 32], sizes = [8, 16], strides = [1, 1]} : vector<8x48xf32> to vector<8x16xf32>
    %69 = vector.extract_strided_slice %22 {offsets = [0, 32], sizes = [8, 16], strides = [1, 1]} : vector<8x48xf32> to vector<8x16xf32>
    %70 = arith.addf %69, %18 : vector<8x16xf32>
    %71 = arith.mulf %59, %70 : vector<8x16xf32>
    %72 = arith.addf %68, %71 : vector<8x16xf32>
    %73 = math.tanh %72 : vector<8x16xf32>
    %cst_27 = arith.constant 1.000000e+00 : f32
    %74 = vector.broadcast %cst_27 : f32 to vector<8x16xf32>
    %75 = arith.subf %74, %67 : vector<8x16xf32>
    %76 = arith.mulf %75, %73 : vector<8x16xf32>
    %77 = arith.mulf %67, %20 : vector<8x16xf32>
    %78 = arith.addf %76, %77 : vector<8x16xf32>
    %c0_28 = arith.constant 0 : index
    %c0_29 = arith.constant 0 : index
    %79 = vector.load %arg18[%c0_28, %c0_29] : memref<64x32xf32, #tpu.memory_space<vmem>>, vector<8x16xf32>
    tpu.vector_store %arg18[%c0_28, %c0_29], %50 {strides = array<i32>} : memref<64x32xf32, #tpu.memory_space<vmem>>, vector<8x16xf32>,
    %c56 = arith.constant 56 : index
    %c16 = arith.constant 16 : index
    %80 = vector.load %arg18[%c56, %c16] : memref<64x32xf32, #tpu.memory_space<vmem>>, vector<8x16xf32>
    tpu.vector_store %arg18[%c56, %c16], %78 {strides = array<i32>} : memref<64x32xf32, #tpu.memory_space<vmem>>, vector<8x16xf32>,
    %cst_30 = arith.constant dense<0.000000e+00> : vector<8x48xf32>
    %81 = tpu.matmul %50, %11, %cst_30 {dimension_numbers = #tpu.dot_dimension_numbers<[1], [0], [0], [1], [0, 0, 1, 1], [], []>} : vector<8x16xf32>, vector<16x48xf32>, vector<8x48xf32> -> vector<8x48xf32>
    %cst_31 = arith.constant dense<0.000000e+00> : vector<8x48xf32>
    %82 = tpu.matmul %78, %12, %cst_31 {dimension_numbers = #tpu.dot_dimension_numbers<[1], [0], [0], [1], [0, 0, 1, 1], [], []>} : vector<8x16xf32>, vector<16x48xf32>, vector<8x48xf32> -> vector<8x48xf32>
    %83 = vector.extract_strided_slice %5 {offsets = [8, 0], sizes = [8, 48], strides = [1, 1]} : vector<64x48xf32> to vector<8x48xf32>
    %84 = vector.extract_strided_slice %83 {offsets = [0, 0], sizes = [8, 16], strides = [1, 1]} : vector<8x48xf32> to vector<8x16xf32>
    %85 = vector.extract_strided_slice %81 {offsets = [0, 0], sizes = [8, 16], strides = [1, 1]} : vector<8x48xf32> to vector<8x16xf32>
    %86 = arith.addf %84, %85 : vector<8x16xf32>
    %87 = arith.negf %86 : vector<8x16xf32>
    %88 = math.exp %87 : vector<8x16xf32>
    %cst_32 = arith.constant 1.000000e+00 : f32
    %89 = vector.broadcast %cst_32 : f32 to vector<8x16xf32>
    %90 = arith.addf %89, %88 : vector<8x16xf32>
    %91 = arith.divf %89, %90 : vector<8x16xf32>
    %92 = vector.extract_strided_slice %83 {offsets = [0, 16], sizes = [8, 16], strides = [1, 1]} : vector<8x48xf32> to vector<8x16xf32>
    %93 = vector.extract_strided_slice %81 {offsets = [0, 16], sizes = [8, 16], strides = [1, 1]} : vector<8x48xf32> to vector<8x16xf32>
    %94 = arith.addf %92, %93 : vector<8x16xf32>
    %95 = arith.negf %94 : vector<8x16xf32>
    %96 = math.exp %95 : vector<8x16xf32>
    %cst_33 = arith.constant 1.000000e+00 : f32
    %97 = vector.broadcast %cst_33 : f32 to vector<8x16xf32>
    %98 = arith.addf %97, %96 : vector<8x16xf32>
    %99 = arith.divf %97, %98 : vector<8x16xf32>
    %100 = vector.extract_strided_slice %83 {offsets = [0, 32], sizes = [8, 16], strides = [1, 1]} : vector<8x48xf32> to vector<8x16xf32>
    %101 = vector.extract_strided_slice %81 {offsets = [0, 32], sizes = [8, 16], strides = [1, 1]} : vector<8x48xf32> to vector<8x16xf32>
    %102 = arith.addf %101, %15 : vector<8x16xf32>
    %103 = arith.mulf %91, %102 : vector<8x16xf32>
    %104 = arith.addf %100, %103 : vector<8x16xf32>
    %105 = math.tanh %104 : vector<8x16xf32>
    %cst_34 = arith.constant 1.000000e+00 : f32
    %106 = vector.broadcast %cst_34 : f32 to vector<8x16xf32>
    %107 = arith.subf %106, %99 : vector<8x16xf32>
    %108 = arith.mulf %107, %105 : vector<8x16xf32>
    %109 = arith.mulf %99, %50 : vector<8x16xf32>
    %110 = arith.addf %108, %109 : vector<8x16xf32>
    %111 = vector.extract_strided_slice %10 {offsets = [48, 0], sizes = [8, 48], strides = [1, 1]} : vector<64x48xf32> to vector<8x48xf32>
    %112 = vector.extract_strided_slice %111 {offsets = [0, 0], sizes = [8, 16], strides = [1, 1]} : vector<8x48xf32> to vector<8x16xf32>
    %113 = vector.extract_strided_slice %82 {offsets = [0, 0], sizes = [8, 16], strides = [1, 1]} : vector<8x48xf32> to vector<8x16xf32>
    %114 = arith.addf %112, %113 : vector<8x16xf32>
    %115 = arith.negf %114 : vector<8x16xf32>
    %116 = math.exp %115 : vector<8x16xf32>
    %cst_35 = arith.constant 1.000000e+00 : f32
    %117 = vector.broadcast %cst_35 : f32 to vector<8x16xf32>
    %118 = arith.addf %117, %116 : vector<8x16xf32>
    %119 = arith.divf %117, %118 : vector<8x16xf32>
    %120 = vector.extract_strided_slice %111 {offsets = [0, 16], sizes = [8, 16], strides = [1, 1]} : vector<8x48xf32> to vector<8x16xf32>
    %121 = vector.extract_strided_slice %82 {offsets = [0, 16], sizes = [8, 16], strides = [1, 1]} : vector<8x48xf32> to vector<8x16xf32>
    %122 = arith.addf %120, %121 : vector<8x16xf32>
    %123 = arith.negf %122 : vector<8x16xf32>
    %124 = math.exp %123 : vector<8x16xf32>
    %cst_36 = arith.constant 1.000000e+00 : f32
    %125 = vector.broadcast %cst_36 : f32 to vector<8x16xf32>
    %126 = arith.addf %125, %124 : vector<8x16xf32>
    %127 = arith.divf %125, %126 : vector<8x16xf32>
    %128 = vector.extract_strided_slice %111 {offsets = [0, 32], sizes = [8, 16], strides = [1, 1]} : vector<8x48xf32> to vector<8x16xf32>
    %129 = vector.extract_strided_slice %82 {offsets = [0, 32], sizes = [8, 16], strides = [1, 1]} : vector<8x48xf32> to vector<8x16xf32>
    %130 = arith.addf %129, %18 : vector<8x16xf32>
    %131 = arith.mulf %119, %130 : vector<8x16xf32>
    %132 = arith.addf %128, %131 : vector<8x16xf32>
    %133 = math.tanh %132 : vector<8x16xf32>
    %cst_37 = arith.constant 1.000000e+00 : f32
    %134 = vector.broadcast %cst_37 : f32 to vector<8x16xf32>
    %135 = arith.subf %134, %127 : vector<8x16xf32>
    %136 = arith.mulf %135, %133 : vector<8x16xf32>
    %137 = arith.mulf %127, %78 : vector<8x16xf32>
    %138 = arith.addf %136, %137 : vector<8x16xf32>
    %c8 = arith.constant 8 : index
    %c0_38 = arith.constant 0 : index
    %139 = vector.load %arg18[%c8, %c0_38] : memref<64x32xf32, #tpu.memory_space<vmem>>, vector<8x16xf32>
    tpu.vector_store %arg18[%c8, %c0_38], %110 {strides = array<i32>} : memref<64x32xf32, #tpu.memory_space<vmem>>, vector<8x16xf32>,
    %c48 = arith.constant 48 : index
    %c16_39 = arith.constant 16 : index
    %140 = vector.load %arg18[%c48, %c16_39] : memref<64x32xf32, #tpu.memory_space<vmem>>, vector<8x16xf32>
    tpu.vector_store %arg18[%c48, %c16_39], %138 {strides = array<i32>} : memref<64x32xf32, #tpu.memory_space<vmem>>, vector<8x16xf32>,
    %cst_40 = arith.constant dense<0.000000e+00> : vector<8x48xf32>
    %141 = tpu.matmul %110, %11, %cst_40 {dimension_numbers = #tpu.dot_dimension_numbers<[1], [0], [0], [1], [0, 0, 1, 1], [], []>} : vector<8x16xf32>, vector<16x48xf32>, vector<8x48xf32> -> vector<8x48xf32>
    %cst_41 = arith.constant dense<0.000000e+00> : vector<8x48xf32>
    %142 = tpu.matmul %138, %12, %cst_41 {dimension_numbers = #tpu.dot_dimension_numbers<[1], [0], [0], [1], [0, 0, 1, 1], [], []>} : vector<8x16xf32>, vector<16x48xf32>, vector<8x48xf32> -> vector<8x48xf32>
    %143 = vector.extract_strided_slice %5 {offsets = [16, 0], sizes = [8, 48], strides = [1, 1]} : vector<64x48xf32> to vector<8x48xf32>
    %144 = vector.extract_strided_slice %143 {offsets = [0, 0], sizes = [8, 16], strides = [1, 1]} : vector<8x48xf32> to vector<8x16xf32>
    %145 = vector.extract_strided_slice %141 {offsets = [0, 0], sizes = [8, 16], strides = [1, 1]} : vector<8x48xf32> to vector<8x16xf32>
    %146 = arith.addf %144, %145 : vector<8x16xf32>
    %147 = arith.negf %146 : vector<8x16xf32>
    %148 = math.exp %147 : vector<8x16xf32>
    %cst_42 = arith.constant 1.000000e+00 : f32
    %149 = vector.broadcast %cst_42 : f32 to vector<8x16xf32>
    %150 = arith.addf %149, %148 : vector<8x16xf32>
    %151 = arith.divf %149, %150 : vector<8x16xf32>
    %152 = vector.extract_strided_slice %143 {offsets = [0, 16], sizes = [8, 16], strides = [1, 1]} : vector<8x48xf32> to vector<8x16xf32>
    %153 = vector.extract_strided_slice %141 {offsets = [0, 16], sizes = [8, 16], strides = [1, 1]} : vector<8x48xf32> to vector<8x16xf32>
    %154 = arith.addf %152, %153 : vector<8x16xf32>
    %155 = arith.negf %154 : vector<8x16xf32>
    %156 = math.exp %155 : vector<8x16xf32>
    %cst_43 = arith.constant 1.000000e+00 : f32
    %157 = vector.broadcast %cst_43 : f32 to vector<8x16xf32>
    %158 = arith.addf %157, %156 : vector<8x16xf32>
    %159 = arith.divf %157, %158 : vector<8x16xf32>
    %160 = vector.extract_strided_slice %143 {offsets = [0, 32], sizes = [8, 16], strides = [1, 1]} : vector<8x48xf32> to vector<8x16xf32>
    %161 = vector.extract_strided_slice %141 {offsets = [0, 32], sizes = [8, 16], strides = [1, 1]} : vector<8x48xf32> to vector<8x16xf32>
    %162 = arith.addf %161, %15 : vector<8x16xf32>
    %163 = arith.mulf %151, %162 : vector<8x16xf32>
    %164 = arith.addf %160, %163 : vector<8x16xf32>
    %165 = math.tanh %164 : vector<8x16xf32>
    %cst_44 = arith.constant 1.000000e+00 : f32
    %166 = vector.broadcast %cst_44 : f32 to vector<8x16xf32>
    %167 = arith.subf %166, %159 : vector<8x16xf32>
    %168 = arith.mulf %167, %165 : vector<8x16xf32>
    %169 = arith.mulf %159, %110 : vector<8x16xf32>
    %170 = arith.addf %168, %169 : vector<8x16xf32>
    %171 = vector.extract_strided_slice %10 {offsets = [40, 0], sizes = [8, 48], strides = [1, 1]} : vector<64x48xf32> to vector<8x48xf32>
    %172 = vector.extract_strided_slice %171 {offsets = [0, 0], sizes = [8, 16], strides = [1, 1]} : vector<8x48xf32> to vector<8x16xf32>
    %173 = vector.extract_strided_slice %142 {offsets = [0, 0], sizes = [8, 16], strides = [1, 1]} : vector<8x48xf32> to vector<8x16xf32>
    %174 = arith.addf %172, %173 : vector<8x16xf32>
    %175 = arith.negf %174 : vector<8x16xf32>
    %176 = math.exp %175 : vector<8x16xf32>
    %cst_45 = arith.constant 1.000000e+00 : f32
    %177 = vector.broadcast %cst_45 : f32 to vector<8x16xf32>
    %178 = arith.addf %177, %176 : vector<8x16xf32>
    %179 = arith.divf %177, %178 : vector<8x16xf32>
    %180 = vector.extract_strided_slice %171 {offsets = [0, 16], sizes = [8, 16], strides = [1, 1]} : vector<8x48xf32> to vector<8x16xf32>
    %181 = vector.extract_strided_slice %142 {offsets = [0, 16], sizes = [8, 16], strides = [1, 1]} : vector<8x48xf32> to vector<8x16xf32>
    %182 = arith.addf %180, %181 : vector<8x16xf32>
    %183 = arith.negf %182 : vector<8x16xf32>
    %184 = math.exp %183 : vector<8x16xf32>
    %cst_46 = arith.constant 1.000000e+00 : f32
    %185 = vector.broadcast %cst_46 : f32 to vector<8x16xf32>
    %186 = arith.addf %185, %184 : vector<8x16xf32>
    %187 = arith.divf %185, %186 : vector<8x16xf32>
    %188 = vector.extract_strided_slice %171 {offsets = [0, 32], sizes = [8, 16], strides = [1, 1]} : vector<8x48xf32> to vector<8x16xf32>
    %189 = vector.extract_strided_slice %142 {offsets = [0, 32], sizes = [8, 16], strides = [1, 1]} : vector<8x48xf32> to vector<8x16xf32>
    %190 = arith.addf %189, %18 : vector<8x16xf32>
    %191 = arith.mulf %179, %190 : vector<8x16xf32>
    %192 = arith.addf %188, %191 : vector<8x16xf32>
    %193 = math.tanh %192 : vector<8x16xf32>
    %cst_47 = arith.constant 1.000000e+00 : f32
    %194 = vector.broadcast %cst_47 : f32 to vector<8x16xf32>
    %195 = arith.subf %194, %187 : vector<8x16xf32>
    %196 = arith.mulf %195, %193 : vector<8x16xf32>
    %197 = arith.mulf %187, %138 : vector<8x16xf32>
    %198 = arith.addf %196, %197 : vector<8x16xf32>
    %c16_48 = arith.constant 16 : index
    %c0_49 = arith.constant 0 : index
    %199 = vector.load %arg18[%c16_48, %c0_49] : memref<64x32xf32, #tpu.memory_space<vmem>>, vector<8x16xf32>
    tpu.vector_store %arg18[%c16_48, %c0_49], %170 {strides = array<i32>} : memref<64x32xf32, #tpu.memory_space<vmem>>, vector<8x16xf32>,
    %c40 = arith.constant 40 : index
    %c16_50 = arith.constant 16 : index
    %200 = vector.load %arg18[%c40, %c16_50] : memref<64x32xf32, #tpu.memory_space<vmem>>, vector<8x16xf32>
    tpu.vector_store %arg18[%c40, %c16_50], %198 {strides = array<i32>} : memref<64x32xf32, #tpu.memory_space<vmem>>, vector<8x16xf32>,
    %cst_51 = arith.constant dense<0.000000e+00> : vector<8x48xf32>
    %201 = tpu.matmul %170, %11, %cst_51 {dimension_numbers = #tpu.dot_dimension_numbers<[1], [0], [0], [1], [0, 0, 1, 1], [], []>} : vector<8x16xf32>, vector<16x48xf32>, vector<8x48xf32> -> vector<8x48xf32>
    %cst_52 = arith.constant dense<0.000000e+00> : vector<8x48xf32>
    %202 = tpu.matmul %198, %12, %cst_52 {dimension_numbers = #tpu.dot_dimension_numbers<[1], [0], [0], [1], [0, 0, 1, 1], [], []>} : vector<8x16xf32>, vector<16x48xf32>, vector<8x48xf32> -> vector<8x48xf32>
    %203 = vector.extract_strided_slice %5 {offsets = [24, 0], sizes = [8, 48], strides = [1, 1]} : vector<64x48xf32> to vector<8x48xf32>
    %204 = vector.extract_strided_slice %203 {offsets = [0, 0], sizes = [8, 16], strides = [1, 1]} : vector<8x48xf32> to vector<8x16xf32>
    %205 = vector.extract_strided_slice %201 {offsets = [0, 0], sizes = [8, 16], strides = [1, 1]} : vector<8x48xf32> to vector<8x16xf32>
    %206 = arith.addf %204, %205 : vector<8x16xf32>
    %207 = arith.negf %206 : vector<8x16xf32>
    %208 = math.exp %207 : vector<8x16xf32>
    %cst_53 = arith.constant 1.000000e+00 : f32
    %209 = vector.broadcast %cst_53 : f32 to vector<8x16xf32>
    %210 = arith.addf %209, %208 : vector<8x16xf32>
    %211 = arith.divf %209, %210 : vector<8x16xf32>
    %212 = vector.extract_strided_slice %203 {offsets = [0, 16], sizes = [8, 16], strides = [1, 1]} : vector<8x48xf32> to vector<8x16xf32>
    %213 = vector.extract_strided_slice %201 {offsets = [0, 16], sizes = [8, 16], strides = [1, 1]} : vector<8x48xf32> to vector<8x16xf32>
    %214 = arith.addf %212, %213 : vector<8x16xf32>
    %215 = arith.negf %214 : vector<8x16xf32>
    %216 = math.exp %215 : vector<8x16xf32>
    %cst_54 = arith.constant 1.000000e+00 : f32
    %217 = vector.broadcast %cst_54 : f32 to vector<8x16xf32>
    %218 = arith.addf %217, %216 : vector<8x16xf32>
    %219 = arith.divf %217, %218 : vector<8x16xf32>
    %220 = vector.extract_strided_slice %203 {offsets = [0, 32], sizes = [8, 16], strides = [1, 1]} : vector<8x48xf32> to vector<8x16xf32>
    %221 = vector.extract_strided_slice %201 {offsets = [0, 32], sizes = [8, 16], strides = [1, 1]} : vector<8x48xf32> to vector<8x16xf32>
    %222 = arith.addf %221, %15 : vector<8x16xf32>
    %223 = arith.mulf %211, %222 : vector<8x16xf32>
    %224 = arith.addf %220, %223 : vector<8x16xf32>
    %225 = math.tanh %224 : vector<8x16xf32>
    %cst_55 = arith.constant 1.000000e+00 : f32
    %226 = vector.broadcast %cst_55 : f32 to vector<8x16xf32>
    %227 = arith.subf %226, %219 : vector<8x16xf32>
    %228 = arith.mulf %227, %225 : vector<8x16xf32>
    %229 = arith.mulf %219, %170 : vector<8x16xf32>
    %230 = arith.addf %228, %229 : vector<8x16xf32>
    %231 = vector.extract_strided_slice %10 {offsets = [32, 0], sizes = [8, 48], strides = [1, 1]} : vector<64x48xf32> to vector<8x48xf32>
    %232 = vector.extract_strided_slice %231 {offsets = [0, 0], sizes = [8, 16], strides = [1, 1]} : vector<8x48xf32> to vector<8x16xf32>
    %233 = vector.extract_strided_slice %202 {offsets = [0, 0], sizes = [8, 16], strides = [1, 1]} : vector<8x48xf32> to vector<8x16xf32>
    %234 = arith.addf %232, %233 : vector<8x16xf32>
    %235 = arith.negf %234 : vector<8x16xf32>
    %236 = math.exp %235 : vector<8x16xf32>
    %cst_56 = arith.constant 1.000000e+00 : f32
    %237 = vector.broadcast %cst_56 : f32 to vector<8x16xf32>
    %238 = arith.addf %237, %236 : vector<8x16xf32>
    %239 = arith.divf %237, %238 : vector<8x16xf32>
    %240 = vector.extract_strided_slice %231 {offsets = [0, 16], sizes = [8, 16], strides = [1, 1]} : vector<8x48xf32> to vector<8x16xf32>
    %241 = vector.extract_strided_slice %202 {offsets = [0, 16], sizes = [8, 16], strides = [1, 1]} : vector<8x48xf32> to vector<8x16xf32>
    %242 = arith.addf %240, %241 : vector<8x16xf32>
    %243 = arith.negf %242 : vector<8x16xf32>
    %244 = math.exp %243 : vector<8x16xf32>
    %cst_57 = arith.constant 1.000000e+00 : f32
    %245 = vector.broadcast %cst_57 : f32 to vector<8x16xf32>
    %246 = arith.addf %245, %244 : vector<8x16xf32>
    %247 = arith.divf %245, %246 : vector<8x16xf32>
    %248 = vector.extract_strided_slice %231 {offsets = [0, 32], sizes = [8, 16], strides = [1, 1]} : vector<8x48xf32> to vector<8x16xf32>
    %249 = vector.extract_strided_slice %202 {offsets = [0, 32], sizes = [8, 16], strides = [1, 1]} : vector<8x48xf32> to vector<8x16xf32>
    %250 = arith.addf %249, %18 : vector<8x16xf32>
    %251 = arith.mulf %239, %250 : vector<8x16xf32>
    %252 = arith.addf %248, %251 : vector<8x16xf32>
    %253 = math.tanh %252 : vector<8x16xf32>
    %cst_58 = arith.constant 1.000000e+00 : f32
    %254 = vector.broadcast %cst_58 : f32 to vector<8x16xf32>
    %255 = arith.subf %254, %247 : vector<8x16xf32>
    %256 = arith.mulf %255, %253 : vector<8x16xf32>
    %257 = arith.mulf %247, %198 : vector<8x16xf32>
    %258 = arith.addf %256, %257 : vector<8x16xf32>
    %c24 = arith.constant 24 : index
    %c0_59 = arith.constant 0 : index
    %259 = vector.load %arg18[%c24, %c0_59] : memref<64x32xf32, #tpu.memory_space<vmem>>, vector<8x16xf32>
    tpu.vector_store %arg18[%c24, %c0_59], %230 {strides = array<i32>} : memref<64x32xf32, #tpu.memory_space<vmem>>, vector<8x16xf32>,
    %c32 = arith.constant 32 : index
    %c16_60 = arith.constant 16 : index
    %260 = vector.load %arg18[%c32, %c16_60] : memref<64x32xf32, #tpu.memory_space<vmem>>, vector<8x16xf32>
    tpu.vector_store %arg18[%c32, %c16_60], %258 {strides = array<i32>} : memref<64x32xf32, #tpu.memory_space<vmem>>, vector<8x16xf32>,
    %cst_61 = arith.constant dense<0.000000e+00> : vector<8x48xf32>
    %261 = tpu.matmul %230, %11, %cst_61 {dimension_numbers = #tpu.dot_dimension_numbers<[1], [0], [0], [1], [0, 0, 1, 1], [], []>} : vector<8x16xf32>, vector<16x48xf32>, vector<8x48xf32> -> vector<8x48xf32>
    %cst_62 = arith.constant dense<0.000000e+00> : vector<8x48xf32>
    %262 = tpu.matmul %258, %12, %cst_62 {dimension_numbers = #tpu.dot_dimension_numbers<[1], [0], [0], [1], [0, 0, 1, 1], [], []>} : vector<8x16xf32>, vector<16x48xf32>, vector<8x48xf32> -> vector<8x48xf32>
    %263 = vector.extract_strided_slice %5 {offsets = [32, 0], sizes = [8, 48], strides = [1, 1]} : vector<64x48xf32> to vector<8x48xf32>
    %264 = vector.extract_strided_slice %263 {offsets = [0, 0], sizes = [8, 16], strides = [1, 1]} : vector<8x48xf32> to vector<8x16xf32>
    %265 = vector.extract_strided_slice %261 {offsets = [0, 0], sizes = [8, 16], strides = [1, 1]} : vector<8x48xf32> to vector<8x16xf32>
    %266 = arith.addf %264, %265 : vector<8x16xf32>
    %267 = arith.negf %266 : vector<8x16xf32>
    %268 = math.exp %267 : vector<8x16xf32>
    %cst_63 = arith.constant 1.000000e+00 : f32
    %269 = vector.broadcast %cst_63 : f32 to vector<8x16xf32>
    %270 = arith.addf %269, %268 : vector<8x16xf32>
    %271 = arith.divf %269, %270 : vector<8x16xf32>
    %272 = vector.extract_strided_slice %263 {offsets = [0, 16], sizes = [8, 16], strides = [1, 1]} : vector<8x48xf32> to vector<8x16xf32>
    %273 = vector.extract_strided_slice %261 {offsets = [0, 16], sizes = [8, 16], strides = [1, 1]} : vector<8x48xf32> to vector<8x16xf32>
    %274 = arith.addf %272, %273 : vector<8x16xf32>
    %275 = arith.negf %274 : vector<8x16xf32>
    %276 = math.exp %275 : vector<8x16xf32>
    %cst_64 = arith.constant 1.000000e+00 : f32
    %277 = vector.broadcast %cst_64 : f32 to vector<8x16xf32>
    %278 = arith.addf %277, %276 : vector<8x16xf32>
    %279 = arith.divf %277, %278 : vector<8x16xf32>
    %280 = vector.extract_strided_slice %263 {offsets = [0, 32], sizes = [8, 16], strides = [1, 1]} : vector<8x48xf32> to vector<8x16xf32>
    %281 = vector.extract_strided_slice %261 {offsets = [0, 32], sizes = [8, 16], strides = [1, 1]} : vector<8x48xf32> to vector<8x16xf32>
    %282 = arith.addf %281, %15 : vector<8x16xf32>
    %283 = arith.mulf %271, %282 : vector<8x16xf32>
    %284 = arith.addf %280, %283 : vector<8x16xf32>
    %285 = math.tanh %284 : vector<8x16xf32>
    %cst_65 = arith.constant 1.000000e+00 : f32
    %286 = vector.broadcast %cst_65 : f32 to vector<8x16xf32>
    %287 = arith.subf %286, %279 : vector<8x16xf32>
    %288 = arith.mulf %287, %285 : vector<8x16xf32>
    %289 = arith.mulf %279, %230 : vector<8x16xf32>
    %290 = arith.addf %288, %289 : vector<8x16xf32>
    %291 = vector.extract_strided_slice %10 {offsets = [24, 0], sizes = [8, 48], strides = [1, 1]} : vector<64x48xf32> to vector<8x48xf32>
    %292 = vector.extract_strided_slice %291 {offsets = [0, 0], sizes = [8, 16], strides = [1, 1]} : vector<8x48xf32> to vector<8x16xf32>
    %293 = vector.extract_strided_slice %262 {offsets = [0, 0], sizes = [8, 16], strides = [1, 1]} : vector<8x48xf32> to vector<8x16xf32>
    %294 = arith.addf %292, %293 : vector<8x16xf32>
    %295 = arith.negf %294 : vector<8x16xf32>
    %296 = math.exp %295 : vector<8x16xf32>
    %cst_66 = arith.constant 1.000000e+00 : f32
    %297 = vector.broadcast %cst_66 : f32 to vector<8x16xf32>
    %298 = arith.addf %297, %296 : vector<8x16xf32>
    %299 = arith.divf %297, %298 : vector<8x16xf32>
    %300 = vector.extract_strided_slice %291 {offsets = [0, 16], sizes = [8, 16], strides = [1, 1]} : vector<8x48xf32> to vector<8x16xf32>
    %301 = vector.extract_strided_slice %262 {offsets = [0, 16], sizes = [8, 16], strides = [1, 1]} : vector<8x48xf32> to vector<8x16xf32>
    %302 = arith.addf %300, %301 : vector<8x16xf32>
    %303 = arith.negf %302 : vector<8x16xf32>
    %304 = math.exp %303 : vector<8x16xf32>
    %cst_67 = arith.constant 1.000000e+00 : f32
    %305 = vector.broadcast %cst_67 : f32 to vector<8x16xf32>
    %306 = arith.addf %305, %304 : vector<8x16xf32>
    %307 = arith.divf %305, %306 : vector<8x16xf32>
    %308 = vector.extract_strided_slice %291 {offsets = [0, 32], sizes = [8, 16], strides = [1, 1]} : vector<8x48xf32> to vector<8x16xf32>
    %309 = vector.extract_strided_slice %262 {offsets = [0, 32], sizes = [8, 16], strides = [1, 1]} : vector<8x48xf32> to vector<8x16xf32>
    %310 = arith.addf %309, %18 : vector<8x16xf32>
    %311 = arith.mulf %299, %310 : vector<8x16xf32>
    %312 = arith.addf %308, %311 : vector<8x16xf32>
    %313 = math.tanh %312 : vector<8x16xf32>
    %cst_68 = arith.constant 1.000000e+00 : f32
    %314 = vector.broadcast %cst_68 : f32 to vector<8x16xf32>
    %315 = arith.subf %314, %307 : vector<8x16xf32>
    %316 = arith.mulf %315, %313 : vector<8x16xf32>
    %317 = arith.mulf %307, %258 : vector<8x16xf32>
    %318 = arith.addf %316, %317 : vector<8x16xf32>
    %c32_69 = arith.constant 32 : index
    %c0_70 = arith.constant 0 : index
    %319 = vector.load %arg18[%c32_69, %c0_70] : memref<64x32xf32, #tpu.memory_space<vmem>>, vector<8x16xf32>
    tpu.vector_store %arg18[%c32_69, %c0_70], %290 {strides = array<i32>} : memref<64x32xf32, #tpu.memory_space<vmem>>, vector<8x16xf32>,
    %c24_71 = arith.constant 24 : index
    %c16_72 = arith.constant 16 : index
    %320 = vector.load %arg18[%c24_71, %c16_72] : memref<64x32xf32, #tpu.memory_space<vmem>>, vector<8x16xf32>
    tpu.vector_store %arg18[%c24_71, %c16_72], %318 {strides = array<i32>} : memref<64x32xf32, #tpu.memory_space<vmem>>, vector<8x16xf32>,
    %cst_73 = arith.constant dense<0.000000e+00> : vector<8x48xf32>
    %321 = tpu.matmul %290, %11, %cst_73 {dimension_numbers = #tpu.dot_dimension_numbers<[1], [0], [0], [1], [0, 0, 1, 1], [], []>} : vector<8x16xf32>, vector<16x48xf32>, vector<8x48xf32> -> vector<8x48xf32>
    %cst_74 = arith.constant dense<0.000000e+00> : vector<8x48xf32>
    %322 = tpu.matmul %318, %12, %cst_74 {dimension_numbers = #tpu.dot_dimension_numbers<[1], [0], [0], [1], [0, 0, 1, 1], [], []>} : vector<8x16xf32>, vector<16x48xf32>, vector<8x48xf32> -> vector<8x48xf32>
    %323 = vector.extract_strided_slice %5 {offsets = [40, 0], sizes = [8, 48], strides = [1, 1]} : vector<64x48xf32> to vector<8x48xf32>
    %324 = vector.extract_strided_slice %323 {offsets = [0, 0], sizes = [8, 16], strides = [1, 1]} : vector<8x48xf32> to vector<8x16xf32>
    %325 = vector.extract_strided_slice %321 {offsets = [0, 0], sizes = [8, 16], strides = [1, 1]} : vector<8x48xf32> to vector<8x16xf32>
    %326 = arith.addf %324, %325 : vector<8x16xf32>
    %327 = arith.negf %326 : vector<8x16xf32>
    %328 = math.exp %327 : vector<8x16xf32>
    %cst_75 = arith.constant 1.000000e+00 : f32
    %329 = vector.broadcast %cst_75 : f32 to vector<8x16xf32>
    %330 = arith.addf %329, %328 : vector<8x16xf32>
    %331 = arith.divf %329, %330 : vector<8x16xf32>
    %332 = vector.extract_strided_slice %323 {offsets = [0, 16], sizes = [8, 16], strides = [1, 1]} : vector<8x48xf32> to vector<8x16xf32>
    %333 = vector.extract_strided_slice %321 {offsets = [0, 16], sizes = [8, 16], strides = [1, 1]} : vector<8x48xf32> to vector<8x16xf32>
    %334 = arith.addf %332, %333 : vector<8x16xf32>
    %335 = arith.negf %334 : vector<8x16xf32>
    %336 = math.exp %335 : vector<8x16xf32>
    %cst_76 = arith.constant 1.000000e+00 : f32
    %337 = vector.broadcast %cst_76 : f32 to vector<8x16xf32>
    %338 = arith.addf %337, %336 : vector<8x16xf32>
    %339 = arith.divf %337, %338 : vector<8x16xf32>
    %340 = vector.extract_strided_slice %323 {offsets = [0, 32], sizes = [8, 16], strides = [1, 1]} : vector<8x48xf32> to vector<8x16xf32>
    %341 = vector.extract_strided_slice %321 {offsets = [0, 32], sizes = [8, 16], strides = [1, 1]} : vector<8x48xf32> to vector<8x16xf32>
    %342 = arith.addf %341, %15 : vector<8x16xf32>
    %343 = arith.mulf %331, %342 : vector<8x16xf32>
    %344 = arith.addf %340, %343 : vector<8x16xf32>
    %345 = math.tanh %344 : vector<8x16xf32>
    %cst_77 = arith.constant 1.000000e+00 : f32
    %346 = vector.broadcast %cst_77 : f32 to vector<8x16xf32>
    %347 = arith.subf %346, %339 : vector<8x16xf32>
    %348 = arith.mulf %347, %345 : vector<8x16xf32>
    %349 = arith.mulf %339, %290 : vector<8x16xf32>
    %350 = arith.addf %348, %349 : vector<8x16xf32>
    %351 = vector.extract_strided_slice %10 {offsets = [16, 0], sizes = [8, 48], strides = [1, 1]} : vector<64x48xf32> to vector<8x48xf32>
    %352 = vector.extract_strided_slice %351 {offsets = [0, 0], sizes = [8, 16], strides = [1, 1]} : vector<8x48xf32> to vector<8x16xf32>
    %353 = vector.extract_strided_slice %322 {offsets = [0, 0], sizes = [8, 16], strides = [1, 1]} : vector<8x48xf32> to vector<8x16xf32>
    %354 = arith.addf %352, %353 : vector<8x16xf32>
    %355 = arith.negf %354 : vector<8x16xf32>
    %356 = math.exp %355 : vector<8x16xf32>
    %cst_78 = arith.constant 1.000000e+00 : f32
    %357 = vector.broadcast %cst_78 : f32 to vector<8x16xf32>
    %358 = arith.addf %357, %356 : vector<8x16xf32>
    %359 = arith.divf %357, %358 : vector<8x16xf32>
    %360 = vector.extract_strided_slice %351 {offsets = [0, 16], sizes = [8, 16], strides = [1, 1]} : vector<8x48xf32> to vector<8x16xf32>
    %361 = vector.extract_strided_slice %322 {offsets = [0, 16], sizes = [8, 16], strides = [1, 1]} : vector<8x48xf32> to vector<8x16xf32>
    %362 = arith.addf %360, %361 : vector<8x16xf32>
    %363 = arith.negf %362 : vector<8x16xf32>
    %364 = math.exp %363 : vector<8x16xf32>
    %cst_79 = arith.constant 1.000000e+00 : f32
    %365 = vector.broadcast %cst_79 : f32 to vector<8x16xf32>
    %366 = arith.addf %365, %364 : vector<8x16xf32>
    %367 = arith.divf %365, %366 : vector<8x16xf32>
    %368 = vector.extract_strided_slice %351 {offsets = [0, 32], sizes = [8, 16], strides = [1, 1]} : vector<8x48xf32> to vector<8x16xf32>
    %369 = vector.extract_strided_slice %322 {offsets = [0, 32], sizes = [8, 16], strides = [1, 1]} : vector<8x48xf32> to vector<8x16xf32>
    %370 = arith.addf %369, %18 : vector<8x16xf32>
    %371 = arith.mulf %359, %370 : vector<8x16xf32>
    %372 = arith.addf %368, %371 : vector<8x16xf32>
    %373 = math.tanh %372 : vector<8x16xf32>
    %cst_80 = arith.constant 1.000000e+00 : f32
    %374 = vector.broadcast %cst_80 : f32 to vector<8x16xf32>
    %375 = arith.subf %374, %367 : vector<8x16xf32>
    %376 = arith.mulf %375, %373 : vector<8x16xf32>
    %377 = arith.mulf %367, %318 : vector<8x16xf32>
    %378 = arith.addf %376, %377 : vector<8x16xf32>
    %c40_81 = arith.constant 40 : index
    %c0_82 = arith.constant 0 : index
    %379 = vector.load %arg18[%c40_81, %c0_82] : memref<64x32xf32, #tpu.memory_space<vmem>>, vector<8x16xf32>
    tpu.vector_store %arg18[%c40_81, %c0_82], %350 {strides = array<i32>} : memref<64x32xf32, #tpu.memory_space<vmem>>, vector<8x16xf32>,
    %c16_83 = arith.constant 16 : index
    %c16_84 = arith.constant 16 : index
    %380 = vector.load %arg18[%c16_83, %c16_84] : memref<64x32xf32, #tpu.memory_space<vmem>>, vector<8x16xf32>
    tpu.vector_store %arg18[%c16_83, %c16_84], %378 {strides = array<i32>} : memref<64x32xf32, #tpu.memory_space<vmem>>, vector<8x16xf32>,
    %cst_85 = arith.constant dense<0.000000e+00> : vector<8x48xf32>
    %381 = tpu.matmul %350, %11, %cst_85 {dimension_numbers = #tpu.dot_dimension_numbers<[1], [0], [0], [1], [0, 0, 1, 1], [], []>} : vector<8x16xf32>, vector<16x48xf32>, vector<8x48xf32> -> vector<8x48xf32>
    %cst_86 = arith.constant dense<0.000000e+00> : vector<8x48xf32>
    %382 = tpu.matmul %378, %12, %cst_86 {dimension_numbers = #tpu.dot_dimension_numbers<[1], [0], [0], [1], [0, 0, 1, 1], [], []>} : vector<8x16xf32>, vector<16x48xf32>, vector<8x48xf32> -> vector<8x48xf32>
    %383 = vector.extract_strided_slice %5 {offsets = [48, 0], sizes = [8, 48], strides = [1, 1]} : vector<64x48xf32> to vector<8x48xf32>
    %384 = vector.extract_strided_slice %383 {offsets = [0, 0], sizes = [8, 16], strides = [1, 1]} : vector<8x48xf32> to vector<8x16xf32>
    %385 = vector.extract_strided_slice %381 {offsets = [0, 0], sizes = [8, 16], strides = [1, 1]} : vector<8x48xf32> to vector<8x16xf32>
    %386 = arith.addf %384, %385 : vector<8x16xf32>
    %387 = arith.negf %386 : vector<8x16xf32>
    %388 = math.exp %387 : vector<8x16xf32>
    %cst_87 = arith.constant 1.000000e+00 : f32
    %389 = vector.broadcast %cst_87 : f32 to vector<8x16xf32>
    %390 = arith.addf %389, %388 : vector<8x16xf32>
    %391 = arith.divf %389, %390 : vector<8x16xf32>
    %392 = vector.extract_strided_slice %383 {offsets = [0, 16], sizes = [8, 16], strides = [1, 1]} : vector<8x48xf32> to vector<8x16xf32>
    %393 = vector.extract_strided_slice %381 {offsets = [0, 16], sizes = [8, 16], strides = [1, 1]} : vector<8x48xf32> to vector<8x16xf32>
    %394 = arith.addf %392, %393 : vector<8x16xf32>
    %395 = arith.negf %394 : vector<8x16xf32>
    %396 = math.exp %395 : vector<8x16xf32>
    %cst_88 = arith.constant 1.000000e+00 : f32
    %397 = vector.broadcast %cst_88 : f32 to vector<8x16xf32>
    %398 = arith.addf %397, %396 : vector<8x16xf32>
    %399 = arith.divf %397, %398 : vector<8x16xf32>
    %400 = vector.extract_strided_slice %383 {offsets = [0, 32], sizes = [8, 16], strides = [1, 1]} : vector<8x48xf32> to vector<8x16xf32>
    %401 = vector.extract_strided_slice %381 {offsets = [0, 32], sizes = [8, 16], strides = [1, 1]} : vector<8x48xf32> to vector<8x16xf32>
    %402 = arith.addf %401, %15 : vector<8x16xf32>
    %403 = arith.mulf %391, %402 : vector<8x16xf32>
    %404 = arith.addf %400, %403 : vector<8x16xf32>
    %405 = math.tanh %404 : vector<8x16xf32>
    %cst_89 = arith.constant 1.000000e+00 : f32
    %406 = vector.broadcast %cst_89 : f32 to vector<8x16xf32>
    %407 = arith.subf %406, %399 : vector<8x16xf32>
    %408 = arith.mulf %407, %405 : vector<8x16xf32>
    %409 = arith.mulf %399, %350 : vector<8x16xf32>
    %410 = arith.addf %408, %409 : vector<8x16xf32>
    %411 = vector.extract_strided_slice %10 {offsets = [8, 0], sizes = [8, 48], strides = [1, 1]} : vector<64x48xf32> to vector<8x48xf32>
    %412 = vector.extract_strided_slice %411 {offsets = [0, 0], sizes = [8, 16], strides = [1, 1]} : vector<8x48xf32> to vector<8x16xf32>
    %413 = vector.extract_strided_slice %382 {offsets = [0, 0], sizes = [8, 16], strides = [1, 1]} : vector<8x48xf32> to vector<8x16xf32>
    %414 = arith.addf %412, %413 : vector<8x16xf32>
    %415 = arith.negf %414 : vector<8x16xf32>
    %416 = math.exp %415 : vector<8x16xf32>
    %cst_90 = arith.constant 1.000000e+00 : f32
    %417 = vector.broadcast %cst_90 : f32 to vector<8x16xf32>
    %418 = arith.addf %417, %416 : vector<8x16xf32>
    %419 = arith.divf %417, %418 : vector<8x16xf32>
    %420 = vector.extract_strided_slice %411 {offsets = [0, 16], sizes = [8, 16], strides = [1, 1]} : vector<8x48xf32> to vector<8x16xf32>
    %421 = vector.extract_strided_slice %382 {offsets = [0, 16], sizes = [8, 16], strides = [1, 1]} : vector<8x48xf32> to vector<8x16xf32>
    %422 = arith.addf %420, %421 : vector<8x16xf32>
    %423 = arith.negf %422 : vector<8x16xf32>
    %424 = math.exp %423 : vector<8x16xf32>
    %cst_91 = arith.constant 1.000000e+00 : f32
    %425 = vector.broadcast %cst_91 : f32 to vector<8x16xf32>
    %426 = arith.addf %425, %424 : vector<8x16xf32>
    %427 = arith.divf %425, %426 : vector<8x16xf32>
    %428 = vector.extract_strided_slice %411 {offsets = [0, 32], sizes = [8, 16], strides = [1, 1]} : vector<8x48xf32> to vector<8x16xf32>
    %429 = vector.extract_strided_slice %382 {offsets = [0, 32], sizes = [8, 16], strides = [1, 1]} : vector<8x48xf32> to vector<8x16xf32>
    %430 = arith.addf %429, %18 : vector<8x16xf32>
    %431 = arith.mulf %419, %430 : vector<8x16xf32>
    %432 = arith.addf %428, %431 : vector<8x16xf32>
    %433 = math.tanh %432 : vector<8x16xf32>
    %cst_92 = arith.constant 1.000000e+00 : f32
    %434 = vector.broadcast %cst_92 : f32 to vector<8x16xf32>
    %435 = arith.subf %434, %427 : vector<8x16xf32>
    %436 = arith.mulf %435, %433 : vector<8x16xf32>
    %437 = arith.mulf %427, %378 : vector<8x16xf32>
    %438 = arith.addf %436, %437 : vector<8x16xf32>
    %c48_93 = arith.constant 48 : index
    %c0_94 = arith.constant 0 : index
    %439 = vector.load %arg18[%c48_93, %c0_94] : memref<64x32xf32, #tpu.memory_space<vmem>>, vector<8x16xf32>
    tpu.vector_store %arg18[%c48_93, %c0_94], %410 {strides = array<i32>} : memref<64x32xf32, #tpu.memory_space<vmem>>, vector<8x16xf32>,
    %c8_95 = arith.constant 8 : index
    %c16_96 = arith.constant 16 : index
    %440 = vector.load %arg18[%c8_95, %c16_96] : memref<64x32xf32, #tpu.memory_space<vmem>>, vector<8x16xf32>
    tpu.vector_store %arg18[%c8_95, %c16_96], %438 {strides = array<i32>} : memref<64x32xf32, #tpu.memory_space<vmem>>, vector<8x16xf32>,
    %cst_97 = arith.constant dense<0.000000e+00> : vector<8x48xf32>
    %441 = tpu.matmul %410, %11, %cst_97 {dimension_numbers = #tpu.dot_dimension_numbers<[1], [0], [0], [1], [0, 0, 1, 1], [], []>} : vector<8x16xf32>, vector<16x48xf32>, vector<8x48xf32> -> vector<8x48xf32>
    %cst_98 = arith.constant dense<0.000000e+00> : vector<8x48xf32>
    %442 = tpu.matmul %438, %12, %cst_98 {dimension_numbers = #tpu.dot_dimension_numbers<[1], [0], [0], [1], [0, 0, 1, 1], [], []>} : vector<8x16xf32>, vector<16x48xf32>, vector<8x48xf32> -> vector<8x48xf32>
    %443 = vector.extract_strided_slice %5 {offsets = [56, 0], sizes = [8, 48], strides = [1, 1]} : vector<64x48xf32> to vector<8x48xf32>
    %444 = vector.extract_strided_slice %443 {offsets = [0, 0], sizes = [8, 16], strides = [1, 1]} : vector<8x48xf32> to vector<8x16xf32>
    %445 = vector.extract_strided_slice %441 {offsets = [0, 0], sizes = [8, 16], strides = [1, 1]} : vector<8x48xf32> to vector<8x16xf32>
    %446 = arith.addf %444, %445 : vector<8x16xf32>
    %447 = arith.negf %446 : vector<8x16xf32>
    %448 = math.exp %447 : vector<8x16xf32>
    %cst_99 = arith.constant 1.000000e+00 : f32
    %449 = vector.broadcast %cst_99 : f32 to vector<8x16xf32>
    %450 = arith.addf %449, %448 : vector<8x16xf32>
    %451 = arith.divf %449, %450 : vector<8x16xf32>
    %452 = vector.extract_strided_slice %443 {offsets = [0, 16], sizes = [8, 16], strides = [1, 1]} : vector<8x48xf32> to vector<8x16xf32>
    %453 = vector.extract_strided_slice %441 {offsets = [0, 16], sizes = [8, 16], strides = [1, 1]} : vector<8x48xf32> to vector<8x16xf32>
    %454 = arith.addf %452, %453 : vector<8x16xf32>
    %455 = arith.negf %454 : vector<8x16xf32>
    %456 = math.exp %455 : vector<8x16xf32>
    %cst_100 = arith.constant 1.000000e+00 : f32
    %457 = vector.broadcast %cst_100 : f32 to vector<8x16xf32>
    %458 = arith.addf %457, %456 : vector<8x16xf32>
    %459 = arith.divf %457, %458 : vector<8x16xf32>
    %460 = vector.extract_strided_slice %443 {offsets = [0, 32], sizes = [8, 16], strides = [1, 1]} : vector<8x48xf32> to vector<8x16xf32>
    %461 = vector.extract_strided_slice %441 {offsets = [0, 32], sizes = [8, 16], strides = [1, 1]} : vector<8x48xf32> to vector<8x16xf32>
    %462 = arith.addf %461, %15 : vector<8x16xf32>
    %463 = arith.mulf %451, %462 : vector<8x16xf32>
    %464 = arith.addf %460, %463 : vector<8x16xf32>
    %465 = math.tanh %464 : vector<8x16xf32>
    %cst_101 = arith.constant 1.000000e+00 : f32
    %466 = vector.broadcast %cst_101 : f32 to vector<8x16xf32>
    %467 = arith.subf %466, %459 : vector<8x16xf32>
    %468 = arith.mulf %467, %465 : vector<8x16xf32>
    %469 = arith.mulf %459, %410 : vector<8x16xf32>
    %470 = arith.addf %468, %469 : vector<8x16xf32>
    %471 = vector.extract_strided_slice %10 {offsets = [0, 0], sizes = [8, 48], strides = [1, 1]} : vector<64x48xf32> to vector<8x48xf32>
    %472 = vector.extract_strided_slice %471 {offsets = [0, 0], sizes = [8, 16], strides = [1, 1]} : vector<8x48xf32> to vector<8x16xf32>
    %473 = vector.extract_strided_slice %442 {offsets = [0, 0], sizes = [8, 16], strides = [1, 1]} : vector<8x48xf32> to vector<8x16xf32>
    %474 = arith.addf %472, %473 : vector<8x16xf32>
    %475 = arith.negf %474 : vector<8x16xf32>
    %476 = math.exp %475 : vector<8x16xf32>
    %cst_102 = arith.constant 1.000000e+00 : f32
    %477 = vector.broadcast %cst_102 : f32 to vector<8x16xf32>
    %478 = arith.addf %477, %476 : vector<8x16xf32>
    %479 = arith.divf %477, %478 : vector<8x16xf32>
    %480 = vector.extract_strided_slice %471 {offsets = [0, 16], sizes = [8, 16], strides = [1, 1]} : vector<8x48xf32> to vector<8x16xf32>
    %481 = vector.extract_strided_slice %442 {offsets = [0, 16], sizes = [8, 16], strides = [1, 1]} : vector<8x48xf32> to vector<8x16xf32>
    %482 = arith.addf %480, %481 : vector<8x16xf32>
    %483 = arith.negf %482 : vector<8x16xf32>
    %484 = math.exp %483 : vector<8x16xf32>
    %cst_103 = arith.constant 1.000000e+00 : f32
    %485 = vector.broadcast %cst_103 : f32 to vector<8x16xf32>
    %486 = arith.addf %485, %484 : vector<8x16xf32>
    %487 = arith.divf %485, %486 : vector<8x16xf32>
    %488 = vector.extract_strided_slice %471 {offsets = [0, 32], sizes = [8, 16], strides = [1, 1]} : vector<8x48xf32> to vector<8x16xf32>
    %489 = vector.extract_strided_slice %442 {offsets = [0, 32], sizes = [8, 16], strides = [1, 1]} : vector<8x48xf32> to vector<8x16xf32>
    %490 = arith.addf %489, %18 : vector<8x16xf32>
    %491 = arith.mulf %479, %490 : vector<8x16xf32>
    %492 = arith.addf %488, %491 : vector<8x16xf32>
    %493 = math.tanh %492 : vector<8x16xf32>
    %cst_104 = arith.constant 1.000000e+00 : f32
    %494 = vector.broadcast %cst_104 : f32 to vector<8x16xf32>
    %495 = arith.subf %494, %487 : vector<8x16xf32>
    %496 = arith.mulf %495, %493 : vector<8x16xf32>
    %497 = arith.mulf %487, %438 : vector<8x16xf32>
    %498 = arith.addf %496, %497 : vector<8x16xf32>
    %c56_105 = arith.constant 56 : index
    %c0_106 = arith.constant 0 : index
    %499 = vector.load %arg18[%c56_105, %c0_106] : memref<64x32xf32, #tpu.memory_space<vmem>>, vector<8x16xf32>
    tpu.vector_store %arg18[%c56_105, %c0_106], %470 {strides = array<i32>} : memref<64x32xf32, #tpu.memory_space<vmem>>, vector<8x16xf32>,
    %c0_107 = arith.constant 0 : index
    %c16_108 = arith.constant 16 : index
    %500 = vector.load %arg18[%c0_107, %c16_108] : memref<64x32xf32, #tpu.memory_space<vmem>>, vector<8x16xf32>
    tpu.vector_store %arg18[%c0_107, %c16_108], %498 {strides = array<i32>} : memref<64x32xf32, #tpu.memory_space<vmem>>, vector<8x16xf32>,
    %c0_109 = arith.constant 0 : index
    %c0_110 = arith.constant 0 : index
    %501 = vector.load %arg18[%c0_109, %c0_110] : memref<64x32xf32, #tpu.memory_space<vmem>>, vector<64x32xf32>
    %c0_111 = arith.constant 0 : index
    %c0_112 = arith.constant 0 : index
    %502 = vector.load %arg9[%c0_111, %c0_112] : memref<32x48xf32, #tpu.memory_space<vmem>>, vector<32x48xf32>
    %cst_113 = arith.constant dense<0.000000e+00> : vector<64x48xf32>
    %503 = tpu.matmul %501, %502, %cst_113 {dimension_numbers = #tpu.dot_dimension_numbers<[1], [0], [0], [1], [0, 0, 1, 1], [], []>} : vector<64x32xf32>, vector<32x48xf32>, vector<64x48xf32> -> vector<64x48xf32>
    %c0_114 = arith.constant 0 : index
    %c0_115 = arith.constant 0 : index
    %504 = vector.load %arg11[%c0_114, %c0_115] : memref<1x48xf32, #tpu.memory_space<vmem>>, vector<1x48xf32>
    %505 = vector.broadcast %504 : vector<1x48xf32> to vector<64x48xf32>
    %506 = arith.addf %503, %505 : vector<64x48xf32>
    %c0_116 = arith.constant 0 : index
    %c0_117 = arith.constant 0 : index
    %507 = vector.load %arg13[%c0_116, %c0_117] : memref<32x48xf32, #tpu.memory_space<vmem>>, vector<32x48xf32>
    %cst_118 = arith.constant dense<0.000000e+00> : vector<64x48xf32>
    %508 = tpu.matmul %501, %507, %cst_118 {dimension_numbers = #tpu.dot_dimension_numbers<[1], [0], [0], [1], [0, 0, 1, 1], [], []>} : vector<64x32xf32>, vector<32x48xf32>, vector<64x48xf32> -> vector<64x48xf32>
    %c0_119 = arith.constant 0 : index
    %c0_120 = arith.constant 0 : index
    %509 = vector.load %arg15[%c0_119, %c0_120] : memref<1x48xf32, #tpu.memory_space<vmem>>, vector<1x48xf32>
    %510 = vector.broadcast %509 : vector<1x48xf32> to vector<64x48xf32>
    %511 = arith.addf %508, %510 : vector<64x48xf32>
    %c0_121 = arith.constant 0 : index
    %c0_122 = arith.constant 0 : index
    %512 = vector.load %arg10[%c0_121, %c0_122] : memref<16x48xf32, #tpu.memory_space<vmem>>, vector<16x48xf32>
    %c0_123 = arith.constant 0 : index
    %c0_124 = arith.constant 0 : index
    %513 = vector.load %arg14[%c0_123, %c0_124] : memref<16x48xf32, #tpu.memory_space<vmem>>, vector<16x48xf32>
    %c0_125 = arith.constant 0 : index
    %c0_126 = arith.constant 0 : index
    %514 = vector.load %arg12[%c0_125, %c0_126] : memref<1x16xf32, #tpu.memory_space<vmem>>, vector<1x16xf32>
    %515 = vector.shape_cast %514 : vector<1x16xf32> to vector<1x16xf32>
    %516 = vector.broadcast %515 : vector<1x16xf32> to vector<8x16xf32>
    %c0_127 = arith.constant 0 : index
    %c0_128 = arith.constant 0 : index
    %517 = vector.load %arg16[%c0_127, %c0_128] : memref<1x16xf32, #tpu.memory_space<vmem>>, vector<1x16xf32>
    %518 = vector.shape_cast %517 : vector<1x16xf32> to vector<1x16xf32>
    %519 = vector.broadcast %518 : vector<1x16xf32> to vector<8x16xf32>
    %cst_129 = arith.constant 0.000000e+00 : f32
    %520 = vector.broadcast %cst_129 : f32 to vector<8x16xf32>
    %cst_130 = arith.constant 0.000000e+00 : f32
    %521 = vector.broadcast %cst_130 : f32 to vector<8x16xf32>
    %cst_131 = arith.constant dense<0.000000e+00> : vector<8x48xf32>
    %522 = tpu.matmul %520, %512, %cst_131 {dimension_numbers = #tpu.dot_dimension_numbers<[1], [0], [0], [1], [0, 0, 1, 1], [], []>} : vector<8x16xf32>, vector<16x48xf32>, vector<8x48xf32> -> vector<8x48xf32>
    %cst_132 = arith.constant dense<0.000000e+00> : vector<8x48xf32>
    %523 = tpu.matmul %521, %513, %cst_132 {dimension_numbers = #tpu.dot_dimension_numbers<[1], [0], [0], [1], [0, 0, 1, 1], [], []>} : vector<8x16xf32>, vector<16x48xf32>, vector<8x48xf32> -> vector<8x48xf32>
    %524 = vector.extract_strided_slice %506 {offsets = [0, 0], sizes = [8, 48], strides = [1, 1]} : vector<64x48xf32> to vector<8x48xf32>
    %525 = vector.extract_strided_slice %524 {offsets = [0, 0], sizes = [8, 16], strides = [1, 1]} : vector<8x48xf32> to vector<8x16xf32>
    %526 = vector.extract_strided_slice %522 {offsets = [0, 0], sizes = [8, 16], strides = [1, 1]} : vector<8x48xf32> to vector<8x16xf32>
    %527 = arith.addf %525, %526 : vector<8x16xf32>
    %528 = arith.negf %527 : vector<8x16xf32>
    %529 = math.exp %528 : vector<8x16xf32>
    %cst_133 = arith.constant 1.000000e+00 : f32
    %530 = vector.broadcast %cst_133 : f32 to vector<8x16xf32>
    %531 = arith.addf %530, %529 : vector<8x16xf32>
    %532 = arith.divf %530, %531 : vector<8x16xf32>
    %533 = vector.extract_strided_slice %524 {offsets = [0, 16], sizes = [8, 16], strides = [1, 1]} : vector<8x48xf32> to vector<8x16xf32>
    %534 = vector.extract_strided_slice %522 {offsets = [0, 16], sizes = [8, 16], strides = [1, 1]} : vector<8x48xf32> to vector<8x16xf32>
    %535 = arith.addf %533, %534 : vector<8x16xf32>
    %536 = arith.negf %535 : vector<8x16xf32>
    %537 = math.exp %536 : vector<8x16xf32>
    %cst_134 = arith.constant 1.000000e+00 : f32
    %538 = vector.broadcast %cst_134 : f32 to vector<8x16xf32>
    %539 = arith.addf %538, %537 : vector<8x16xf32>
    %540 = arith.divf %538, %539 : vector<8x16xf32>
    %541 = vector.extract_strided_slice %524 {offsets = [0, 32], sizes = [8, 16], strides = [1, 1]} : vector<8x48xf32> to vector<8x16xf32>
    %542 = vector.extract_strided_slice %522 {offsets = [0, 32], sizes = [8, 16], strides = [1, 1]} : vector<8x48xf32> to vector<8x16xf32>
    %543 = arith.addf %542, %516 : vector<8x16xf32>
    %544 = arith.mulf %532, %543 : vector<8x16xf32>
    %545 = arith.addf %541, %544 : vector<8x16xf32>
    %546 = math.tanh %545 : vector<8x16xf32>
    %cst_135 = arith.constant 1.000000e+00 : f32
    %547 = vector.broadcast %cst_135 : f32 to vector<8x16xf32>
    %548 = arith.subf %547, %540 : vector<8x16xf32>
    %549 = arith.mulf %548, %546 : vector<8x16xf32>
    %550 = arith.mulf %540, %520 : vector<8x16xf32>
    %551 = arith.addf %549, %550 : vector<8x16xf32>
    %552 = vector.extract_strided_slice %511 {offsets = [56, 0], sizes = [8, 48], strides = [1, 1]} : vector<64x48xf32> to vector<8x48xf32>
    %553 = vector.extract_strided_slice %552 {offsets = [0, 0], sizes = [8, 16], strides = [1, 1]} : vector<8x48xf32> to vector<8x16xf32>
    %554 = vector.extract_strided_slice %523 {offsets = [0, 0], sizes = [8, 16], strides = [1, 1]} : vector<8x48xf32> to vector<8x16xf32>
    %555 = arith.addf %553, %554 : vector<8x16xf32>
    %556 = arith.negf %555 : vector<8x16xf32>
    %557 = math.exp %556 : vector<8x16xf32>
    %cst_136 = arith.constant 1.000000e+00 : f32
    %558 = vector.broadcast %cst_136 : f32 to vector<8x16xf32>
    %559 = arith.addf %558, %557 : vector<8x16xf32>
    %560 = arith.divf %558, %559 : vector<8x16xf32>
    %561 = vector.extract_strided_slice %552 {offsets = [0, 16], sizes = [8, 16], strides = [1, 1]} : vector<8x48xf32> to vector<8x16xf32>
    %562 = vector.extract_strided_slice %523 {offsets = [0, 16], sizes = [8, 16], strides = [1, 1]} : vector<8x48xf32> to vector<8x16xf32>
    %563 = arith.addf %561, %562 : vector<8x16xf32>
    %564 = arith.negf %563 : vector<8x16xf32>
    %565 = math.exp %564 : vector<8x16xf32>
    %cst_137 = arith.constant 1.000000e+00 : f32
    %566 = vector.broadcast %cst_137 : f32 to vector<8x16xf32>
    %567 = arith.addf %566, %565 : vector<8x16xf32>
    %568 = arith.divf %566, %567 : vector<8x16xf32>
    %569 = vector.extract_strided_slice %552 {offsets = [0, 32], sizes = [8, 16], strides = [1, 1]} : vector<8x48xf32> to vector<8x16xf32>
    %570 = vector.extract_strided_slice %523 {offsets = [0, 32], sizes = [8, 16], strides = [1, 1]} : vector<8x48xf32> to vector<8x16xf32>
    %571 = arith.addf %570, %519 : vector<8x16xf32>
    %572 = arith.mulf %560, %571 : vector<8x16xf32>
    %573 = arith.addf %569, %572 : vector<8x16xf32>
    %574 = math.tanh %573 : vector<8x16xf32>
    %cst_138 = arith.constant 1.000000e+00 : f32
    %575 = vector.broadcast %cst_138 : f32 to vector<8x16xf32>
    %576 = arith.subf %575, %568 : vector<8x16xf32>
    %577 = arith.mulf %576, %574 : vector<8x16xf32>
    %578 = arith.mulf %568, %521 : vector<8x16xf32>
    %579 = arith.addf %577, %578 : vector<8x16xf32>
    %cst_139 = arith.constant dense<0.000000e+00> : vector<8x48xf32>
    %580 = tpu.matmul %551, %512, %cst_139 {dimension_numbers = #tpu.dot_dimension_numbers<[1], [0], [0], [1], [0, 0, 1, 1], [], []>} : vector<8x16xf32>, vector<16x48xf32>, vector<8x48xf32> -> vector<8x48xf32>
    %cst_140 = arith.constant dense<0.000000e+00> : vector<8x48xf32>
    %581 = tpu.matmul %579, %513, %cst_140 {dimension_numbers = #tpu.dot_dimension_numbers<[1], [0], [0], [1], [0, 0, 1, 1], [], []>} : vector<8x16xf32>, vector<16x48xf32>, vector<8x48xf32> -> vector<8x48xf32>
    %582 = vector.extract_strided_slice %506 {offsets = [8, 0], sizes = [8, 48], strides = [1, 1]} : vector<64x48xf32> to vector<8x48xf32>
    %583 = vector.extract_strided_slice %582 {offsets = [0, 0], sizes = [8, 16], strides = [1, 1]} : vector<8x48xf32> to vector<8x16xf32>
    %584 = vector.extract_strided_slice %580 {offsets = [0, 0], sizes = [8, 16], strides = [1, 1]} : vector<8x48xf32> to vector<8x16xf32>
    %585 = arith.addf %583, %584 : vector<8x16xf32>
    %586 = arith.negf %585 : vector<8x16xf32>
    %587 = math.exp %586 : vector<8x16xf32>
    %cst_141 = arith.constant 1.000000e+00 : f32
    %588 = vector.broadcast %cst_141 : f32 to vector<8x16xf32>
    %589 = arith.addf %588, %587 : vector<8x16xf32>
    %590 = arith.divf %588, %589 : vector<8x16xf32>
    %591 = vector.extract_strided_slice %582 {offsets = [0, 16], sizes = [8, 16], strides = [1, 1]} : vector<8x48xf32> to vector<8x16xf32>
    %592 = vector.extract_strided_slice %580 {offsets = [0, 16], sizes = [8, 16], strides = [1, 1]} : vector<8x48xf32> to vector<8x16xf32>
    %593 = arith.addf %591, %592 : vector<8x16xf32>
    %594 = arith.negf %593 : vector<8x16xf32>
    %595 = math.exp %594 : vector<8x16xf32>
    %cst_142 = arith.constant 1.000000e+00 : f32
    %596 = vector.broadcast %cst_142 : f32 to vector<8x16xf32>
    %597 = arith.addf %596, %595 : vector<8x16xf32>
    %598 = arith.divf %596, %597 : vector<8x16xf32>
    %599 = vector.extract_strided_slice %582 {offsets = [0, 32], sizes = [8, 16], strides = [1, 1]} : vector<8x48xf32> to vector<8x16xf32>
    %600 = vector.extract_strided_slice %580 {offsets = [0, 32], sizes = [8, 16], strides = [1, 1]} : vector<8x48xf32> to vector<8x16xf32>
    %601 = arith.addf %600, %516 : vector<8x16xf32>
    %602 = arith.mulf %590, %601 : vector<8x16xf32>
    %603 = arith.addf %599, %602 : vector<8x16xf32>
    %604 = math.tanh %603 : vector<8x16xf32>
    %cst_143 = arith.constant 1.000000e+00 : f32
    %605 = vector.broadcast %cst_143 : f32 to vector<8x16xf32>
    %606 = arith.subf %605, %598 : vector<8x16xf32>
    %607 = arith.mulf %606, %604 : vector<8x16xf32>
    %608 = arith.mulf %598, %551 : vector<8x16xf32>
    %609 = arith.addf %607, %608 : vector<8x16xf32>
    %610 = vector.extract_strided_slice %511 {offsets = [48, 0], sizes = [8, 48], strides = [1, 1]} : vector<64x48xf32> to vector<8x48xf32>
    %611 = vector.extract_strided_slice %610 {offsets = [0, 0], sizes = [8, 16], strides = [1, 1]} : vector<8x48xf32> to vector<8x16xf32>
    %612 = vector.extract_strided_slice %581 {offsets = [0, 0], sizes = [8, 16], strides = [1, 1]} : vector<8x48xf32> to vector<8x16xf32>
    %613 = arith.addf %611, %612 : vector<8x16xf32>
    %614 = arith.negf %613 : vector<8x16xf32>
    %615 = math.exp %614 : vector<8x16xf32>
    %cst_144 = arith.constant 1.000000e+00 : f32
    %616 = vector.broadcast %cst_144 : f32 to vector<8x16xf32>
    %617 = arith.addf %616, %615 : vector<8x16xf32>
    %618 = arith.divf %616, %617 : vector<8x16xf32>
    %619 = vector.extract_strided_slice %610 {offsets = [0, 16], sizes = [8, 16], strides = [1, 1]} : vector<8x48xf32> to vector<8x16xf32>
    %620 = vector.extract_strided_slice %581 {offsets = [0, 16], sizes = [8, 16], strides = [1, 1]} : vector<8x48xf32> to vector<8x16xf32>
    %621 = arith.addf %619, %620 : vector<8x16xf32>
    %622 = arith.negf %621 : vector<8x16xf32>
    %623 = math.exp %622 : vector<8x16xf32>
    %cst_145 = arith.constant 1.000000e+00 : f32
    %624 = vector.broadcast %cst_145 : f32 to vector<8x16xf32>
    %625 = arith.addf %624, %623 : vector<8x16xf32>
    %626 = arith.divf %624, %625 : vector<8x16xf32>
    %627 = vector.extract_strided_slice %610 {offsets = [0, 32], sizes = [8, 16], strides = [1, 1]} : vector<8x48xf32> to vector<8x16xf32>
    %628 = vector.extract_strided_slice %581 {offsets = [0, 32], sizes = [8, 16], strides = [1, 1]} : vector<8x48xf32> to vector<8x16xf32>
    %629 = arith.addf %628, %519 : vector<8x16xf32>
    %630 = arith.mulf %618, %629 : vector<8x16xf32>
    %631 = arith.addf %627, %630 : vector<8x16xf32>
    %632 = math.tanh %631 : vector<8x16xf32>
    %cst_146 = arith.constant 1.000000e+00 : f32
    %633 = vector.broadcast %cst_146 : f32 to vector<8x16xf32>
    %634 = arith.subf %633, %626 : vector<8x16xf32>
    %635 = arith.mulf %634, %632 : vector<8x16xf32>
    %636 = arith.mulf %626, %579 : vector<8x16xf32>
    %637 = arith.addf %635, %636 : vector<8x16xf32>
    %cst_147 = arith.constant dense<0.000000e+00> : vector<8x48xf32>
    %638 = tpu.matmul %609, %512, %cst_147 {dimension_numbers = #tpu.dot_dimension_numbers<[1], [0], [0], [1], [0, 0, 1, 1], [], []>} : vector<8x16xf32>, vector<16x48xf32>, vector<8x48xf32> -> vector<8x48xf32>
    %cst_148 = arith.constant dense<0.000000e+00> : vector<8x48xf32>
    %639 = tpu.matmul %637, %513, %cst_148 {dimension_numbers = #tpu.dot_dimension_numbers<[1], [0], [0], [1], [0, 0, 1, 1], [], []>} : vector<8x16xf32>, vector<16x48xf32>, vector<8x48xf32> -> vector<8x48xf32>
    %640 = vector.extract_strided_slice %506 {offsets = [16, 0], sizes = [8, 48], strides = [1, 1]} : vector<64x48xf32> to vector<8x48xf32>
    %641 = vector.extract_strided_slice %640 {offsets = [0, 0], sizes = [8, 16], strides = [1, 1]} : vector<8x48xf32> to vector<8x16xf32>
    %642 = vector.extract_strided_slice %638 {offsets = [0, 0], sizes = [8, 16], strides = [1, 1]} : vector<8x48xf32> to vector<8x16xf32>
    %643 = arith.addf %641, %642 : vector<8x16xf32>
    %644 = arith.negf %643 : vector<8x16xf32>
    %645 = math.exp %644 : vector<8x16xf32>
    %cst_149 = arith.constant 1.000000e+00 : f32
    %646 = vector.broadcast %cst_149 : f32 to vector<8x16xf32>
    %647 = arith.addf %646, %645 : vector<8x16xf32>
    %648 = arith.divf %646, %647 : vector<8x16xf32>
    %649 = vector.extract_strided_slice %640 {offsets = [0, 16], sizes = [8, 16], strides = [1, 1]} : vector<8x48xf32> to vector<8x16xf32>
    %650 = vector.extract_strided_slice %638 {offsets = [0, 16], sizes = [8, 16], strides = [1, 1]} : vector<8x48xf32> to vector<8x16xf32>
    %651 = arith.addf %649, %650 : vector<8x16xf32>
    %652 = arith.negf %651 : vector<8x16xf32>
    %653 = math.exp %652 : vector<8x16xf32>
    %cst_150 = arith.constant 1.000000e+00 : f32
    %654 = vector.broadcast %cst_150 : f32 to vector<8x16xf32>
    %655 = arith.addf %654, %653 : vector<8x16xf32>
    %656 = arith.divf %654, %655 : vector<8x16xf32>
    %657 = vector.extract_strided_slice %640 {offsets = [0, 32], sizes = [8, 16], strides = [1, 1]} : vector<8x48xf32> to vector<8x16xf32>
    %658 = vector.extract_strided_slice %638 {offsets = [0, 32], sizes = [8, 16], strides = [1, 1]} : vector<8x48xf32> to vector<8x16xf32>
    %659 = arith.addf %658, %516 : vector<8x16xf32>
    %660 = arith.mulf %648, %659 : vector<8x16xf32>
    %661 = arith.addf %657, %660 : vector<8x16xf32>
    %662 = math.tanh %661 : vector<8x16xf32>
    %cst_151 = arith.constant 1.000000e+00 : f32
    %663 = vector.broadcast %cst_151 : f32 to vector<8x16xf32>
    %664 = arith.subf %663, %656 : vector<8x16xf32>
    %665 = arith.mulf %664, %662 : vector<8x16xf32>
    %666 = arith.mulf %656, %609 : vector<8x16xf32>
    %667 = arith.addf %665, %666 : vector<8x16xf32>
    %668 = vector.extract_strided_slice %511 {offsets = [40, 0], sizes = [8, 48], strides = [1, 1]} : vector<64x48xf32> to vector<8x48xf32>
    %669 = vector.extract_strided_slice %668 {offsets = [0, 0], sizes = [8, 16], strides = [1, 1]} : vector<8x48xf32> to vector<8x16xf32>
    %670 = vector.extract_strided_slice %639 {offsets = [0, 0], sizes = [8, 16], strides = [1, 1]} : vector<8x48xf32> to vector<8x16xf32>
    %671 = arith.addf %669, %670 : vector<8x16xf32>
    %672 = arith.negf %671 : vector<8x16xf32>
    %673 = math.exp %672 : vector<8x16xf32>
    %cst_152 = arith.constant 1.000000e+00 : f32
    %674 = vector.broadcast %cst_152 : f32 to vector<8x16xf32>
    %675 = arith.addf %674, %673 : vector<8x16xf32>
    %676 = arith.divf %674, %675 : vector<8x16xf32>
    %677 = vector.extract_strided_slice %668 {offsets = [0, 16], sizes = [8, 16], strides = [1, 1]} : vector<8x48xf32> to vector<8x16xf32>
    %678 = vector.extract_strided_slice %639 {offsets = [0, 16], sizes = [8, 16], strides = [1, 1]} : vector<8x48xf32> to vector<8x16xf32>
    %679 = arith.addf %677, %678 : vector<8x16xf32>
    %680 = arith.negf %679 : vector<8x16xf32>
    %681 = math.exp %680 : vector<8x16xf32>
    %cst_153 = arith.constant 1.000000e+00 : f32
    %682 = vector.broadcast %cst_153 : f32 to vector<8x16xf32>
    %683 = arith.addf %682, %681 : vector<8x16xf32>
    %684 = arith.divf %682, %683 : vector<8x16xf32>
    %685 = vector.extract_strided_slice %668 {offsets = [0, 32], sizes = [8, 16], strides = [1, 1]} : vector<8x48xf32> to vector<8x16xf32>
    %686 = vector.extract_strided_slice %639 {offsets = [0, 32], sizes = [8, 16], strides = [1, 1]} : vector<8x48xf32> to vector<8x16xf32>
    %687 = arith.addf %686, %519 : vector<8x16xf32>
    %688 = arith.mulf %676, %687 : vector<8x16xf32>
    %689 = arith.addf %685, %688 : vector<8x16xf32>
    %690 = math.tanh %689 : vector<8x16xf32>
    %cst_154 = arith.constant 1.000000e+00 : f32
    %691 = vector.broadcast %cst_154 : f32 to vector<8x16xf32>
    %692 = arith.subf %691, %684 : vector<8x16xf32>
    %693 = arith.mulf %692, %690 : vector<8x16xf32>
    %694 = arith.mulf %684, %637 : vector<8x16xf32>
    %695 = arith.addf %693, %694 : vector<8x16xf32>
    %cst_155 = arith.constant dense<0.000000e+00> : vector<8x48xf32>
    %696 = tpu.matmul %667, %512, %cst_155 {dimension_numbers = #tpu.dot_dimension_numbers<[1], [0], [0], [1], [0, 0, 1, 1], [], []>} : vector<8x16xf32>, vector<16x48xf32>, vector<8x48xf32> -> vector<8x48xf32>
    %cst_156 = arith.constant dense<0.000000e+00> : vector<8x48xf32>
    %697 = tpu.matmul %695, %513, %cst_156 {dimension_numbers = #tpu.dot_dimension_numbers<[1], [0], [0], [1], [0, 0, 1, 1], [], []>} : vector<8x16xf32>, vector<16x48xf32>, vector<8x48xf32> -> vector<8x48xf32>
    %698 = vector.extract_strided_slice %506 {offsets = [24, 0], sizes = [8, 48], strides = [1, 1]} : vector<64x48xf32> to vector<8x48xf32>
    %699 = vector.extract_strided_slice %698 {offsets = [0, 0], sizes = [8, 16], strides = [1, 1]} : vector<8x48xf32> to vector<8x16xf32>
    %700 = vector.extract_strided_slice %696 {offsets = [0, 0], sizes = [8, 16], strides = [1, 1]} : vector<8x48xf32> to vector<8x16xf32>
    %701 = arith.addf %699, %700 : vector<8x16xf32>
    %702 = arith.negf %701 : vector<8x16xf32>
    %703 = math.exp %702 : vector<8x16xf32>
    %cst_157 = arith.constant 1.000000e+00 : f32
    %704 = vector.broadcast %cst_157 : f32 to vector<8x16xf32>
    %705 = arith.addf %704, %703 : vector<8x16xf32>
    %706 = arith.divf %704, %705 : vector<8x16xf32>
    %707 = vector.extract_strided_slice %698 {offsets = [0, 16], sizes = [8, 16], strides = [1, 1]} : vector<8x48xf32> to vector<8x16xf32>
    %708 = vector.extract_strided_slice %696 {offsets = [0, 16], sizes = [8, 16], strides = [1, 1]} : vector<8x48xf32> to vector<8x16xf32>
    %709 = arith.addf %707, %708 : vector<8x16xf32>
    %710 = arith.negf %709 : vector<8x16xf32>
    %711 = math.exp %710 : vector<8x16xf32>
    %cst_158 = arith.constant 1.000000e+00 : f32
    %712 = vector.broadcast %cst_158 : f32 to vector<8x16xf32>
    %713 = arith.addf %712, %711 : vector<8x16xf32>
    %714 = arith.divf %712, %713 : vector<8x16xf32>
    %715 = vector.extract_strided_slice %698 {offsets = [0, 32], sizes = [8, 16], strides = [1, 1]} : vector<8x48xf32> to vector<8x16xf32>
    %716 = vector.extract_strided_slice %696 {offsets = [0, 32], sizes = [8, 16], strides = [1, 1]} : vector<8x48xf32> to vector<8x16xf32>
    %717 = arith.addf %716, %516 : vector<8x16xf32>
    %718 = arith.mulf %706, %717 : vector<8x16xf32>
    %719 = arith.addf %715, %718 : vector<8x16xf32>
    %720 = math.tanh %719 : vector<8x16xf32>
    %cst_159 = arith.constant 1.000000e+00 : f32
    %721 = vector.broadcast %cst_159 : f32 to vector<8x16xf32>
    %722 = arith.subf %721, %714 : vector<8x16xf32>
    %723 = arith.mulf %722, %720 : vector<8x16xf32>
    %724 = arith.mulf %714, %667 : vector<8x16xf32>
    %725 = arith.addf %723, %724 : vector<8x16xf32>
    %726 = vector.extract_strided_slice %511 {offsets = [32, 0], sizes = [8, 48], strides = [1, 1]} : vector<64x48xf32> to vector<8x48xf32>
    %727 = vector.extract_strided_slice %726 {offsets = [0, 0], sizes = [8, 16], strides = [1, 1]} : vector<8x48xf32> to vector<8x16xf32>
    %728 = vector.extract_strided_slice %697 {offsets = [0, 0], sizes = [8, 16], strides = [1, 1]} : vector<8x48xf32> to vector<8x16xf32>
    %729 = arith.addf %727, %728 : vector<8x16xf32>
    %730 = arith.negf %729 : vector<8x16xf32>
    %731 = math.exp %730 : vector<8x16xf32>
    %cst_160 = arith.constant 1.000000e+00 : f32
    %732 = vector.broadcast %cst_160 : f32 to vector<8x16xf32>
    %733 = arith.addf %732, %731 : vector<8x16xf32>
    %734 = arith.divf %732, %733 : vector<8x16xf32>
    %735 = vector.extract_strided_slice %726 {offsets = [0, 16], sizes = [8, 16], strides = [1, 1]} : vector<8x48xf32> to vector<8x16xf32>
    %736 = vector.extract_strided_slice %697 {offsets = [0, 16], sizes = [8, 16], strides = [1, 1]} : vector<8x48xf32> to vector<8x16xf32>
    %737 = arith.addf %735, %736 : vector<8x16xf32>
    %738 = arith.negf %737 : vector<8x16xf32>
    %739 = math.exp %738 : vector<8x16xf32>
    %cst_161 = arith.constant 1.000000e+00 : f32
    %740 = vector.broadcast %cst_161 : f32 to vector<8x16xf32>
    %741 = arith.addf %740, %739 : vector<8x16xf32>
    %742 = arith.divf %740, %741 : vector<8x16xf32>
    %743 = vector.extract_strided_slice %726 {offsets = [0, 32], sizes = [8, 16], strides = [1, 1]} : vector<8x48xf32> to vector<8x16xf32>
    %744 = vector.extract_strided_slice %697 {offsets = [0, 32], sizes = [8, 16], strides = [1, 1]} : vector<8x48xf32> to vector<8x16xf32>
    %745 = arith.addf %744, %519 : vector<8x16xf32>
    %746 = arith.mulf %734, %745 : vector<8x16xf32>
    %747 = arith.addf %743, %746 : vector<8x16xf32>
    %748 = math.tanh %747 : vector<8x16xf32>
    %cst_162 = arith.constant 1.000000e+00 : f32
    %749 = vector.broadcast %cst_162 : f32 to vector<8x16xf32>
    %750 = arith.subf %749, %742 : vector<8x16xf32>
    %751 = arith.mulf %750, %748 : vector<8x16xf32>
    %752 = arith.mulf %742, %695 : vector<8x16xf32>
    %753 = arith.addf %751, %752 : vector<8x16xf32>
    %cst_163 = arith.constant dense<0.000000e+00> : vector<8x48xf32>
    %754 = tpu.matmul %725, %512, %cst_163 {dimension_numbers = #tpu.dot_dimension_numbers<[1], [0], [0], [1], [0, 0, 1, 1], [], []>} : vector<8x16xf32>, vector<16x48xf32>, vector<8x48xf32> -> vector<8x48xf32>
    %cst_164 = arith.constant dense<0.000000e+00> : vector<8x48xf32>
    %755 = tpu.matmul %753, %513, %cst_164 {dimension_numbers = #tpu.dot_dimension_numbers<[1], [0], [0], [1], [0, 0, 1, 1], [], []>} : vector<8x16xf32>, vector<16x48xf32>, vector<8x48xf32> -> vector<8x48xf32>
    %756 = vector.extract_strided_slice %506 {offsets = [32, 0], sizes = [8, 48], strides = [1, 1]} : vector<64x48xf32> to vector<8x48xf32>
    %757 = vector.extract_strided_slice %756 {offsets = [0, 0], sizes = [8, 16], strides = [1, 1]} : vector<8x48xf32> to vector<8x16xf32>
    %758 = vector.extract_strided_slice %754 {offsets = [0, 0], sizes = [8, 16], strides = [1, 1]} : vector<8x48xf32> to vector<8x16xf32>
    %759 = arith.addf %757, %758 : vector<8x16xf32>
    %760 = arith.negf %759 : vector<8x16xf32>
    %761 = math.exp %760 : vector<8x16xf32>
    %cst_165 = arith.constant 1.000000e+00 : f32
    %762 = vector.broadcast %cst_165 : f32 to vector<8x16xf32>
    %763 = arith.addf %762, %761 : vector<8x16xf32>
    %764 = arith.divf %762, %763 : vector<8x16xf32>
    %765 = vector.extract_strided_slice %756 {offsets = [0, 16], sizes = [8, 16], strides = [1, 1]} : vector<8x48xf32> to vector<8x16xf32>
    %766 = vector.extract_strided_slice %754 {offsets = [0, 16], sizes = [8, 16], strides = [1, 1]} : vector<8x48xf32> to vector<8x16xf32>
    %767 = arith.addf %765, %766 : vector<8x16xf32>
    %768 = arith.negf %767 : vector<8x16xf32>
    %769 = math.exp %768 : vector<8x16xf32>
    %cst_166 = arith.constant 1.000000e+00 : f32
    %770 = vector.broadcast %cst_166 : f32 to vector<8x16xf32>
    %771 = arith.addf %770, %769 : vector<8x16xf32>
    %772 = arith.divf %770, %771 : vector<8x16xf32>
    %773 = vector.extract_strided_slice %756 {offsets = [0, 32], sizes = [8, 16], strides = [1, 1]} : vector<8x48xf32> to vector<8x16xf32>
    %774 = vector.extract_strided_slice %754 {offsets = [0, 32], sizes = [8, 16], strides = [1, 1]} : vector<8x48xf32> to vector<8x16xf32>
    %775 = arith.addf %774, %516 : vector<8x16xf32>
    %776 = arith.mulf %764, %775 : vector<8x16xf32>
    %777 = arith.addf %773, %776 : vector<8x16xf32>
    %778 = math.tanh %777 : vector<8x16xf32>
    %cst_167 = arith.constant 1.000000e+00 : f32
    %779 = vector.broadcast %cst_167 : f32 to vector<8x16xf32>
    %780 = arith.subf %779, %772 : vector<8x16xf32>
    %781 = arith.mulf %780, %778 : vector<8x16xf32>
    %782 = arith.mulf %772, %725 : vector<8x16xf32>
    %783 = arith.addf %781, %782 : vector<8x16xf32>
    %784 = vector.extract_strided_slice %511 {offsets = [24, 0], sizes = [8, 48], strides = [1, 1]} : vector<64x48xf32> to vector<8x48xf32>
    %785 = vector.extract_strided_slice %784 {offsets = [0, 0], sizes = [8, 16], strides = [1, 1]} : vector<8x48xf32> to vector<8x16xf32>
    %786 = vector.extract_strided_slice %755 {offsets = [0, 0], sizes = [8, 16], strides = [1, 1]} : vector<8x48xf32> to vector<8x16xf32>
    %787 = arith.addf %785, %786 : vector<8x16xf32>
    %788 = arith.negf %787 : vector<8x16xf32>
    %789 = math.exp %788 : vector<8x16xf32>
    %cst_168 = arith.constant 1.000000e+00 : f32
    %790 = vector.broadcast %cst_168 : f32 to vector<8x16xf32>
    %791 = arith.addf %790, %789 : vector<8x16xf32>
    %792 = arith.divf %790, %791 : vector<8x16xf32>
    %793 = vector.extract_strided_slice %784 {offsets = [0, 16], sizes = [8, 16], strides = [1, 1]} : vector<8x48xf32> to vector<8x16xf32>
    %794 = vector.extract_strided_slice %755 {offsets = [0, 16], sizes = [8, 16], strides = [1, 1]} : vector<8x48xf32> to vector<8x16xf32>
    %795 = arith.addf %793, %794 : vector<8x16xf32>
    %796 = arith.negf %795 : vector<8x16xf32>
    %797 = math.exp %796 : vector<8x16xf32>
    %cst_169 = arith.constant 1.000000e+00 : f32
    %798 = vector.broadcast %cst_169 : f32 to vector<8x16xf32>
    %799 = arith.addf %798, %797 : vector<8x16xf32>
    %800 = arith.divf %798, %799 : vector<8x16xf32>
    %801 = vector.extract_strided_slice %784 {offsets = [0, 32], sizes = [8, 16], strides = [1, 1]} : vector<8x48xf32> to vector<8x16xf32>
    %802 = vector.extract_strided_slice %755 {offsets = [0, 32], sizes = [8, 16], strides = [1, 1]} : vector<8x48xf32> to vector<8x16xf32>
    %803 = arith.addf %802, %519 : vector<8x16xf32>
    %804 = arith.mulf %792, %803 : vector<8x16xf32>
    %805 = arith.addf %801, %804 : vector<8x16xf32>
    %806 = math.tanh %805 : vector<8x16xf32>
    %cst_170 = arith.constant 1.000000e+00 : f32
    %807 = vector.broadcast %cst_170 : f32 to vector<8x16xf32>
    %808 = arith.subf %807, %800 : vector<8x16xf32>
    %809 = arith.mulf %808, %806 : vector<8x16xf32>
    %810 = arith.mulf %800, %753 : vector<8x16xf32>
    %811 = arith.addf %809, %810 : vector<8x16xf32>
    %cst_171 = arith.constant dense<0.000000e+00> : vector<8x48xf32>
    %812 = tpu.matmul %783, %512, %cst_171 {dimension_numbers = #tpu.dot_dimension_numbers<[1], [0], [0], [1], [0, 0, 1, 1], [], []>} : vector<8x16xf32>, vector<16x48xf32>, vector<8x48xf32> -> vector<8x48xf32>
    %cst_172 = arith.constant dense<0.000000e+00> : vector<8x48xf32>
    %813 = tpu.matmul %811, %513, %cst_172 {dimension_numbers = #tpu.dot_dimension_numbers<[1], [0], [0], [1], [0, 0, 1, 1], [], []>} : vector<8x16xf32>, vector<16x48xf32>, vector<8x48xf32> -> vector<8x48xf32>
    %814 = vector.extract_strided_slice %506 {offsets = [40, 0], sizes = [8, 48], strides = [1, 1]} : vector<64x48xf32> to vector<8x48xf32>
    %815 = vector.extract_strided_slice %814 {offsets = [0, 0], sizes = [8, 16], strides = [1, 1]} : vector<8x48xf32> to vector<8x16xf32>
    %816 = vector.extract_strided_slice %812 {offsets = [0, 0], sizes = [8, 16], strides = [1, 1]} : vector<8x48xf32> to vector<8x16xf32>
    %817 = arith.addf %815, %816 : vector<8x16xf32>
    %818 = arith.negf %817 : vector<8x16xf32>
    %819 = math.exp %818 : vector<8x16xf32>
    %cst_173 = arith.constant 1.000000e+00 : f32
    %820 = vector.broadcast %cst_173 : f32 to vector<8x16xf32>
    %821 = arith.addf %820, %819 : vector<8x16xf32>
    %822 = arith.divf %820, %821 : vector<8x16xf32>
    %823 = vector.extract_strided_slice %814 {offsets = [0, 16], sizes = [8, 16], strides = [1, 1]} : vector<8x48xf32> to vector<8x16xf32>
    %824 = vector.extract_strided_slice %812 {offsets = [0, 16], sizes = [8, 16], strides = [1, 1]} : vector<8x48xf32> to vector<8x16xf32>
    %825 = arith.addf %823, %824 : vector<8x16xf32>
    %826 = arith.negf %825 : vector<8x16xf32>
    %827 = math.exp %826 : vector<8x16xf32>
    %cst_174 = arith.constant 1.000000e+00 : f32
    %828 = vector.broadcast %cst_174 : f32 to vector<8x16xf32>
    %829 = arith.addf %828, %827 : vector<8x16xf32>
    %830 = arith.divf %828, %829 : vector<8x16xf32>
    %831 = vector.extract_strided_slice %814 {offsets = [0, 32], sizes = [8, 16], strides = [1, 1]} : vector<8x48xf32> to vector<8x16xf32>
    %832 = vector.extract_strided_slice %812 {offsets = [0, 32], sizes = [8, 16], strides = [1, 1]} : vector<8x48xf32> to vector<8x16xf32>
    %833 = arith.addf %832, %516 : vector<8x16xf32>
    %834 = arith.mulf %822, %833 : vector<8x16xf32>
    %835 = arith.addf %831, %834 : vector<8x16xf32>
    %836 = math.tanh %835 : vector<8x16xf32>
    %cst_175 = arith.constant 1.000000e+00 : f32
    %837 = vector.broadcast %cst_175 : f32 to vector<8x16xf32>
    %838 = arith.subf %837, %830 : vector<8x16xf32>
    %839 = arith.mulf %838, %836 : vector<8x16xf32>
    %840 = arith.mulf %830, %783 : vector<8x16xf32>
    %841 = arith.addf %839, %840 : vector<8x16xf32>
    %842 = vector.extract_strided_slice %511 {offsets = [16, 0], sizes = [8, 48], strides = [1, 1]} : vector<64x48xf32> to vector<8x48xf32>
    %843 = vector.extract_strided_slice %842 {offsets = [0, 0], sizes = [8, 16], strides = [1, 1]} : vector<8x48xf32> to vector<8x16xf32>
    %844 = vector.extract_strided_slice %813 {offsets = [0, 0], sizes = [8, 16], strides = [1, 1]} : vector<8x48xf32> to vector<8x16xf32>
    %845 = arith.addf %843, %844 : vector<8x16xf32>
    %846 = arith.negf %845 : vector<8x16xf32>
    %847 = math.exp %846 : vector<8x16xf32>
    %cst_176 = arith.constant 1.000000e+00 : f32
    %848 = vector.broadcast %cst_176 : f32 to vector<8x16xf32>
    %849 = arith.addf %848, %847 : vector<8x16xf32>
    %850 = arith.divf %848, %849 : vector<8x16xf32>
    %851 = vector.extract_strided_slice %842 {offsets = [0, 16], sizes = [8, 16], strides = [1, 1]} : vector<8x48xf32> to vector<8x16xf32>
    %852 = vector.extract_strided_slice %813 {offsets = [0, 16], sizes = [8, 16], strides = [1, 1]} : vector<8x48xf32> to vector<8x16xf32>
    %853 = arith.addf %851, %852 : vector<8x16xf32>
    %854 = arith.negf %853 : vector<8x16xf32>
    %855 = math.exp %854 : vector<8x16xf32>
    %cst_177 = arith.constant 1.000000e+00 : f32
    %856 = vector.broadcast %cst_177 : f32 to vector<8x16xf32>
    %857 = arith.addf %856, %855 : vector<8x16xf32>
    %858 = arith.divf %856, %857 : vector<8x16xf32>
    %859 = vector.extract_strided_slice %842 {offsets = [0, 32], sizes = [8, 16], strides = [1, 1]} : vector<8x48xf32> to vector<8x16xf32>
    %860 = vector.extract_strided_slice %813 {offsets = [0, 32], sizes = [8, 16], strides = [1, 1]} : vector<8x48xf32> to vector<8x16xf32>
    %861 = arith.addf %860, %519 : vector<8x16xf32>
    %862 = arith.mulf %850, %861 : vector<8x16xf32>
    %863 = arith.addf %859, %862 : vector<8x16xf32>
    %864 = math.tanh %863 : vector<8x16xf32>
    %cst_178 = arith.constant 1.000000e+00 : f32
    %865 = vector.broadcast %cst_178 : f32 to vector<8x16xf32>
    %866 = arith.subf %865, %858 : vector<8x16xf32>
    %867 = arith.mulf %866, %864 : vector<8x16xf32>
    %868 = arith.mulf %858, %811 : vector<8x16xf32>
    %869 = arith.addf %867, %868 : vector<8x16xf32>
    %cst_179 = arith.constant dense<0.000000e+00> : vector<8x48xf32>
    %870 = tpu.matmul %841, %512, %cst_179 {dimension_numbers = #tpu.dot_dimension_numbers<[1], [0], [0], [1], [0, 0, 1, 1], [], []>} : vector<8x16xf32>, vector<16x48xf32>, vector<8x48xf32> -> vector<8x48xf32>
    %cst_180 = arith.constant dense<0.000000e+00> : vector<8x48xf32>
    %871 = tpu.matmul %869, %513, %cst_180 {dimension_numbers = #tpu.dot_dimension_numbers<[1], [0], [0], [1], [0, 0, 1, 1], [], []>} : vector<8x16xf32>, vector<16x48xf32>, vector<8x48xf32> -> vector<8x48xf32>
    %872 = vector.extract_strided_slice %506 {offsets = [48, 0], sizes = [8, 48], strides = [1, 1]} : vector<64x48xf32> to vector<8x48xf32>
    %873 = vector.extract_strided_slice %872 {offsets = [0, 0], sizes = [8, 16], strides = [1, 1]} : vector<8x48xf32> to vector<8x16xf32>
    %874 = vector.extract_strided_slice %870 {offsets = [0, 0], sizes = [8, 16], strides = [1, 1]} : vector<8x48xf32> to vector<8x16xf32>
    %875 = arith.addf %873, %874 : vector<8x16xf32>
    %876 = arith.negf %875 : vector<8x16xf32>
    %877 = math.exp %876 : vector<8x16xf32>
    %cst_181 = arith.constant 1.000000e+00 : f32
    %878 = vector.broadcast %cst_181 : f32 to vector<8x16xf32>
    %879 = arith.addf %878, %877 : vector<8x16xf32>
    %880 = arith.divf %878, %879 : vector<8x16xf32>
    %881 = vector.extract_strided_slice %872 {offsets = [0, 16], sizes = [8, 16], strides = [1, 1]} : vector<8x48xf32> to vector<8x16xf32>
    %882 = vector.extract_strided_slice %870 {offsets = [0, 16], sizes = [8, 16], strides = [1, 1]} : vector<8x48xf32> to vector<8x16xf32>
    %883 = arith.addf %881, %882 : vector<8x16xf32>
    %884 = arith.negf %883 : vector<8x16xf32>
    %885 = math.exp %884 : vector<8x16xf32>
    %cst_182 = arith.constant 1.000000e+00 : f32
    %886 = vector.broadcast %cst_182 : f32 to vector<8x16xf32>
    %887 = arith.addf %886, %885 : vector<8x16xf32>
    %888 = arith.divf %886, %887 : vector<8x16xf32>
    %889 = vector.extract_strided_slice %872 {offsets = [0, 32], sizes = [8, 16], strides = [1, 1]} : vector<8x48xf32> to vector<8x16xf32>
    %890 = vector.extract_strided_slice %870 {offsets = [0, 32], sizes = [8, 16], strides = [1, 1]} : vector<8x48xf32> to vector<8x16xf32>
    %891 = arith.addf %890, %516 : vector<8x16xf32>
    %892 = arith.mulf %880, %891 : vector<8x16xf32>
    %893 = arith.addf %889, %892 : vector<8x16xf32>
    %894 = math.tanh %893 : vector<8x16xf32>
    %cst_183 = arith.constant 1.000000e+00 : f32
    %895 = vector.broadcast %cst_183 : f32 to vector<8x16xf32>
    %896 = arith.subf %895, %888 : vector<8x16xf32>
    %897 = arith.mulf %896, %894 : vector<8x16xf32>
    %898 = arith.mulf %888, %841 : vector<8x16xf32>
    %899 = arith.addf %897, %898 : vector<8x16xf32>
    %900 = vector.extract_strided_slice %511 {offsets = [8, 0], sizes = [8, 48], strides = [1, 1]} : vector<64x48xf32> to vector<8x48xf32>
    %901 = vector.extract_strided_slice %900 {offsets = [0, 0], sizes = [8, 16], strides = [1, 1]} : vector<8x48xf32> to vector<8x16xf32>
    %902 = vector.extract_strided_slice %871 {offsets = [0, 0], sizes = [8, 16], strides = [1, 1]} : vector<8x48xf32> to vector<8x16xf32>
    %903 = arith.addf %901, %902 : vector<8x16xf32>
    %904 = arith.negf %903 : vector<8x16xf32>
    %905 = math.exp %904 : vector<8x16xf32>
    %cst_184 = arith.constant 1.000000e+00 : f32
    %906 = vector.broadcast %cst_184 : f32 to vector<8x16xf32>
    %907 = arith.addf %906, %905 : vector<8x16xf32>
    %908 = arith.divf %906, %907 : vector<8x16xf32>
    %909 = vector.extract_strided_slice %900 {offsets = [0, 16], sizes = [8, 16], strides = [1, 1]} : vector<8x48xf32> to vector<8x16xf32>
    %910 = vector.extract_strided_slice %871 {offsets = [0, 16], sizes = [8, 16], strides = [1, 1]} : vector<8x48xf32> to vector<8x16xf32>
    %911 = arith.addf %909, %910 : vector<8x16xf32>
    %912 = arith.negf %911 : vector<8x16xf32>
    %913 = math.exp %912 : vector<8x16xf32>
    %cst_185 = arith.constant 1.000000e+00 : f32
    %914 = vector.broadcast %cst_185 : f32 to vector<8x16xf32>
    %915 = arith.addf %914, %913 : vector<8x16xf32>
    %916 = arith.divf %914, %915 : vector<8x16xf32>
    %917 = vector.extract_strided_slice %900 {offsets = [0, 32], sizes = [8, 16], strides = [1, 1]} : vector<8x48xf32> to vector<8x16xf32>
    %918 = vector.extract_strided_slice %871 {offsets = [0, 32], sizes = [8, 16], strides = [1, 1]} : vector<8x48xf32> to vector<8x16xf32>
    %919 = arith.addf %918, %519 : vector<8x16xf32>
    %920 = arith.mulf %908, %919 : vector<8x16xf32>
    %921 = arith.addf %917, %920 : vector<8x16xf32>
    %922 = math.tanh %921 : vector<8x16xf32>
    %cst_186 = arith.constant 1.000000e+00 : f32
    %923 = vector.broadcast %cst_186 : f32 to vector<8x16xf32>
    %924 = arith.subf %923, %916 : vector<8x16xf32>
    %925 = arith.mulf %924, %922 : vector<8x16xf32>
    %926 = arith.mulf %916, %869 : vector<8x16xf32>
    %927 = arith.addf %925, %926 : vector<8x16xf32>
    %cst_187 = arith.constant dense<0.000000e+00> : vector<8x48xf32>
    %928 = tpu.matmul %899, %512, %cst_187 {dimension_numbers = #tpu.dot_dimension_numbers<[1], [0], [0], [1], [0, 0, 1, 1], [], []>} : vector<8x16xf32>, vector<16x48xf32>, vector<8x48xf32> -> vector<8x48xf32>
    %cst_188 = arith.constant dense<0.000000e+00> : vector<8x48xf32>
    %929 = tpu.matmul %927, %513, %cst_188 {dimension_numbers = #tpu.dot_dimension_numbers<[1], [0], [0], [1], [0, 0, 1, 1], [], []>} : vector<8x16xf32>, vector<16x48xf32>, vector<8x48xf32> -> vector<8x48xf32>
    %930 = vector.extract_strided_slice %506 {offsets = [56, 0], sizes = [8, 48], strides = [1, 1]} : vector<64x48xf32> to vector<8x48xf32>
    %931 = vector.extract_strided_slice %930 {offsets = [0, 0], sizes = [8, 16], strides = [1, 1]} : vector<8x48xf32> to vector<8x16xf32>
    %932 = vector.extract_strided_slice %928 {offsets = [0, 0], sizes = [8, 16], strides = [1, 1]} : vector<8x48xf32> to vector<8x16xf32>
    %933 = arith.addf %931, %932 : vector<8x16xf32>
    %934 = arith.negf %933 : vector<8x16xf32>
    %935 = math.exp %934 : vector<8x16xf32>
    %cst_189 = arith.constant 1.000000e+00 : f32
    %936 = vector.broadcast %cst_189 : f32 to vector<8x16xf32>
    %937 = arith.addf %936, %935 : vector<8x16xf32>
    %938 = arith.divf %936, %937 : vector<8x16xf32>
    %939 = vector.extract_strided_slice %930 {offsets = [0, 16], sizes = [8, 16], strides = [1, 1]} : vector<8x48xf32> to vector<8x16xf32>
    %940 = vector.extract_strided_slice %928 {offsets = [0, 16], sizes = [8, 16], strides = [1, 1]} : vector<8x48xf32> to vector<8x16xf32>
    %941 = arith.addf %939, %940 : vector<8x16xf32>
    %942 = arith.negf %941 : vector<8x16xf32>
    %943 = math.exp %942 : vector<8x16xf32>
    %cst_190 = arith.constant 1.000000e+00 : f32
    %944 = vector.broadcast %cst_190 : f32 to vector<8x16xf32>
    %945 = arith.addf %944, %943 : vector<8x16xf32>
    %946 = arith.divf %944, %945 : vector<8x16xf32>
    %947 = vector.extract_strided_slice %930 {offsets = [0, 32], sizes = [8, 16], strides = [1, 1]} : vector<8x48xf32> to vector<8x16xf32>
    %948 = vector.extract_strided_slice %928 {offsets = [0, 32], sizes = [8, 16], strides = [1, 1]} : vector<8x48xf32> to vector<8x16xf32>
    %949 = arith.addf %948, %516 : vector<8x16xf32>
    %950 = arith.mulf %938, %949 : vector<8x16xf32>
    %951 = arith.addf %947, %950 : vector<8x16xf32>
    %952 = math.tanh %951 : vector<8x16xf32>
    %cst_191 = arith.constant 1.000000e+00 : f32
    %953 = vector.broadcast %cst_191 : f32 to vector<8x16xf32>
    %954 = arith.subf %953, %946 : vector<8x16xf32>
    %955 = arith.mulf %954, %952 : vector<8x16xf32>
    %956 = arith.mulf %946, %899 : vector<8x16xf32>
    %957 = arith.addf %955, %956 : vector<8x16xf32>
    %958 = vector.extract_strided_slice %511 {offsets = [0, 0], sizes = [8, 48], strides = [1, 1]} : vector<64x48xf32> to vector<8x48xf32>
    %959 = vector.extract_strided_slice %958 {offsets = [0, 0], sizes = [8, 16], strides = [1, 1]} : vector<8x48xf32> to vector<8x16xf32>
    %960 = vector.extract_strided_slice %929 {offsets = [0, 0], sizes = [8, 16], strides = [1, 1]} : vector<8x48xf32> to vector<8x16xf32>
    %961 = arith.addf %959, %960 : vector<8x16xf32>
    %962 = arith.negf %961 : vector<8x16xf32>
    %963 = math.exp %962 : vector<8x16xf32>
    %cst_192 = arith.constant 1.000000e+00 : f32
    %964 = vector.broadcast %cst_192 : f32 to vector<8x16xf32>
    %965 = arith.addf %964, %963 : vector<8x16xf32>
    %966 = arith.divf %964, %965 : vector<8x16xf32>
    %967 = vector.extract_strided_slice %958 {offsets = [0, 16], sizes = [8, 16], strides = [1, 1]} : vector<8x48xf32> to vector<8x16xf32>
    %968 = vector.extract_strided_slice %929 {offsets = [0, 16], sizes = [8, 16], strides = [1, 1]} : vector<8x48xf32> to vector<8x16xf32>
    %969 = arith.addf %967, %968 : vector<8x16xf32>
    %970 = arith.negf %969 : vector<8x16xf32>
    %971 = math.exp %970 : vector<8x16xf32>
    %cst_193 = arith.constant 1.000000e+00 : f32
    %972 = vector.broadcast %cst_193 : f32 to vector<8x16xf32>
    %973 = arith.addf %972, %971 : vector<8x16xf32>
    %974 = arith.divf %972, %973 : vector<8x16xf32>
    %975 = vector.extract_strided_slice %958 {offsets = [0, 32], sizes = [8, 16], strides = [1, 1]} : vector<8x48xf32> to vector<8x16xf32>
    %976 = vector.extract_strided_slice %929 {offsets = [0, 32], sizes = [8, 16], strides = [1, 1]} : vector<8x48xf32> to vector<8x16xf32>
    %977 = arith.addf %976, %519 : vector<8x16xf32>
    %978 = arith.mulf %966, %977 : vector<8x16xf32>
    %979 = arith.addf %975, %978 : vector<8x16xf32>
    %980 = math.tanh %979 : vector<8x16xf32>
    %cst_194 = arith.constant 1.000000e+00 : f32
    %981 = vector.broadcast %cst_194 : f32 to vector<8x16xf32>
    %982 = arith.subf %981, %974 : vector<8x16xf32>
    %983 = arith.mulf %982, %980 : vector<8x16xf32>
    %984 = arith.mulf %974, %927 : vector<8x16xf32>
    %985 = arith.addf %983, %984 : vector<8x16xf32>
    %c0_195 = arith.constant 0 : index
    %c0_196 = arith.constant 0 : index
    %986 = vector.load %arg17[%c0_195, %c0_196] : memref<8x64xf32, #tpu.memory_space<vmem>>, vector<8x16xf32>
    tpu.vector_store %arg17[%c0_195, %c0_196], %470 {strides = array<i32>} : memref<8x64xf32, #tpu.memory_space<vmem>>, vector<8x16xf32>,
    %c0_197 = arith.constant 0 : index
    %c16_198 = arith.constant 16 : index
    %987 = vector.load %arg17[%c0_197, %c16_198] : memref<8x64xf32, #tpu.memory_space<vmem>>, vector<8x16xf32>
    tpu.vector_store %arg17[%c0_197, %c16_198], %498 {strides = array<i32>} : memref<8x64xf32, #tpu.memory_space<vmem>>, vector<8x16xf32>,
    %c0_199 = arith.constant 0 : index
    %c32_200 = arith.constant 32 : index
    %988 = vector.load %arg17[%c0_199, %c32_200] : memref<8x64xf32, #tpu.memory_space<vmem>>, vector<8x16xf32>
    tpu.vector_store %arg17[%c0_199, %c32_200], %957 {strides = array<i32>} : memref<8x64xf32, #tpu.memory_space<vmem>>, vector<8x16xf32>,
    %c0_201 = arith.constant 0 : index
    %c48_202 = arith.constant 48 : index
    %989 = vector.load %arg17[%c0_201, %c48_202] : memref<8x64xf32, #tpu.memory_space<vmem>>, vector<8x16xf32>
    tpu.vector_store %arg17[%c0_201, %c48_202], %985 {strides = array<i32>} : memref<8x64xf32, #tpu.memory_space<vmem>>, vector<8x16xf32>,
    return
  }
}

</mosaic_0001>

<llo_original>
// kernel: encoder_forward.1
$region0: #{encoder_forward.1}
  #allocation0 [shape = 'u32[]', space=smem, size = 0x4, offset = 0x4, fixed_abs, tag = 'smem constant byte address 0x4 - core index']
  #allocation1 [shape = 'u32[72,128]{1,0:T(1,128)}', space=vmem, size = 0x9000, scoped, tag = 'internal scratch']
  #allocation2 [shape = 'f32[64,32]{1,0:T(8,128)}', space=vmem, size = 0x8000, scoped, tag = 'scratch operand']
  %s0 = inlined_call_operand.vmem [shape: f32[64,4], index: 0, kind: input, shape index: {}]
  %s1 = inlined_call_operand.hbm [shape: f32[4,48], index: 1, kind: input, shape index: {}]
  %s2 = inlined_call_operand.vmem [shape: f32[16,48], index: 2, kind: input, shape index: {}]
  %s3 = inlined_call_operand.vmem [shape: f32[1,48], index: 3, kind: input, shape index: {}]
  %s4 = inlined_call_operand.hbm [shape: f32[1,16], index: 4, kind: input, shape index: {}]
  %s5 = inlined_call_operand.hbm [shape: f32[4,48], index: 5, kind: input, shape index: {}]
  %s6 = inlined_call_operand.vmem [shape: f32[16,48], index: 6, kind: input, shape index: {}]
  %s7 = inlined_call_operand.hbm [shape: f32[1,48], index: 7, kind: input, shape index: {}]
  %s8 = inlined_call_operand.hbm [shape: f32[1,16], index: 8, kind: input, shape index: {}]
  %s9 = inlined_call_operand.vmem [shape: f32[32,48], index: 9, kind: input, shape index: {}]
  %s10 = inlined_call_operand.vmem [shape: f32[16,48], index: 10, kind: input, shape index: {}]
  %s11 = inlined_call_operand.vmem [shape: f32[1,48], index: 11, kind: input, shape index: {}]
  %s12 = inlined_call_operand.vmem [shape: f32[1,16], index: 12, kind: input, shape index: {}]
  %s13 = inlined_call_operand.vmem [shape: f32[32,48], index: 13, kind: input, shape index: {}]
  %s14 = inlined_call_operand.hbm [shape: f32[16,48], index: 14, kind: input, shape index: {}]
  %s15 = inlined_call_operand.hbm [shape: f32[1,48], index: 15, kind: input, shape index: {}]
  %s16 = inlined_call_operand.hbm [shape: f32[1,16], index: 16, kind: input, shape index: {}]
  %s17 = inlined_call_operand.vmem [shape: f32[8,64], index: 17, kind: output, shape index: {}]
  %s18 = sld [smem:[#allocation0]]
  $region110: #{encoder_forward.1} parent=0
    _
  %s20 = ssub.s32 1, %s18
  %s21 = scalar_select 0, %s20, %s18
  $region1: #{encoder_forward.1} parent=0
    #allocation3 [shape = 'u8[2048]{0}', space=vmem, size = 0x800, scoped, tag = 'input window, operand 1, single buffered']
    #allocation4 [shape = 's32[1]{0}', space=sflag, size = 0x4, scoped, tag = 'scoped memory for encoder_forward.1']
    #allocation5 [shape = 'u8[512]{0}', space=vmem, size = 0x400, scoped, tag = 'input window, operand 4, single buffered']
    #allocation6 [shape = 's32[1]{0}', space=sflag, size = 0x4, scoped, tag = 'scoped memory for encoder_forward.1']
    #allocation7 [shape = 'u8[2048]{0}', space=vmem, size = 0x800, scoped, tag = 'input window, operand 5, single buffered']
    #allocation8 [shape = 'u8[512]{0}', space=vmem, size = 0x400, scoped, tag = 'input window, operand 7, single buffered']
    #allocation9 [shape = 's32[1]{0}', space=sflag, size = 0x4, scoped, tag = 'scoped memory for encoder_forward.1']
    #allocation10 [shape = 'u8[512]{0}', space=vmem, size = 0x400, scoped, tag = 'input window, operand 8, single buffered']
    #allocation11 [shape = 'u8[8192]{0}', space=vmem, size = 0x2000, scoped, tag = 'input window, operand 14, single buffered']
    #allocation12 [shape = 's32[1]{0}', space=sflag, size = 0x4, scoped, tag = 'scoped memory for encoder_forward.1']
    #allocation13 [shape = 'u8[512]{0}', space=vmem, size = 0x400, scoped, tag = 'input window, operand 15, single buffered']
    #allocation14 [shape = 'u8[512]{0}', space=vmem, size = 0x400, scoped, tag = 'input window, operand 16, single buffered']
    #allocation15 [shape = 's32[1]{0}', space=sflag, size = 0x4, scoped, tag = 'scoped memory for encoder_forward.1']
    %22 = vsyncpa [#allocation4], 0
    %23 = vsyncpa [#allocation6], 0
    %24 = vsyncpa [#allocation9], 0
    %25 = vsyncpa [#allocation12], 0
    %26 = vsyncpa [#allocation15], 0
    // Predicated region
    $region2: #{encoder_forward.1} parent=1 // pred_check
      _
    $region3: #{encoder_forward.1} parent=1 // pred_check_branch
      %28 = sbr.rel (0) target = $region5
    $region4: #{encoder_forward.1} parent=1 // pred_region
      _
    $region5: #{encoder_forward.1} parent=1 // pred_fallthru
      _
    // Predicated region
    $region6: #{encoder_forward.1} parent=1 // pred_check
      _
    $region7: #{encoder_forward.1} parent=1 // pred_check_branch
      %30 = sbr.rel (0) target = $region9
    $region8: #{encoder_forward.1} parent=1 // pred_region
      %32 = vsyncadd [#allocation4], 0
      %s34 = sshll.u32 %s1, 4
      %s35 = int_to_ptr.hbm [resolvable:$true] %s34
      %s36 = sshll.u32 [#allocation3], 4
      %s37 = int_to_ptr.vmem [resolvable:$true] %s36
      %39 = dma.hbm_to_vmem [thread:$0]  %s35, 64, %s37, [#allocation4]
    $region9: #{encoder_forward.1} parent=1 // pred_fallthru
      _
    // Predicated region
    $region10: #{encoder_forward.1} parent=1 // pred_check
      _
    $region11: #{encoder_forward.1} parent=1 // pred_check_branch
      %41 = sbr.rel (0) target = $region13
    $region12: #{encoder_forward.1} parent=1 // pred_region
      _
    $region13: #{encoder_forward.1} parent=1 // pred_fallthru
      _
    // Predicated region
    $region14: #{encoder_forward.1} parent=1 // pred_check
      _
    $region15: #{encoder_forward.1} parent=1 // pred_check_branch
      %43 = sbr.rel (0) target = $region17
    $region16: #{encoder_forward.1} parent=1 // pred_region
      _
    $region17: #{encoder_forward.1} parent=1 // pred_fallthru
      _
    // Predicated region
    $region18: #{encoder_forward.1} parent=1 // pred_check
      _
    $region19: #{encoder_forward.1} parent=1 // pred_check_branch
      %45 = sbr.rel (0) target = $region21
    $region20: #{encoder_forward.1} parent=1 // pred_region
      %47 = vsyncadd [#allocation6], 0
      %s49 = sshll.u32 %s4, 4
      %s50 = int_to_ptr.hbm [resolvable:$true] %s49
      %s51 = sshll.u32 [#allocation5], 4
      %s52 = int_to_ptr.vmem [resolvable:$true] %s51
      %54 = dma.hbm_to_vmem [thread:$0]  %s50, 16, %s52, [#allocation6]
    $region21: #{encoder_forward.1} parent=1 // pred_fallthru
      _
    // Predicated region
    $region22: #{encoder_forward.1} parent=1 // pred_check
      _
    $region23: #{encoder_forward.1} parent=1 // pred_check_branch
      %56 = sbr.rel (0) target = $region25
    $region24: #{encoder_forward.1} parent=1 // pred_region
      %58 = vsyncadd [#allocation6], 0
      %s60 = sshll.u32 %s5, 4
      %s61 = int_to_ptr.hbm [resolvable:$true] %s60
      %s62 = sshll.u32 [#allocation7], 4
      %s63 = int_to_ptr.vmem [resolvable:$true] %s62
      %65 = dma.hbm_to_vmem [thread:$0]  %s61, 64, %s63, [#allocation6]
    $region25: #{encoder_forward.1} parent=1 // pred_fallthru
      _
    // Predicated region
    $region26: #{encoder_forward.1} parent=1 // pred_check
      _
    $region27: #{encoder_forward.1} parent=1 // pred_check_branch
      %67 = sbr.rel (0) target = $region29
    $region28: #{encoder_forward.1} parent=1 // pred_region
      _
    $region29: #{encoder_forward.1} parent=1 // pred_fallthru
      _
    // Predicated region
    $region30: #{encoder_forward.1} parent=1 // pred_check
      _
    $region31: #{encoder_forward.1} parent=1 // pred_check_branch
      %69 = sbr.rel (0) target = $region33
    $region32: #{encoder_forward.1} parent=1 // pred_region
      %71 = vsyncadd [#allocation9], 0
      %s73 = sshll.u32 %s7, 4
      %s74 = int_to_ptr.hbm [resolvable:$true] %s73
      %s75 = sshll.u32 [#allocation8], 4
      %s76 = int_to_ptr.vmem [resolvable:$true] %s75
      %78 = dma.hbm_to_vmem [thread:$0]  %s74, 16, %s76, [#allocation9]
    $region33: #{encoder_forward.1} parent=1 // pred_fallthru
      _
    // Predicated region
    $region34: #{encoder_forward.1} parent=1 // pred_check
      _
    $region35: #{encoder_forward.1} parent=1 // pred_check_branch
      %80 = sbr.rel (0) target = $region37
    $region36: #{encoder_forward.1} parent=1 // pred_region
      %82 = vsyncadd [#allocation9], 0
      %s84 = sshll.u32 %s8, 4
      %s85 = int_to_ptr.hbm [resolvable:$true] %s84
      %s86 = sshll.u32 [#allocation10], 4
      %s87 = int_to_ptr.vmem [resolvable:$true] %s86
      %89 = dma.hbm_to_vmem [thread:$0]  %s85, 16, %s87, [#allocation9]
    $region37: #{encoder_forward.1} parent=1 // pred_fallthru
      _
    // Predicated region
    $region38: #{encoder_forward.1} parent=1 // pred_check
      _
    $region39: #{encoder_forward.1} parent=1 // pred_check_branch
      %91 = sbr.rel (0) target = $region41
    $region40: #{encoder_forward.1} parent=1 // pred_region
      _
    $region41: #{encoder_forward.1} parent=1 // pred_fallthru
      _
    // Predicated region
    $region42: #{encoder_forward.1} parent=1 // pred_check
      _
    $region43: #{encoder_forward.1} parent=1 // pred_check_branch
      %93 = sbr.rel (0) target = $region45
    $region44: #{encoder_forward.1} parent=1 // pred_region
      _
    $region45: #{encoder_forward.1} parent=1 // pred_fallthru
      _
    // Predicated region
    $region46: #{encoder_forward.1} parent=1 // pred_check
      _
    $region47: #{encoder_forward.1} parent=1 // pred_check_branch
      %95 = sbr.rel (0) target = $region49
    $region48: #{encoder_forward.1} parent=1 // pred_region
      _
    $region49: #{encoder_forward.1} parent=1 // pred_fallthru
      _
    // Predicated region
    $region50: #{encoder_forward.1} parent=1 // pred_check
      _
    $region51: #{encoder_forward.1} parent=1 // pred_check_branch
      %97 = sbr.rel (0) target = $region53
    $region52: #{encoder_forward.1} parent=1 // pred_region
      _
    $region53: #{encoder_forward.1} parent=1 // pred_fallthru
      _
    // Predicated region
    $region54: #{encoder_forward.1} parent=1 // pred_check
      _
    $region55: #{encoder_forward.1} parent=1 // pred_check_branch
      %99 = sbr.rel (0) target = $region57
    $region56: #{encoder_forward.1} parent=1 // pred_region
      _
    $region57: #{encoder_forward.1} parent=1 // pred_fallthru
      _
    // Predicated region
    $region58: #{encoder_forward.1} parent=1 // pred_check
      _
    $region59: #{encoder_forward.1} parent=1 // pred_check_branch
      %101 = sbr.rel (0) target = $region61
    $region60: #{encoder_forward.1} parent=1 // pred_region
      %103 = vsyncadd [#allocation12], 0
      %s104 = sshll.u32 %s14, 4
      %s105 = int_to_ptr.hbm [resolvable:$true] %s104
      %s106 = sshll.u32 [#allocation11], 4
      %s107 = int_to_ptr.vmem [resolvable:$true] %s106
      %112 = dma.hbm_to_vmem [thread:$0]  %s105, 256, %s107, [#allocation12], 128, 128, 8
    $region61: #{encoder_forward.1} parent=1 // pred_fallthru
      _
    // Predicated region
    $region62: #{encoder_forward.1} parent=1 // pred_check
      _
    $region63: #{encoder_forward.1} parent=1 // pred_check_branch
      %114 = sbr.rel (0) target = $region65
    $region64: #{encoder_forward.1} parent=1 // pred_region
      %116 = vsyncadd [#allocation12], 0
      %s118 = sshll.u32 %s15, 4
      %s119 = int_to_ptr.hbm [resolvable:$true] %s118
      %s120 = sshll.u32 [#allocation13], 4
      %s121 = int_to_ptr.vmem [resolvable:$true] %s120
      %123 = dma.hbm_to_vmem [thread:$0]  %s119, 16, %s121, [#allocation12]
    $region65: #{encoder_forward.1} parent=1 // pred_fallthru
      _
    // Predicated region
    $region66: #{encoder_forward.1} parent=1 // pred_check
      _
    $region67: #{encoder_forward.1} parent=1 // pred_check_branch
      %125 = sbr.rel (0) target = $region69
    $region68: #{encoder_forward.1} parent=1 // pred_region
      %127 = vsyncadd [#allocation15], 0
      %s129 = sshll.u32 %s16, 4
      %s130 = int_to_ptr.hbm [resolvable:$true] %s129
      %s131 = sshll.u32 [#allocation14], 4
      %s132 = int_to_ptr.vmem [resolvable:$true] %s131
      %134 = dma.hbm_to_vmem [thread:$0]  %s130, 16, %s132, [#allocation15]
    $region69: #{encoder_forward.1} parent=1 // pred_fallthru
      _
    // Predicated region
    $region70: #{encoder_forward.1} parent=1 // pred_check
      _
    $region71: #{encoder_forward.1} parent=1 // pred_check_branch
      %136 = sbr.rel (0) target = $region73
    $region72: #{encoder_forward.1} parent=1 // pred_region
      %138 = dma.done [#allocation4], 64
    $region73: #{encoder_forward.1} parent=1 // pred_fallthru
      _
    // Predicated region
    $region74: #{encoder_forward.1} parent=1 // pred_check
      _
    $region75: #{encoder_forward.1} parent=1 // pred_check_branch
      %140 = sbr.rel (0) target = $region77
    $region76: #{encoder_forward.1} parent=1 // pred_region
      %142 = dma.done [#allocation6], 16
    $region77: #{encoder_forward.1} parent=1 // pred_fallthru
      _
    // Predicated region
    $region78: #{encoder_forward.1} parent=1 // pred_check
      _
    $region79: #{encoder_forward.1} parent=1 // pred_check_branch
      %144 = sbr.rel (0) target = $region81
    $region80: #{encoder_forward.1} parent=1 // pred_region
      %146 = dma.done [#allocation6], 64
    $region81: #{encoder_forward.1} parent=1 // pred_fallthru
      _
    // Predicated region
    $region82: #{encoder_forward.1} parent=1 // pred_check
      _
    $region83: #{encoder_forward.1} parent=1 // pred_check_branch
      %148 = sbr.rel (0) target = $region85
    $region84: #{encoder_forward.1} parent=1 // pred_region
      %150 = dma.done [#allocation9], 16
    $region85: #{encoder_forward.1} parent=1 // pred_fallthru
      _
    // Predicated region
    $region86: #{encoder_forward.1} parent=1 // pred_check
      _
    $region87: #{encoder_forward.1} parent=1 // pred_check_branch
      %152 = sbr.rel (0) target = $region89
    $region88: #{encoder_forward.1} parent=1 // pred_region
      %154 = dma.done [#allocation9], 16
    $region89: #{encoder_forward.1} parent=1 // pred_fallthru
      _
    // Predicated region
    $region90: #{encoder_forward.1} parent=1 // pred_check
      _
    $region91: #{encoder_forward.1} parent=1 // pred_check_branch
      %156 = sbr.rel (0) target = $region93
    $region92: #{encoder_forward.1} parent=1 // pred_region
      %158 = dma.done [#allocation12], 256
    $region93: #{encoder_forward.1} parent=1 // pred_fallthru
      _
    // Predicated region
    $region94: #{encoder_forward.1} parent=1 // pred_check
      _
    $region95: #{encoder_forward.1} parent=1 // pred_check_branch
      %160 = sbr.rel (0) target = $region97
    $region96: #{encoder_forward.1} parent=1 // pred_region
      %162 = dma.done [#allocation12], 16
    $region97: #{encoder_forward.1} parent=1 // pred_fallthru
      _
    // Predicated region
    $region98: #{encoder_forward.1} parent=1 // pred_check
      _
    $region99: #{encoder_forward.1} parent=1 // pred_check_branch
      %164 = sbr.rel (0) target = $region101
    $region100: #{encoder_forward.1} parent=1 // pred_region
      %166 = dma.done [#allocation15], 16
    $region101: #{encoder_forward.1} parent=1 // pred_fallthru
      _
    %v167 = vld [vmem:[%s0] sm:$0xff]
    %v168 = vld [vmem:[%s0 + $0x8] sm:$0xff]
    %v169 = vld [vmem:[%s0 + $0x10] sm:$0xff]
    %v170 = vld [vmem:[%s0 + $0x18] sm:$0xff]
    %v171 = vld [vmem:[%s0 + $0x20] sm:$0xff]
    %v172 = vld [vmem:[%s0 + $0x28] sm:$0xff]
    %v173 = vld [vmem:[%s0 + $0x30] sm:$0xff]
    %v174 = vld [vmem:[%s0 + $0x38] sm:$0xff]
    %v175 = vld [vmem:[#allocation3] sm:$0xf]
    %v176 = vld [vmem:[%s3] sm:$0x1]
    %v178 = vperm.slane %v176, 0
    %vm180 = vcmask 31744
    %v182 = vsel %vm180, %v167, 0
    %v185 = vsel %vm180, %v168, 0
    %v188 = vsel %vm180, %v169, 0
    %v191 = vsel %vm180, %v170, 0
    %v194 = vsel %vm180, %v171, 0
    %v197 = vsel %vm180, %v172, 0
    %v200 = vsel %vm180, %v173, 0
    %v203 = vsel %vm180, %v174, 0
    %vm205 = vcmask 1043456
    %v207 = vsel %vm205, %v175, 0
    %209 = vmatpush.msra.mxu0 0.0
    %210 = vmatpush.msra.mxu0 0.0
    %211 = vmatpush.msra.mxu0 0.0
    %212 = vmatpush.msra.mxu0 0.0
    %213 = vmatpush.msra.mxu0 0.0
    %214 = vmatpush.msra.mxu0 0.0
    %215 = vmatpush.msra.mxu0 0.0
    %216 = vmatpush.msra.mxu0 0.0
    %217 = vmatpush.msra.mxu0 0.0
    %218 = vmatpush.msra.mxu0 0.0
    %219 = vmatpush.msra.mxu0 0.0
    %220 = vmatpush.msra.mxu0 0.0
    %221 = vmatpush.msra.mxu0 0.0
    %222 = vmatpush.msra.mxu0 0.0
    %223 = vmatpush.msra.mxu0 0.0
    %224 = vmatpush.msra.mxu0 %v207
    %225 = vmatmul.f32.gmra.mxu0 %v182
    %v226 = vpop.f32.mrf.mxu0
    %v227 = vadd.f32 %v178, %v226
    %228 = vmatmul.f32.gmra.mxu0 %v185
    %v229 = vpop.f32.mrf.mxu0
    %v230 = vadd.f32 %v178, %v229
    %231 = vmatmul.f32.gmra.mxu0 %v188
    %v232 = vpop.f32.mrf.mxu0
    %v233 = vadd.f32 %v178, %v232
    %234 = vmatmul.f32.gmra.mxu0 %v191
    %v235 = vpop.f32.mrf.mxu0
    %v236 = vadd.f32 %v178, %v235
    %237 = vmatmul.f32.gmra.mxu0 %v194
    %v238 = vpop.f32.mrf.mxu0
    %v239 = vadd.f32 %v178, %v238
    %240 = vmatmul.f32.gmra.mxu0 %v197
    %v241 = vpop.f32.mrf.mxu0
    %v242 = vadd.f32 %v178, %v241
    %243 = vmatmul.f32.gmra.mxu0 %v200
    %v244 = vpop.f32.mrf.mxu0
    %v245 = vadd.f32 %v178, %v244
    %246 = vmatmul.f32.gmra.mxu0 %v203
    %v247 = vpop.f32.mrf.mxu0
    %v248 = vadd.f32 %v178, %v247
    %249 = vdwg.mxu0
    %v250 = vld [vmem:[#allocation7] sm:$0xf]
    %v251 = vld [vmem:[#allocation8] sm:$0x1]
    %v253 = vperm.slane %v251, 0
    %v256 = vsel %vm205, %v250, 0
    %258 = vmatpush.msra.mxu0 0.0
    %259 = vmatpush.msra.mxu0 0.0
    %260 = vmatpush.msra.mxu0 0.0
    %261 = vmatpush.msra.mxu0 0.0
    %262 = vmatpush.msra.mxu0 0.0
    %263 = vmatpush.msra.mxu0 0.0
    %264 = vmatpush.msra.mxu0 0.0
    %265 = vmatpush.msra.mxu0 0.0
    %266 = vmatpush.msra.mxu0 0.0
    %267 = vmatpush.msra.mxu0 0.0
    %268 = vmatpush.msra.mxu0 0.0
    %269 = vmatpush.msra.mxu0 0.0
    %270 = vmatpush.msra.mxu0 0.0
    %271 = vmatpush.msra.mxu0 0.0
    %272 = vmatpush.msra.mxu0 0.0
    %273 = vmatpush.msra.mxu0 %v256
    %274 = vmatmul.f32.gmra.mxu0 %v182
    %v275 = vpop.f32.mrf.mxu0
    %v276 = vadd.f32 %v253, %v275
    %277 = vmatmul.f32.gmra.mxu0 %v185
    %v278 = vpop.f32.mrf.mxu0
    %v279 = vadd.f32 %v253, %v278
    %280 = vmatmul.f32.gmra.mxu0 %v188
    %v281 = vpop.f32.mrf.mxu0
    %v282 = vadd.f32 %v253, %v281
    %283 = vmatmul.f32.gmra.mxu0 %v191
    %v284 = vpop.f32.mrf.mxu0
    %v285 = vadd.f32 %v253, %v284
    %286 = vmatmul.f32.gmra.mxu0 %v194
    %v287 = vpop.f32.mrf.mxu0
    %v288 = vadd.f32 %v253, %v287
    %289 = vmatmul.f32.gmra.mxu0 %v197
    %v290 = vpop.f32.mrf.mxu0
    %v291 = vadd.f32 %v253, %v290
    %292 = vmatmul.f32.gmra.mxu0 %v200
    %v293 = vpop.f32.mrf.mxu0
    %v294 = vadd.f32 %v253, %v293
    %295 = vmatmul.f32.gmra.mxu0 %v203
    %v296 = vpop.f32.mrf.mxu0
    %v297 = vadd.f32 %v253, %v296
    %298 = vdwg.mxu0
    %v299 = vld [vmem:[%s2] sm:$0xff]
    %v300 = vld [vmem:[%s2 + $0x8] sm:$0xff]
    %v301 = vld [vmem:[%s6] sm:$0xff]
    %v302 = vld [vmem:[%s6 + $0x8] sm:$0xff]
    %v303 = vld [vmem:[#allocation5] sm:$0x1]
    %v305 = vperm.slane %v303, 0
    %v306 = vld [vmem:[#allocation10] sm:$0x1]
    %v308 = vperm.slane %v306, 0
    %vm309 = vcmask 130048
    %v311 = vsel %vm309, 0.0, 0
    %313 = vmatpush.msra.mxu0 0.0
    %314 = vmatpush.msra.mxu0 0.0
    %315 = vmatpush.msra.mxu0 0.0
    %316 = vmatpush.msra.mxu0 0.0
    %317 = vmatpush.msra.mxu0 0.0
    %318 = vmatpush.msra.mxu0 0.0
    %319 = vmatpush.msra.mxu0 0.0
    %320 = vmatpush.msra.mxu0 0.0
    %321 = vmatpush.msra.mxu0 0.0
    %322 = vmatpush.msra.mxu0 0.0
    %323 = vmatpush.msra.mxu0 0.0
    %324 = vmatpush.msra.mxu0 0.0
    %325 = vmatpush.msra.mxu0 0.0
    %326 = vmatpush.msra.mxu0 0.0
    %327 = vmatpush.msra.mxu0 %v300
    %328 = vmatpush.msra.mxu0 %v299
    %329 = vmatmul.f32.gmra.mxu0 %v311
    %v330 = vpop.f32.mrf.mxu0
    %v331 = vadd.f32 0.0, %v330
    %332 = vdwg.mxu0
    %333 = vmatpush.msra.mxu0 0.0
    %334 = vmatpush.msra.mxu0 0.0
    %335 = vmatpush.msra.mxu0 0.0
    %336 = vmatpush.msra.mxu0 0.0
    %337 = vmatpush.msra.mxu0 0.0
    %338 = vmatpush.msra.mxu0 0.0
    %339 = vmatpush.msra.mxu0 0.0
    %340 = vmatpush.msra.mxu0 0.0
    %341 = vmatpush.msra.mxu0 0.0
    %342 = vmatpush.msra.mxu0 0.0
    %343 = vmatpush.msra.mxu0 0.0
    %344 = vmatpush.msra.mxu0 0.0
    %345 = vmatpush.msra.mxu0 0.0
    %346 = vmatpush.msra.mxu0 0.0
    %347 = vmatpush.msra.mxu0 %v302
    %348 = vmatpush.msra.mxu0 %v301
    %349 = vmatmul.f32.gmra.mxu0 %v311
    %v350 = vpop.f32.mrf.mxu0
    %v351 = vadd.f32 0.0, %v350
    %352 = vdwg.mxu0
    %v353 = vadd.f32 %v227, %v331
    %v354 = vxor.u32 %v353, 2147483648
    %v355 = vmul.f32 %v354, 1.442695
    %v356 = vpow.pop %v355
    %v357 = vadd.f32 %v356, 1.0
    %v358 = vrcp.pop %v357
    %v359 = vmul.f32 %v357, %v358
    %v360 = vsub.f32 1.0, %v359
    %v361 = vmul.f32 %v358, %v360
    %v362 = vadd.f32 %v358, %v361
    %vm363 = vweird.f32 %v357
    %vm364 = vweird.f32 %v358
    %vm365 = vmor %vm363, %vm364
    %v366 = vsel %vm365, %v358, %v362
    %v367 = vand.u32 2147483647, %v357
    %vm368 = vcmp.eq.f32.partialorder %v367, 8.507059e+37
    %v369 = vand.u32 %v357, 2147483648
    %v370 = vor.u32 1.1754944e-38, %v369
    %v371 = vsel %vm368, %v370, %v366
    %v372 = vmul.f32 1.0, %v371
    %373 = vrot.lane.b32.xlu0 %v305, 32
    %v374 = vpop.permute.xlu0 %373
    %v376 = vadd.f32 %v331, %v374
    %378 = vrot.lane.b32.xlu0 %v376, 96
    %v379 = vpop.permute.xlu0 %378
    %v381 = vmul.f32 %v372, %v379
    %383 = vrot.lane.b32.xlu0 %v381, 32
    %v384 = vpop.permute.xlu0 %383
    %v386 = vadd.f32 %v227, %v384
    %v387 = vtanh.pop %v386
    %v388 = vsub.f32 1.0, %v372
    %390 = vrot.lane.b32.xlu0 %v387, 112
    %v391 = vpop.permute.xlu0 %390
    %v393 = vmul.f32 %v388, %v391
    %v394 = vmul.f32 %v372, 0.0
    %v395 = vadd.f32 %v393, %v394
    %v396 = vadd.f32 %v297, %v351
    %v397 = vxor.u32 %v396, 2147483648
    %v398 = vmul.f32 %v397, 1.442695
    %v399 = vpow.pop %v398
    %v400 = vadd.f32 %v399, 1.0
    %v401 = vrcp.pop %v400
    %v402 = vmul.f32 %v400, %v401
    %v403 = vsub.f32 1.0, %v402
    %v404 = vmul.f32 %v401, %v403
    %v405 = vadd.f32 %v401, %v404
    %vm406 = vweird.f32 %v400
    %vm407 = vweird.f32 %v401
    %vm408 = vmor %vm406, %vm407
    %v409 = vsel %vm408, %v401, %v405
    %v410 = vand.u32 2147483647, %v400
    %vm411 = vcmp.eq.f32.partialorder %v410, 8.507059e+37
    %v412 = vand.u32 %v400, 2147483648
    %v413 = vor.u32 1.1754944e-38, %v412
    %v414 = vsel %vm411, %v413, %v409
    %v415 = vmul.f32 1.0, %v414
    %416 = vrot.lane.b32.xlu0 %v308, 32
    %v417 = vpop.permute.xlu0 %416
    %v419 = vadd.f32 %v351, %v417
    %421 = vrot.lane.b32.xlu0 %v419, 96
    %v422 = vpop.permute.xlu0 %421
    %v424 = vmul.f32 %v415, %v422
    %426 = vrot.lane.b32.xlu0 %v424, 32
    %v427 = vpop.permute.xlu0 %426
    %v429 = vadd.f32 %v297, %v427
    %v430 = vtanh.pop %v429
    %v431 = vsub.f32 1.0, %v415
    %433 = vrot.lane.b32.xlu0 %v430, 112
    %v434 = vpop.permute.xlu0 %433
    %v436 = vmul.f32 %v431, %v434
    %v437 = vmul.f32 %v415, 0.0
    %v438 = vadd.f32 %v436, %v437
    %440 = vrot.lane.b32.xlu0 %v395, 112
    %v441 = vpop.permute.xlu0 %440
    %443 = vst.msk [vmem:[#allocation2] sm:$0xff] %vm309, %v441
    %vm444 = vcmask 261248
    %445 = vst.msk [vmem:[#allocation2 + $0x38] sm:$0xff] %vm444, %v438
    %v446 = vsel %vm309, %v441, 0
    %448 = vmatpush.msra.mxu0 0.0
    %449 = vmatpush.msra.mxu0 0.0
    %450 = vmatpush.msra.mxu0 0.0
    %451 = vmatpush.msra.mxu0 0.0
    %452 = vmatpush.msra.mxu0 0.0
    %453 = vmatpush.msra.mxu0 0.0
    %454 = vmatpush.msra.mxu0 0.0
    %455 = vmatpush.msra.mxu0 0.0
    %456 = vmatpush.msra.mxu0 0.0
    %457 = vmatpush.msra.mxu0 0.0
    %458 = vmatpush.msra.mxu0 0.0
    %459 = vmatpush.msra.mxu0 0.0
    %460 = vmatpush.msra.mxu0 0.0
    %461 = vmatpush.msra.mxu0 0.0
    %462 = vmatpush.msra.mxu0 %v300
    %463 = vmatpush.msra.mxu0 %v299
    %464 = vmatmul.f32.gmra.mxu0 %v446
    %v465 = vpop.f32.mrf.mxu0
    %v466 = vadd.f32 0.0, %v465
    %467 = vdwg.mxu0
    %469 = vrot.lane.b32.xlu0 %v438, 112
    %v470 = vpop.permute.xlu0 %469
    %v471 = vsel %vm309, %v470, 0
    %473 = vmatpush.msra.mxu0 0.0
    %474 = vmatpush.msra.mxu0 0.0
    %475 = vmatpush.msra.mxu0 0.0
    %476 = vmatpush.msra.mxu0 0.0
    %477 = vmatpush.msra.mxu0 0.0
    %478 = vmatpush.msra.mxu0 0.0
    %479 = vmatpush.msra.mxu0 0.0
    %480 = vmatpush.msra.mxu0 0.0
    %481 = vmatpush.msra.mxu0 0.0
    %482 = vmatpush.msra.mxu0 0.0
    %483 = vmatpush.msra.mxu0 0.0
    %484 = vmatpush.msra.mxu0 0.0
    %485 = vmatpush.msra.mxu0 0.0
    %486 = vmatpush.msra.mxu0 0.0
    %487 = vmatpush.msra.mxu0 %v302
    %488 = vmatpush.msra.mxu0 %v301
    %489 = vmatmul.f32.gmra.mxu0 %v471
    %v490 = vpop.f32.mrf.mxu0
    %v491 = vadd.f32 0.0, %v490
    %492 = vdwg.mxu0
    %v493 = vadd.f32 %v230, %v466
    %v494 = vxor.u32 %v493, 2147483648
    %v495 = vmul.f32 %v494, 1.442695
    %v496 = vpow.pop %v495
    %v497 = vadd.f32 %v496, 1.0
    %v498 = vrcp.pop %v497
    %v499 = vmul.f32 %v497, %v498
    %v500 = vsub.f32 1.0, %v499
    %v501 = vmul.f32 %v498, %v500
    %v502 = vadd.f32 %v498, %v501
    %vm503 = vweird.f32 %v497
    %vm504 = vweird.f32 %v498
    %vm505 = vmor %vm503, %vm504
    %v506 = vsel %vm505, %v498, %v502
    %v507 = vand.u32 2147483647, %v497
    %vm508 = vcmp.eq.f32.partialorder %v507, 8.507059e+37
    %v509 = vand.u32 %v497, 2147483648
    %v510 = vor.u32 1.1754944e-38, %v509
    %v511 = vsel %vm508, %v510, %v506
    %v512 = vmul.f32 1.0, %v511
    %v513 = vadd.f32 %v466, %v374
    %515 = vrot.lane.b32.xlu0 %v513, 96
    %v516 = vpop.permute.xlu0 %515
    %v518 = vmul.f32 %v512, %v516
    %520 = vrot.lane.b32.xlu0 %v518, 32
    %v521 = vpop.permute.xlu0 %520
    %v523 = vadd.f32 %v230, %v521
    %v524 = vtanh.pop %v523
    %v525 = vsub.f32 1.0, %v512
    %527 = vrot.lane.b32.xlu0 %v524, 112
    %v528 = vpop.permute.xlu0 %527
    %v530 = vmul.f32 %v525, %v528
    %v531 = vmul.f32 %v512, %v395
    %v532 = vadd.f32 %v530, %v531
    %v533 = vadd.f32 %v294, %v491
    %v534 = vxor.u32 %v533, 2147483648
    %v535 = vmul.f32 %v534, 1.442695
    %v536 = vpow.pop %v535
    %v537 = vadd.f32 %v536, 1.0
    %v538 = vrcp.pop %v537
    %v539 = vmul.f32 %v537, %v538
    %v540 = vsub.f32 1.0, %v539
    %v541 = vmul.f32 %v538, %v540
    %v542 = vadd.f32 %v538, %v541
    %vm543 = vweird.f32 %v537
    %vm544 = vweird.f32 %v538
    %vm545 = vmor %vm543, %vm544
    %v546 = vsel %vm545, %v538, %v542
    %v547 = vand.u32 2147483647, %v537
    %vm548 = vcmp.eq.f32.partialorder %v547, 8.507059e+37
    %v549 = vand.u32 %v537, 2147483648
    %v550 = vor.u32 1.1754944e-38, %v549
    %v551 = vsel %vm548, %v550, %v546
    %v552 = vmul.f32 1.0, %v551
    %v553 = vadd.f32 %v491, %v417
    %555 = vrot.lane.b32.xlu0 %v553, 96
    %v556 = vpop.permute.xlu0 %555
    %v558 = vmul.f32 %v552, %v556
    %560 = vrot.lane.b32.xlu0 %v558, 32
    %v561 = vpop.permute.xlu0 %560
    %v563 = vadd.f32 %v294, %v561
    %v564 = vtanh.pop %v563
    %v565 = vsub.f32 1.0, %v552
    %567 = vrot.lane.b32.xlu0 %v564, 112
    %v568 = vpop.permute.xlu0 %567
    %v570 = vmul.f32 %v565, %v568
    %v571 = vmul.f32 %v552, %v438
    %v572 = vadd.f32 %v570, %v571
    %574 = vrot.lane.b32.xlu0 %v532, 112
    %v575 = vpop.permute.xlu0 %574
    %577 = vst.msk [vmem:[#allocation2 + $0x8] sm:$0xff] %vm309, %v575
    %578 = vst.msk [vmem:[#allocation2 + $0x30] sm:$0xff] %vm444, %v572
    %v579 = vsel %vm309, %v575, 0
    %581 = vmatpush.msra.mxu0 0.0
    %582 = vmatpush.msra.mxu0 0.0
    %583 = vmatpush.msra.mxu0 0.0
    %584 = vmatpush.msra.mxu0 0.0
    %585 = vmatpush.msra.mxu0 0.0
    %586 = vmatpush.msra.mxu0 0.0
    %587 = vmatpush.msra.mxu0 0.0
    %588 = vmatpush.msra.mxu0 0.0
    %589 = vmatpush.msra.mxu0 0.0
    %590 = vmatpush.msra.mxu0 0.0
    %591 = vmatpush.msra.mxu0 0.0
    %592 = vmatpush.msra.mxu0 0.0
    %593 = vmatpush.msra.mxu0 0.0
    %594 = vmatpush.msra.mxu0 0.0
    %595 = vmatpush.msra.mxu0 %v300
    %596 = vmatpush.msra.mxu0 %v299
    %597 = vmatmul.f32.gmra.mxu0 %v579
    %v598 = vpop.f32.mrf.mxu0
    %v599 = vadd.f32 0.0, %v598
    %600 = vdwg.mxu0
    %602 = vrot.lane.b32.xlu0 %v572, 112
    %v603 = vpop.permute.xlu0 %602
    %v604 = vsel %vm309, %v603, 0
    %606 = vmatpush.msra.mxu0 0.0
    %607 = vmatpush.msra.mxu0 0.0
    %608 = vmatpush.msra.mxu0 0.0
    %609 = vmatpush.msra.mxu0 0.0
    %610 = vmatpush.msra.mxu0 0.0
    %611 = vmatpush.msra.mxu0 0.0
    %612 = vmatpush.msra.mxu0 0.0
    %613 = vmatpush.msra.mxu0 0.0
    %614 = vmatpush.msra.mxu0 0.0
    %615 = vmatpush.msra.mxu0 0.0
    %616 = vmatpush.msra.mxu0 0.0
    %617 = vmatpush.msra.mxu0 0.0
    %618 = vmatpush.msra.mxu0 0.0
    %619 = vmatpush.msra.mxu0 0.0
    %620 = vmatpush.msra.mxu0 %v302
    %621 = vmatpush.msra.mxu0 %v301
    %622 = vmatmul.f32.gmra.mxu0 %v604
    %v623 = vpop.f32.mrf.mxu0
    %v624 = vadd.f32 0.0, %v623
    %625 = vdwg.mxu0
    %v626 = vadd.f32 %v233, %v599
    %v627 = vxor.u32 %v626, 2147483648
    %v628 = vmul.f32 %v627, 1.442695
    %v629 = vpow.pop %v628
    %v630 = vadd.f32 %v629, 1.0
    %v631 = vrcp.pop %v630
    %v632 = vmul.f32 %v630, %v631
    %v633 = vsub.f32 1.0, %v632
    %v634 = vmul.f32 %v631, %v633
    %v635 = vadd.f32 %v631, %v634
    %vm636 = vweird.f32 %v630
    %vm637 = vweird.f32 %v631
    %vm638 = vmor %vm636, %vm637
    %v639 = vsel %vm638, %v631, %v635
    %v640 = vand.u32 2147483647, %v630
    %vm641 = vcmp.eq.f32.partialorder %v640, 8.507059e+37
    %v642 = vand.u32 %v630, 2147483648
    %v643 = vor.u32 1.1754944e-38, %v642
    %v644 = vsel %vm641, %v643, %v639
    %v645 = vmul.f32 1.0, %v644
    %v646 = vadd.f32 %v599, %v374
    %648 = vrot.lane.b32.xlu0 %v646, 96
    %v649 = vpop.permute.xlu0 %648
    %v651 = vmul.f32 %v645, %v649
    %653 = vrot.lane.b32.xlu0 %v651, 32
    %v654 = vpop.permute.xlu0 %653
    %v656 = vadd.f32 %v233, %v654
    %v657 = vtanh.pop %v656
    %v658 = vsub.f32 1.0, %v645
    %660 = vrot.lane.b32.xlu0 %v657, 112
    %v661 = vpop.permute.xlu0 %660
    %v663 = vmul.f32 %v658, %v661
    %v664 = vmul.f32 %v645, %v532
    %v665 = vadd.f32 %v663, %v664
    %v666 = vadd.f32 %v291, %v624
    %v667 = vxor.u32 %v666, 2147483648
    %v668 = vmul.f32 %v667, 1.442695
    %v669 = vpow.pop %v668
    %v670 = vadd.f32 %v669, 1.0
    %v671 = vrcp.pop %v670
    %v672 = vmul.f32 %v670, %v671
    %v673 = vsub.f32 1.0, %v672
    %v674 = vmul.f32 %v671, %v673
    %v675 = vadd.f32 %v671, %v674
    %vm676 = vweird.f32 %v670
    %vm677 = vweird.f32 %v671
    %vm678 = vmor %vm676, %vm677
    %v679 = vsel %vm678, %v671, %v675
    %v680 = vand.u32 2147483647, %v670
    %vm681 = vcmp.eq.f32.partialorder %v680, 8.507059e+37
    %v682 = vand.u32 %v670, 2147483648
    %v683 = vor.u32 1.1754944e-38, %v682
    %v684 = vsel %vm681, %v683, %v679
    %v685 = vmul.f32 1.0, %v684
    %v686 = vadd.f32 %v624, %v417
    %688 = vrot.lane.b32.xlu0 %v686, 96
    %v689 = vpop.permute.xlu0 %688
    %v691 = vmul.f32 %v685, %v689
    %693 = vrot.lane.b32.xlu0 %v691, 32
    %v694 = vpop.permute.xlu0 %693
    %v696 = vadd.f32 %v291, %v694
    %v697 = vtanh.pop %v696
    %v698 = vsub.f32 1.0, %v685
    %700 = vrot.lane.b32.xlu0 %v697, 112
    %v701 = vpop.permute.xlu0 %700
    %v703 = vmul.f32 %v698, %v701
    %v704 = vmul.f32 %v685, %v572
    %v705 = vadd.f32 %v703, %v704
    %707 = vrot.lane.b32.xlu0 %v665, 112
    %v708 = vpop.permute.xlu0 %707
    %710 = vst.msk [vmem:[#allocation2 + $0x10] sm:$0xff] %vm309, %v708
    %711 = vst.msk [vmem:[#allocation2 + $0x28] sm:$0xff] %vm444, %v705
    %v712 = vsel %vm309, %v708, 0
    %714 = vmatpush.msra.mxu0 0.0
    %715 = vmatpush.msra.mxu0 0.0
    %716 = vmatpush.msra.mxu0 0.0
    %717 = vmatpush.msra.mxu0 0.0
    %718 = vmatpush.msra.mxu0 0.0
    %719 = vmatpush.msra.mxu0 0.0
    %720 = vmatpush.msra.mxu0 0.0
    %721 = vmatpush.msra.mxu0 0.0
    %722 = vmatpush.msra.mxu0 0.0
    %723 = vmatpush.msra.mxu0 0.0
    %724 = vmatpush.msra.mxu0 0.0
    %725 = vmatpush.msra.mxu0 0.0
    %726 = vmatpush.msra.mxu0 0.0
    %727 = vmatpush.msra.mxu0 0.0
    %728 = vmatpush.msra.mxu0 %v300
    %729 = vmatpush.msra.mxu0 %v299
    %730 = vmatmul.f32.gmra.mxu0 %v712
    %v731 = vpop.f32.mrf.mxu0
    %v732 = vadd.f32 0.0, %v731
    %733 = vdwg.mxu0
    %735 = vrot.lane.b32.xlu0 %v705, 112
    %v736 = vpop.permute.xlu0 %735
    %v737 = vsel %vm309, %v736, 0
    %739 = vmatpush.msra.mxu0 0.0
    %740 = vmatpush.msra.mxu0 0.0
    %741 = vmatpush.msra.mxu0 0.0
    %742 = vmatpush.msra.mxu0 0.0
    %743 = vmatpush.msra.mxu0 0.0
    %744 = vmatpush.msra.mxu0 0.0
    %745 = vmatpush.msra.mxu0 0.0
    %746 = vmatpush.msra.mxu0 0.0
    %747 = vmatpush.msra.mxu0 0.0
    %748 = vmatpush.msra.mxu0 0.0
    %749 = vmatpush.msra.mxu0 0.0
    %750 = vmatpush.msra.mxu0 0.0
    %751 = vmatpush.msra.mxu0 0.0
    %752 = vmatpush.msra.mxu0 0.0
    %753 = vmatpush.msra.mxu0 %v302
    %754 = vmatpush.msra.mxu0 %v301
    %755 = vmatmul.f32.gmra.mxu0 %v737
    %v756 = vpop.f32.mrf.mxu0
    %v757 = vadd.f32 0.0, %v756
    %758 = vdwg.mxu0
    %v759 = vadd.f32 %v236, %v732
    %v760 = vxor.u32 %v759, 2147483648
    %v761 = vmul.f32 %v760, 1.442695
    %v762 = vpow.pop %v761
    %v763 = vadd.f32 %v762, 1.0
    %v764 = vrcp.pop %v763
    %v765 = vmul.f32 %v763, %v764
    %v766 = vsub.f32 1.0, %v765
    %v767 = vmul.f32 %v764, %v766
    %v768 = vadd.f32 %v764, %v767
    %vm769 = vweird.f32 %v763
    %vm770 = vweird.f32 %v764
    %vm771 = vmor %vm769, %vm770
    %v772 = vsel %vm771, %v764, %v768
    %v773 = vand.u32 2147483647, %v763
    %vm774 = vcmp.eq.f32.partialorder %v773, 8.507059e+37
    %v775 = vand.u32 %v763, 2147483648
    %v776 = vor.u32 1.1754944e-38, %v775
    %v777 = vsel %vm774, %v776, %v772
    %v778 = vmul.f32 1.0, %v777
    %v779 = vadd.f32 %v732, %v374
    %781 = vrot.lane.b32.xlu0 %v779, 96
    %v782 = vpop.permute.xlu0 %781
    %v784 = vmul.f32 %v778, %v782
    %786 = vrot.lane.b32.xlu0 %v784, 32
    %v787 = vpop.permute.xlu0 %786
    %v789 = vadd.f32 %v236, %v787
    %v790 = vtanh.pop %v789
    %v791 = vsub.f32 1.0, %v778
    %793 = vrot.lane.b32.xlu0 %v790, 112
    %v794 = vpop.permute.xlu0 %793
    %v796 = vmul.f32 %v791, %v794
    %v797 = vmul.f32 %v778, %v665
    %v798 = vadd.f32 %v796, %v797
    %v799 = vadd.f32 %v288, %v757
    %v800 = vxor.u32 %v799, 2147483648
    %v801 = vmul.f32 %v800, 1.442695
    %v802 = vpow.pop %v801
    %v803 = vadd.f32 %v802, 1.0
    %v804 = vrcp.pop %v803
    %v805 = vmul.f32 %v803, %v804
    %v806 = vsub.f32 1.0, %v805
    %v807 = vmul.f32 %v804, %v806
    %v808 = vadd.f32 %v804, %v807
    %vm809 = vweird.f32 %v803
    %vm810 = vweird.f32 %v804
    %vm811 = vmor %vm809, %vm810
    %v812 = vsel %vm811, %v804, %v808
    %v813 = vand.u32 2147483647, %v803
    %vm814 = vcmp.eq.f32.partialorder %v813, 8.507059e+37
    %v815 = vand.u32 %v803, 2147483648
    %v816 = vor.u32 1.1754944e-38, %v815
    %v817 = vsel %vm814, %v816, %v812
    %v818 = vmul.f32 1.0, %v817
    %v819 = vadd.f32 %v757, %v417
    %821 = vrot.lane.b32.xlu0 %v819, 96
    %v822 = vpop.permute.xlu0 %821
    %v824 = vmul.f32 %v818, %v822
    %826 = vrot.lane.b32.xlu0 %v824, 32
    %v827 = vpop.permute.xlu0 %826
    %v829 = vadd.f32 %v288, %v827
    %v830 = vtanh.pop %v829
    %v831 = vsub.f32 1.0, %v818
    %833 = vrot.lane.b32.xlu0 %v830, 112
    %v834 = vpop.permute.xlu0 %833
    %v836 = vmul.f32 %v831, %v834
    %v837 = vmul.f32 %v818, %v705
    %v838 = vadd.f32 %v836, %v837
    %840 = vrot.lane.b32.xlu0 %v798, 112
    %v841 = vpop.permute.xlu0 %840
    %843 = vst.msk [vmem:[#allocation2 + $0x18] sm:$0xff] %vm309, %v841
    %844 = vst.msk [vmem:[#allocation2 + $0x20] sm:$0xff] %vm444, %v838
    %v845 = vsel %vm309, %v841, 0
    %847 = vmatpush.msra.mxu0 0.0
    %848 = vmatpush.msra.mxu0 0.0
    %849 = vmatpush.msra.mxu0 0.0
    %850 = vmatpush.msra.mxu0 0.0
    %851 = vmatpush.msra.mxu0 0.0
    %852 = vmatpush.msra.mxu0 0.0
    %853 = vmatpush.msra.mxu0 0.0
    %854 = vmatpush.msra.mxu0 0.0
    %855 = vmatpush.msra.mxu0 0.0
    %856 = vmatpush.msra.mxu0 0.0
    %857 = vmatpush.msra.mxu0 0.0
    %858 = vmatpush.msra.mxu0 0.0
    %859 = vmatpush.msra.mxu0 0.0
    %860 = vmatpush.msra.mxu0 0.0
    %861 = vmatpush.msra.mxu0 %v300
    %862 = vmatpush.msra.mxu0 %v299
    %863 = vmatmul.f32.gmra.mxu0 %v845
    %v864 = vpop.f32.mrf.mxu0
    %v865 = vadd.f32 0.0, %v864
    %866 = vdwg.mxu0
    %868 = vrot.lane.b32.xlu0 %v838, 112
    %v869 = vpop.permute.xlu0 %868
    %v870 = vsel %vm309, %v869, 0
    %872 = vmatpush.msra.mxu0 0.0
    %873 = vmatpush.msra.mxu0 0.0
    %874 = vmatpush.msra.mxu0 0.0
    %875 = vmatpush.msra.mxu0 0.0
    %876 = vmatpush.msra.mxu0 0.0
    %877 = vmatpush.msra.mxu0 0.0
    %878 = vmatpush.msra.mxu0 0.0
    %879 = vmatpush.msra.mxu0 0.0
    %880 = vmatpush.msra.mxu0 0.0
    %881 = vmatpush.msra.mxu0 0.0
    %882 = vmatpush.msra.mxu0 0.0
    %883 = vmatpush.msra.mxu0 0.0
    %884 = vmatpush.msra.mxu0 0.0
    %885 = vmatpush.msra.mxu0 0.0
    %886 = vmatpush.msra.mxu0 %v302
    %887 = vmatpush.msra.mxu0 %v301
    %888 = vmatmul.f32.gmra.mxu0 %v870
    %v889 = vpop.f32.mrf.mxu0
    %v890 = vadd.f32 0.0, %v889
    %891 = vdwg.mxu0
    %v892 = vadd.f32 %v239, %v865
    %v893 = vxor.u32 %v892, 2147483648
    %v894 = vmul.f32 %v893, 1.442695
    %v895 = vpow.pop %v894
    %v896 = vadd.f32 %v895, 1.0
    %v897 = vrcp.pop %v896
    %v898 = vmul.f32 %v896, %v897
    %v899 = vsub.f32 1.0, %v898
    %v900 = vmul.f32 %v897, %v899
    %v901 = vadd.f32 %v897, %v900
    %vm902 = vweird.f32 %v896
    %vm903 = vweird.f32 %v897
    %vm904 = vmor %vm902, %vm903
    %v905 = vsel %vm904, %v897, %v901
    %v906 = vand.u32 2147483647, %v896
    %vm907 = vcmp.eq.f32.partialorder %v906, 8.507059e+37
    %v908 = vand.u32 %v896, 2147483648
    %v909 = vor.u32 1.1754944e-38, %v908
    %v910 = vsel %vm907, %v909, %v905
    %v911 = vmul.f32 1.0, %v910
    %v912 = vadd.f32 %v865, %v374
    %914 = vrot.lane.b32.xlu0 %v912, 96
    %v915 = vpop.permute.xlu0 %914
    %v917 = vmul.f32 %v911, %v915
    %919 = vrot.lane.b32.xlu0 %v917, 32
    %v920 = vpop.permute.xlu0 %919
    %v922 = vadd.f32 %v239, %v920
    %v923 = vtanh.pop %v922
    %v924 = vsub.f32 1.0, %v911
    %926 = vrot.lane.b32.xlu0 %v923, 112
    %v927 = vpop.permute.xlu0 %926
    %v929 = vmul.f32 %v924, %v927
    %v930 = vmul.f32 %v911, %v798
    %v931 = vadd.f32 %v929, %v930
    %v932 = vadd.f32 %v285, %v890
    %v933 = vxor.u32 %v932, 2147483648
    %v934 = vmul.f32 %v933, 1.442695
    %v935 = vpow.pop %v934
    %v936 = vadd.f32 %v935, 1.0
    %v937 = vrcp.pop %v936
    %v938 = vmul.f32 %v936, %v937
    %v939 = vsub.f32 1.0, %v938
    %v940 = vmul.f32 %v937, %v939
    %v941 = vadd.f32 %v937, %v940
    %vm942 = vweird.f32 %v936
    %vm943 = vweird.f32 %v937
    %vm944 = vmor %vm942, %vm943
    %v945 = vsel %vm944, %v937, %v941
    %v946 = vand.u32 2147483647, %v936
    %vm947 = vcmp.eq.f32.partialorder %v946, 8.507059e+37
    %v948 = vand.u32 %v936, 2147483648
    %v949 = vor.u32 1.1754944e-38, %v948
    %v950 = vsel %vm947, %v949, %v945
    %v951 = vmul.f32 1.0, %v950
    %v952 = vadd.f32 %v890, %v417
    %954 = vrot.lane.b32.xlu0 %v952, 96
    %v955 = vpop.permute.xlu0 %954
    %v957 = vmul.f32 %v951, %v955
    %959 = vrot.lane.b32.xlu0 %v957, 32
    %v960 = vpop.permute.xlu0 %959
    %v962 = vadd.f32 %v285, %v960
    %v963 = vtanh.pop %v962
    %v964 = vsub.f32 1.0, %v951
    %966 = vrot.lane.b32.xlu0 %v963, 112
    %v967 = vpop.permute.xlu0 %966
    %v969 = vmul.f32 %v964, %v967
    %v970 = vmul.f32 %v951, %v838
    %v971 = vadd.f32 %v969, %v970
    %973 = vrot.lane.b32.xlu0 %v931, 112
    %v974 = vpop.permute.xlu0 %973
    %976 = vst.msk [vmem:[#allocation2 + $0x20] sm:$0xff] %vm309, %v974
    %977 = vst.msk [vmem:[#allocation2 + $0x18] sm:$0xff] %vm444, %v971
    %v978 = vsel %vm309, %v974, 0
    %980 = vmatpush.msra.mxu0 0.0
    %981 = vmatpush.msra.mxu0 0.0
    %982 = vmatpush.msra.mxu0 0.0
    %983 = vmatpush.msra.mxu0 0.0
    %984 = vmatpush.msra.mxu0 0.0
    %985 = vmatpush.msra.mxu0 0.0
    %986 = vmatpush.msra.mxu0 0.0
    %987 = vmatpush.msra.mxu0 0.0
    %988 = vmatpush.msra.mxu0 0.0
    %989 = vmatpush.msra.mxu0 0.0
    %990 = vmatpush.msra.mxu0 0.0
    %991 = vmatpush.msra.mxu0 0.0
    %992 = vmatpush.msra.mxu0 0.0
    %993 = vmatpush.msra.mxu0 0.0
    %994 = vmatpush.msra.mxu0 %v300
    %995 = vmatpush.msra.mxu0 %v299
    %996 = vmatmul.f32.gmra.mxu0 %v978
    %v997 = vpop.f32.mrf.mxu0
    %v998 = vadd.f32 0.0, %v997
    %999 = vdwg.mxu0
    %1001 = vrot.lane.b32.xlu0 %v971, 112
    %v1002 = vpop.permute.xlu0 %1001
    %v1003 = vsel %vm309, %v1002, 0
    %1005 = vmatpush.msra.mxu0 0.0
    %1006 = vmatpush.msra.mxu0 0.0
    %1007 = vmatpush.msra.mxu0 0.0
    %1008 = vmatpush.msra.mxu0 0.0
    %1009 = vmatpush.msra.mxu0 0.0
    %1010 = vmatpush.msra.mxu0 0.0
    %1011 = vmatpush.msra.mxu0 0.0
    %1012 = vmatpush.msra.mxu0 0.0
    %1013 = vmatpush.msra.mxu0 0.0
    %1014 = vmatpush.msra.mxu0 0.0
    %1015 = vmatpush.msra.mxu0 0.0
    %1016 = vmatpush.msra.mxu0 0.0
    %1017 = vmatpush.msra.mxu0 0.0
    %1018 = vmatpush.msra.mxu0 0.0
    %1019 = vmatpush.msra.mxu0 %v302
    %1020 = vmatpush.msra.mxu0 %v301
    %1021 = vmatmul.f32.gmra.mxu0 %v1003
    %v1022 = vpop.f32.mrf.mxu0
    %v1023 = vadd.f32 0.0, %v1022
    %1024 = vdwg.mxu0
    %v1025 = vadd.f32 %v242, %v998
    %v1026 = vxor.u32 %v1025, 2147483648
    %v1027 = vmul.f32 %v1026, 1.442695
    %v1028 = vpow.pop %v1027
    %v1029 = vadd.f32 %v1028, 1.0
    %v1030 = vrcp.pop %v1029
    %v1031 = vmul.f32 %v1029, %v1030
    %v1032 = vsub.f32 1.0, %v1031
    %v1033 = vmul.f32 %v1030, %v1032
    %v1034 = vadd.f32 %v1030, %v1033
    %vm1035 = vweird.f32 %v1029
    %vm1036 = vweird.f32 %v1030
    %vm1037 = vmor %vm1035, %vm1036
    %v1038 = vsel %vm1037, %v1030, %v1034
    %v1039 = vand.u32 2147483647, %v1029
    %vm1040 = vcmp.eq.f32.partialorder %v1039, 8.507059e+37
    %v1041 = vand.u32 %v1029, 2147483648
    %v1042 = vor.u32 1.1754944e-38, %v1041
    %v1043 = vsel %vm1040, %v1042, %v1038
    %v1044 = vmul.f32 1.0, %v1043
    %v1045 = vadd.f32 %v998, %v374
    %1047 = vrot.lane.b32.xlu0 %v1045, 96
    %v1048 = vpop.permute.xlu0 %1047
    %v1050 = vmul.f32 %v1044, %v1048
    %1052 = vrot.lane.b32.xlu0 %v1050, 32
    %v1053 = vpop.permute.xlu0 %1052
    %v1055 = vadd.f32 %v242, %v1053
    %v1056 = vtanh.pop %v1055
    %v1057 = vsub.f32 1.0, %v1044
    %1059 = vrot.lane.b32.xlu0 %v1056, 112
    %v1060 = vpop.permute.xlu0 %1059
    %v1062 = vmul.f32 %v1057, %v1060
    %v1063 = vmul.f32 %v1044, %v931
    %v1064 = vadd.f32 %v1062, %v1063
    %v1065 = vadd.f32 %v282, %v1023
    %v1066 = vxor.u32 %v1065, 2147483648
    %v1067 = vmul.f32 %v1066, 1.442695
    %v1068 = vpow.pop %v1067
    %v1069 = vadd.f32 %v1068, 1.0
    %v1070 = vrcp.pop %v1069
    %v1071 = vmul.f32 %v1069, %v1070
    %v1072 = vsub.f32 1.0, %v1071
    %v1073 = vmul.f32 %v1070, %v1072
    %v1074 = vadd.f32 %v1070, %v1073
    %vm1075 = vweird.f32 %v1069
    %vm1076 = vweird.f32 %v1070
    %vm1077 = vmor %vm1075, %vm1076
    %v1078 = vsel %vm1077, %v1070, %v1074
    %v1079 = vand.u32 2147483647, %v1069
    %vm1080 = vcmp.eq.f32.partialorder %v1079, 8.507059e+37
    %v1081 = vand.u32 %v1069, 2147483648
    %v1082 = vor.u32 1.1754944e-38, %v1081
    %v1083 = vsel %vm1080, %v1082, %v1078
    %v1084 = vmul.f32 1.0, %v1083
    %v1085 = vadd.f32 %v1023, %v417
    %1087 = vrot.lane.b32.xlu0 %v1085, 96
    %v1088 = vpop.permute.xlu0 %1087
    %v1090 = vmul.f32 %v1084, %v1088
    %1092 = vrot.lane.b32.xlu0 %v1090, 32
    %v1093 = vpop.permute.xlu0 %1092
    %v1095 = vadd.f32 %v282, %v1093
    %v1096 = vtanh.pop %v1095
    %v1097 = vsub.f32 1.0, %v1084
    %1099 = vrot.lane.b32.xlu0 %v1096, 112
    %v1100 = vpop.permute.xlu0 %1099
    %v1102 = vmul.f32 %v1097, %v1100
    %v1103 = vmul.f32 %v1084, %v971
    %v1104 = vadd.f32 %v1102, %v1103
    %1106 = vrot.lane.b32.xlu0 %v1064, 112
    %v1107 = vpop.permute.xlu0 %1106
    %1109 = vst.msk [vmem:[#allocation2 + $0x28] sm:$0xff] %vm309, %v1107
    %1110 = vst.msk [vmem:[#allocation2 + $0x10] sm:$0xff] %vm444, %v1104
    %v1111 = vsel %vm309, %v1107, 0
    %1113 = vmatpush.msra.mxu0 0.0
    %1114 = vmatpush.msra.mxu0 0.0
    %1115 = vmatpush.msra.mxu0 0.0
    %1116 = vmatpush.msra.mxu0 0.0
    %1117 = vmatpush.msra.mxu0 0.0
    %1118 = vmatpush.msra.mxu0 0.0
    %1119 = vmatpush.msra.mxu0 0.0
    %1120 = vmatpush.msra.mxu0 0.0
    %1121 = vmatpush.msra.mxu0 0.0
    %1122 = vmatpush.msra.mxu0 0.0
    %1123 = vmatpush.msra.mxu0 0.0
    %1124 = vmatpush.msra.mxu0 0.0
    %1125 = vmatpush.msra.mxu0 0.0
    %1126 = vmatpush.msra.mxu0 0.0
    %1127 = vmatpush.msra.mxu0 %v300
    %1128 = vmatpush.msra.mxu0 %v299
    %1129 = vmatmul.f32.gmra.mxu0 %v1111
    %v1130 = vpop.f32.mrf.mxu0
    %v1131 = vadd.f32 0.0, %v1130
    %1132 = vdwg.mxu0
    %1134 = vrot.lane.b32.xlu0 %v1104, 112
    %v1135 = vpop.permute.xlu0 %1134
    %v1136 = vsel %vm309, %v1135, 0
    %1138 = vmatpush.msra.mxu0 0.0
    %1139 = vmatpush.msra.mxu0 0.0
    %1140 = vmatpush.msra.mxu0 0.0
    %1141 = vmatpush.msra.mxu0 0.0
    %1142 = vmatpush.msra.mxu0 0.0
    %1143 = vmatpush.msra.mxu0 0.0
    %1144 = vmatpush.msra.mxu0 0.0
    %1145 = vmatpush.msra.mxu0 0.0
    %1146 = vmatpush.msra.mxu0 0.0
    %1147 = vmatpush.msra.mxu0 0.0
    %1148 = vmatpush.msra.mxu0 0.0
    %1149 = vmatpush.msra.mxu0 0.0
    %1150 = vmatpush.msra.mxu0 0.0
    %1151 = vmatpush.msra.mxu0 0.0
    %1152 = vmatpush.msra.mxu0 %v302
    %1153 = vmatpush.msra.mxu0 %v301
    %1154 = vmatmul.f32.gmra.mxu0 %v1136
    %v1155 = vpop.f32.mrf.mxu0
    %v1156 = vadd.f32 0.0, %v1155
    %1157 = vdwg.mxu0
    %v1158 = vadd.f32 %v245, %v1131
    %v1159 = vxor.u32 %v1158, 2147483648
    %v1160 = vmul.f32 %v1159, 1.442695
    %v1161 = vpow.pop %v1160
    %v1162 = vadd.f32 %v1161, 1.0
    %v1163 = vrcp.pop %v1162
    %v1164 = vmul.f32 %v1162, %v1163
    %v1165 = vsub.f32 1.0, %v1164
    %v1166 = vmul.f32 %v1163, %v1165
    %v1167 = vadd.f32 %v1163, %v1166
    %vm1168 = vweird.f32 %v1162
    %vm1169 = vweird.f32 %v1163
    %vm1170 = vmor %vm1168, %vm1169
    %v1171 = vsel %vm1170, %v1163, %v1167
    %v1172 = vand.u32 2147483647, %v1162
    %vm1173 = vcmp.eq.f32.partialorder %v1172, 8.507059e+37
    %v1174 = vand.u32 %v1162, 2147483648
    %v1175 = vor.u32 1.1754944e-38, %v1174
    %v1176 = vsel %vm1173, %v1175, %v1171
    %v1177 = vmul.f32 1.0, %v1176
    %v1178 = vadd.f32 %v1131, %v374
    %1180 = vrot.lane.b32.xlu0 %v1178, 96
    %v1181 = vpop.permute.xlu0 %1180
    %v1183 = vmul.f32 %v1177, %v1181
    %1185 = vrot.lane.b32.xlu0 %v1183, 32
    %v1186 = vpop.permute.xlu0 %1185
    %v1188 = vadd.f32 %v245, %v1186
    %v1189 = vtanh.pop %v1188
    %v1190 = vsub.f32 1.0, %v1177
    %1192 = vrot.lane.b32.xlu0 %v1189, 112
    %v1193 = vpop.permute.xlu0 %1192
    %v1195 = vmul.f32 %v1190, %v1193
    %v1196 = vmul.f32 %v1177, %v1064
    %v1197 = vadd.f32 %v1195, %v1196
    %v1198 = vadd.f32 %v279, %v1156
    %v1199 = vxor.u32 %v1198, 2147483648
    %v1200 = vmul.f32 %v1199, 1.442695
    %v1201 = vpow.pop %v1200
    %v1202 = vadd.f32 %v1201, 1.0
    %v1203 = vrcp.pop %v1202
    %v1204 = vmul.f32 %v1202, %v1203
    %v1205 = vsub.f32 1.0, %v1204
    %v1206 = vmul.f32 %v1203, %v1205
    %v1207 = vadd.f32 %v1203, %v1206
    %vm1208 = vweird.f32 %v1202
    %vm1209 = vweird.f32 %v1203
    %vm1210 = vmor %vm1208, %vm1209
    %v1211 = vsel %vm1210, %v1203, %v1207
    %v1212 = vand.u32 2147483647, %v1202
    %vm1213 = vcmp.eq.f32.partialorder %v1212, 8.507059e+37
    %v1214 = vand.u32 %v1202, 2147483648
    %v1215 = vor.u32 1.1754944e-38, %v1214
    %v1216 = vsel %vm1213, %v1215, %v1211
    %v1217 = vmul.f32 1.0, %v1216
    %v1218 = vadd.f32 %v1156, %v417
    %1220 = vrot.lane.b32.xlu0 %v1218, 96
    %v1221 = vpop.permute.xlu0 %1220
    %v1223 = vmul.f32 %v1217, %v1221
    %1225 = vrot.lane.b32.xlu0 %v1223, 32
    %v1226 = vpop.permute.xlu0 %1225
    %v1228 = vadd.f32 %v279, %v1226
    %v1229 = vtanh.pop %v1228
    %v1230 = vsub.f32 1.0, %v1217
    %1232 = vrot.lane.b32.xlu0 %v1229, 112
    %v1233 = vpop.permute.xlu0 %1232
    %v1235 = vmul.f32 %v1230, %v1233
    %v1236 = vmul.f32 %v1217, %v1104
    %v1237 = vadd.f32 %v1235, %v1236
    %1239 = vrot.lane.b32.xlu0 %v1197, 112
    %v1240 = vpop.permute.xlu0 %1239
    %1242 = vst.msk [vmem:[#allocation2 + $0x30] sm:$0xff] %vm309, %v1240
    %1243 = vst.msk [vmem:[#allocation2 + $0x8] sm:$0xff] %vm444, %v1237
    %v1244 = vsel %vm309, %v1240, 0
    %1246 = vmatpush.msra.mxu0 0.0
    %1247 = vmatpush.msra.mxu0 0.0
    %1248 = vmatpush.msra.mxu0 0.0
    %1249 = vmatpush.msra.mxu0 0.0
    %1250 = vmatpush.msra.mxu0 0.0
    %1251 = vmatpush.msra.mxu0 0.0
    %1252 = vmatpush.msra.mxu0 0.0
    %1253 = vmatpush.msra.mxu0 0.0
    %1254 = vmatpush.msra.mxu0 0.0
    %1255 = vmatpush.msra.mxu0 0.0
    %1256 = vmatpush.msra.mxu0 0.0
    %1257 = vmatpush.msra.mxu0 0.0
    %1258 = vmatpush.msra.mxu0 0.0
    %1259 = vmatpush.msra.mxu0 0.0
    %1260 = vmatpush.msra.mxu0 %v300
    %1261 = vmatpush.msra.mxu0 %v299
    %1262 = vmatmul.f32.gmra.mxu0 %v1244
    %v1263 = vpop.f32.mrf.mxu0
    %v1264 = vadd.f32 0.0, %v1263
    %1265 = vdwg.mxu0
    %1267 = vrot.lane.b32.xlu0 %v1237, 112
    %v1268 = vpop.permute.xlu0 %1267
    %v1269 = vsel %vm309, %v1268, 0
    %1271 = vmatpush.msra.mxu0 0.0
    %1272 = vmatpush.msra.mxu0 0.0
    %1273 = vmatpush.msra.mxu0 0.0
    %1274 = vmatpush.msra.mxu0 0.0
    %1275 = vmatpush.msra.mxu0 0.0
    %1276 = vmatpush.msra.mxu0 0.0
    %1277 = vmatpush.msra.mxu0 0.0
    %1278 = vmatpush.msra.mxu0 0.0
    %1279 = vmatpush.msra.mxu0 0.0
    %1280 = vmatpush.msra.mxu0 0.0
    %1281 = vmatpush.msra.mxu0 0.0
    %1282 = vmatpush.msra.mxu0 0.0
    %1283 = vmatpush.msra.mxu0 0.0
    %1284 = vmatpush.msra.mxu0 0.0
    %1285 = vmatpush.msra.mxu0 %v302
    %1286 = vmatpush.msra.mxu0 %v301
    %1287 = vmatmul.f32.gmra.mxu0 %v1269
    %v1288 = vpop.f32.mrf.mxu0
    %v1289 = vadd.f32 0.0, %v1288
    %1290 = vdwg.mxu0
    %v1291 = vadd.f32 %v248, %v1264
    %v1292 = vxor.u32 %v1291, 2147483648
    %v1293 = vmul.f32 %v1292, 1.442695
    %v1294 = vpow.pop %v1293
    %v1295 = vadd.f32 %v1294, 1.0
    %v1296 = vrcp.pop %v1295
    %v1297 = vmul.f32 %v1295, %v1296
    %v1298 = vsub.f32 1.0, %v1297
    %v1299 = vmul.f32 %v1296, %v1298
    %v1300 = vadd.f32 %v1296, %v1299
    %vm1301 = vweird.f32 %v1295
    %vm1302 = vweird.f32 %v1296
    %vm1303 = vmor %vm1301, %vm1302
    %v1304 = vsel %vm1303, %v1296, %v1300
    %v1305 = vand.u32 2147483647, %v1295
    %vm1306 = vcmp.eq.f32.partialorder %v1305, 8.507059e+37
    %v1307 = vand.u32 %v1295, 2147483648
    %v1308 = vor.u32 1.1754944e-38, %v1307
    %v1309 = vsel %vm1306, %v1308, %v1304
    %v1310 = vmul.f32 1.0, %v1309
    %v1311 = vadd.f32 %v1264, %v374
    %1313 = vrot.lane.b32.xlu0 %v1311, 96
    %v1314 = vpop.permute.xlu0 %1313
    %v1316 = vmul.f32 %v1310, %v1314
    %1318 = vrot.lane.b32.xlu0 %v1316, 32
    %v1319 = vpop.permute.xlu0 %1318
    %v1321 = vadd.f32 %v248, %v1319
    %v1322 = vtanh.pop %v1321
    %v1323 = vsub.f32 1.0, %v1310
    %1325 = vrot.lane.b32.xlu0 %v1322, 112
    %v1326 = vpop.permute.xlu0 %1325
    %v1328 = vmul.f32 %v1323, %v1326
    %v1329 = vmul.f32 %v1310, %v1197
    %v1330 = vadd.f32 %v1328, %v1329
    %v1331 = vadd.f32 %v276, %v1289
    %v1332 = vxor.u32 %v1331, 2147483648
    %v1333 = vmul.f32 %v1332, 1.442695
    %v1334 = vpow.pop %v1333
    %v1335 = vadd.f32 %v1334, 1.0
    %v1336 = vrcp.pop %v1335
    %v1337 = vmul.f32 %v1335, %v1336
    %v1338 = vsub.f32 1.0, %v1337
    %v1339 = vmul.f32 %v1336, %v1338
    %v1340 = vadd.f32 %v1336, %v1339
    %vm1341 = vweird.f32 %v1335
    %vm1342 = vweird.f32 %v1336
    %vm1343 = vmor %vm1341, %vm1342
    %v1344 = vsel %vm1343, %v1336, %v1340
    %v1345 = vand.u32 2147483647, %v1335
    %vm1346 = vcmp.eq.f32.partialorder %v1345, 8.507059e+37
    %v1347 = vand.u32 %v1335, 2147483648
    %v1348 = vor.u32 1.1754944e-38, %v1347
    %v1349 = vsel %vm1346, %v1348, %v1344
    %v1350 = vmul.f32 1.0, %v1349
    %v1351 = vadd.f32 %v1289, %v417
    %1353 = vrot.lane.b32.xlu0 %v1351, 96
    %v1354 = vpop.permute.xlu0 %1353
    %v1356 = vmul.f32 %v1350, %v1354
    %1358 = vrot.lane.b32.xlu0 %v1356, 32
    %v1359 = vpop.permute.xlu0 %1358
    %v1361 = vadd.f32 %v276, %v1359
    %v1362 = vtanh.pop %v1361
    %v1363 = vsub.f32 1.0, %v1350
    %1365 = vrot.lane.b32.xlu0 %v1362, 112
    %v1366 = vpop.permute.xlu0 %1365
    %v1368 = vmul.f32 %v1363, %v1366
    %v1369 = vmul.f32 %v1350, %v1237
    %v1370 = vadd.f32 %v1368, %v1369
    %1372 = vrot.lane.b32.xlu0 %v1330, 112
    %v1373 = vpop.permute.xlu0 %1372
    %1375 = vst.msk [vmem:[#allocation2 + $0x38] sm:$0xff] %vm309, %v1373
    %1376 = vst.msk [vmem:[#allocation2] sm:$0xff] %vm444, %v1370
    %v1377 = vld [vmem:[#allocation2] sm:$0xff]
    %v1378 = vld [vmem:[#allocation2 + $0x8] sm:$0xff]
    %v1379 = vld [vmem:[#allocation2 + $0x10] sm:$0xff]
    %v1380 = vld [vmem:[#allocation2 + $0x18] sm:$0xff]
    %v1381 = vld [vmem:[#allocation2 + $0x20] sm:$0xff]
    %v1382 = vld [vmem:[#allocation2 + $0x28] sm:$0xff]
    %v1383 = vld [vmem:[#allocation2 + $0x30] sm:$0xff]
    %v1384 = vld [vmem:[#allocation2 + $0x38] sm:$0xff]
    %v1385 = vld [vmem:[%s9] sm:$0xff]
    %v1386 = vld [vmem:[%s9 + $0x8] sm:$0xff]
    %v1387 = vld [vmem:[%s9 + $0x10] sm:$0xff]
    %v1388 = vld [vmem:[%s9 + $0x18] sm:$0xff]
    %v1389 = vld [vmem:[%s11] sm:$0x1]
    %v1391 = vperm.slane %v1389, 0
    %vm1393 = vcmask 261120
    %v1395 = vsel %vm1393, %v1377, 0
    %v1398 = vsel %vm1393, %v1378, 0
    %v1401 = vsel %vm1393, %v1379, 0
    %v1404 = vsel %vm1393, %v1380, 0
    %v1407 = vsel %vm1393, %v1381, 0
    %v1410 = vsel %vm1393, %v1382, 0
    %v1413 = vsel %vm1393, %v1383, 0
    %v1416 = vsel %vm1393, %v1384, 0
    %1418 = vmatpush.msra.mxu0 0.0
    %1419 = vmatpush.msra.mxu0 0.0
    %1420 = vmatpush.msra.mxu0 0.0
    %1421 = vmatpush.msra.mxu0 0.0
    %1422 = vmatpush.msra.mxu0 0.0
    %1423 = vmatpush.msra.mxu0 0.0
    %1424 = vmatpush.msra.mxu0 0.0
    %1425 = vmatpush.msra.mxu0 0.0
    %1426 = vmatpush.msra.mxu0 0.0
    %1427 = vmatpush.msra.mxu0 0.0
    %1428 = vmatpush.msra.mxu0 0.0
    %1429 = vmatpush.msra.mxu0 0.0
    %1430 = vmatpush.msra.mxu0 %v1388
    %1431 = vmatpush.msra.mxu0 %v1387
    %1432 = vmatpush.msra.mxu0 %v1386
    %1433 = vmatpush.msra.mxu0 %v1385
    %1434 = vmatmul.f32.gmra.mxu0 %v1395
    %v1435 = vpop.f32.mrf.mxu0
    %v1436 = vadd.f32 %v1391, %v1435
    %1437 = vmatmul.f32.gmra.mxu0 %v1398
    %v1438 = vpop.f32.mrf.mxu0
    %v1439 = vadd.f32 %v1391, %v1438
    %1440 = vmatmul.f32.gmra.mxu0 %v1401
    %v1441 = vpop.f32.mrf.mxu0
    %v1442 = vadd.f32 %v1391, %v1441
    %1443 = vmatmul.f32.gmra.mxu0 %v1404
    %v1444 = vpop.f32.mrf.mxu0
    %v1445 = vadd.f32 %v1391, %v1444
    %1446 = vmatmul.f32.gmra.mxu0 %v1407
    %v1447 = vpop.f32.mrf.mxu0
    %v1448 = vadd.f32 %v1391, %v1447
    %1449 = vmatmul.f32.gmra.mxu0 %v1410
    %v1450 = vpop.f32.mrf.mxu0
    %v1451 = vadd.f32 %v1391, %v1450
    %1452 = vmatmul.f32.gmra.mxu0 %v1413
    %v1453 = vpop.f32.mrf.mxu0
    %v1454 = vadd.f32 %v1391, %v1453
    %1455 = vmatmul.f32.gmra.mxu0 %v1416
    %v1456 = vpop.f32.mrf.mxu0
    %v1457 = vadd.f32 %v1391, %v1456
    %1458 = vdwg.mxu0
    %v1459 = vld [vmem:[%s13] sm:$0xff]
    %v1460 = vld [vmem:[%s13 + $0x8] sm:$0xff]
    %v1461 = vld [vmem:[%s13 + $0x10] sm:$0xff]
    %v1462 = vld [vmem:[%s13 + $0x18] sm:$0xff]
    %v1463 = vld [vmem:[#allocation13] sm:$0x1]
    %v1465 = vperm.slane %v1463, 0
    %1467 = vmatpush.msra.mxu0 0.0
    %1468 = vmatpush.msra.mxu0 0.0
    %1469 = vmatpush.msra.mxu0 0.0
    %1470 = vmatpush.msra.mxu0 0.0
    %1471 = vmatpush.msra.mxu0 0.0
    %1472 = vmatpush.msra.mxu0 0.0
    %1473 = vmatpush.msra.mxu0 0.0
    %1474 = vmatpush.msra.mxu0 0.0
    %1475 = vmatpush.msra.mxu0 0.0
    %1476 = vmatpush.msra.mxu0 0.0
    %1477 = vmatpush.msra.mxu0 0.0
    %1478 = vmatpush.msra.mxu0 0.0
    %1479 = vmatpush.msra.mxu0 %v1462
    %1480 = vmatpush.msra.mxu0 %v1461
    %1481 = vmatpush.msra.mxu0 %v1460
    %1482 = vmatpush.msra.mxu0 %v1459
    %1483 = vmatmul.f32.gmra.mxu0 %v1395
    %v1484 = vpop.f32.mrf.mxu0
    %v1485 = vadd.f32 %v1465, %v1484
    %1486 = vmatmul.f32.gmra.mxu0 %v1398
    %v1487 = vpop.f32.mrf.mxu0
    %v1488 = vadd.f32 %v1465, %v1487
    %1489 = vmatmul.f32.gmra.mxu0 %v1401
    %v1490 = vpop.f32.mrf.mxu0
    %v1491 = vadd.f32 %v1465, %v1490
    %1492 = vmatmul.f32.gmra.mxu0 %v1404
    %v1493 = vpop.f32.mrf.mxu0
    %v1494 = vadd.f32 %v1465, %v1493
    %1495 = vmatmul.f32.gmra.mxu0 %v1407
    %v1496 = vpop.f32.mrf.mxu0
    %v1497 = vadd.f32 %v1465, %v1496
    %1498 = vmatmul.f32.gmra.mxu0 %v1410
    %v1499 = vpop.f32.mrf.mxu0
    %v1500 = vadd.f32 %v1465, %v1499
    %1501 = vmatmul.f32.gmra.mxu0 %v1413
    %v1502 = vpop.f32.mrf.mxu0
    %v1503 = vadd.f32 %v1465, %v1502
    %1504 = vmatmul.f32.gmra.mxu0 %v1416
    %v1505 = vpop.f32.mrf.mxu0
    %v1506 = vadd.f32 %v1465, %v1505
    %1507 = vdwg.mxu0
    %v1508 = vld [vmem:[%s10] sm:$0xff]
    %v1509 = vld [vmem:[%s10 + $0x8] sm:$0xff]
    %v1510 = vld [vmem:[#allocation11] sm:$0xff]
    %v1511 = vld [vmem:[#allocation11 + $0x8] sm:$0xff]
    %v1512 = vld [vmem:[%s12] sm:$0x1]
    %v1514 = vperm.slane %v1512, 0
    %v1515 = vld [vmem:[#allocation14] sm:$0x1]
    %v1517 = vperm.slane %v1515, 0
    %1518 = vmatpush.msra.mxu0 0.0
    %1519 = vmatpush.msra.mxu0 0.0
    %1520 = vmatpush.msra.mxu0 0.0
    %1521 = vmatpush.msra.mxu0 0.0
    %1522 = vmatpush.msra.mxu0 0.0
    %1523 = vmatpush.msra.mxu0 0.0
    %1524 = vmatpush.msra.mxu0 0.0
    %1525 = vmatpush.msra.mxu0 0.0
    %1526 = vmatpush.msra.mxu0 0.0
    %1527 = vmatpush.msra.mxu0 0.0
    %1528 = vmatpush.msra.mxu0 0.0
    %1529 = vmatpush.msra.mxu0 0.0
    %1530 = vmatpush.msra.mxu0 0.0
    %1531 = vmatpush.msra.mxu0 0.0
    %1532 = vmatpush.msra.mxu0 %v1509
    %1533 = vmatpush.msra.mxu0 %v1508
    %1534 = vmatmul.f32.gmra.mxu0 %v311
    %v1535 = vpop.f32.mrf.mxu0
    %v1536 = vadd.f32 0.0, %v1535
    %1537 = vdwg.mxu0
    %1538 = vmatpush.msra.mxu0 0.0
    %1539 = vmatpush.msra.mxu0 0.0
    %1540 = vmatpush.msra.mxu0 0.0
    %1541 = vmatpush.msra.mxu0 0.0
    %1542 = vmatpush.msra.mxu0 0.0
    %1543 = vmatpush.msra.mxu0 0.0
    %1544 = vmatpush.msra.mxu0 0.0
    %1545 = vmatpush.msra.mxu0 0.0
    %1546 = vmatpush.msra.mxu0 0.0
    %1547 = vmatpush.msra.mxu0 0.0
    %1548 = vmatpush.msra.mxu0 0.0
    %1549 = vmatpush.msra.mxu0 0.0
    %1550 = vmatpush.msra.mxu0 0.0
    %1551 = vmatpush.msra.mxu0 0.0
    %1552 = vmatpush.msra.mxu0 %v1511
    %1553 = vmatpush.msra.mxu0 %v1510
    %1554 = vmatmul.f32.gmra.mxu0 %v311
    %v1555 = vpop.f32.mrf.mxu0
    %v1556 = vadd.f32 0.0, %v1555
    %1557 = vdwg.mxu0
    %v1558 = vadd.f32 %v1436, %v1536
    %v1559 = vxor.u32 %v1558, 2147483648
    %v1560 = vmul.f32 %v1559, 1.442695
    %v1561 = vpow.pop %v1560
    %v1562 = vadd.f32 %v1561, 1.0
    %v1563 = vrcp.pop %v1562
    %v1564 = vmul.f32 %v1562, %v1563
    %v1565 = vsub.f32 1.0, %v1564
    %v1566 = vmul.f32 %v1563, %v1565
    %v1567 = vadd.f32 %v1563, %v1566
    %vm1568 = vweird.f32 %v1562
    %vm1569 = vweird.f32 %v1563
    %vm1570 = vmor %vm1568, %vm1569
    %v1571 = vsel %vm1570, %v1563, %v1567
    %v1572 = vand.u32 2147483647, %v1562
    %vm1573 = vcmp.eq.f32.partialorder %v1572, 8.507059e+37
    %v1574 = vand.u32 %v1562, 2147483648
    %v1575 = vor.u32 1.1754944e-38, %v1574
    %v1576 = vsel %vm1573, %v1575, %v1571
    %v1577 = vmul.f32 1.0, %v1576
    %1578 = vrot.lane.b32.xlu0 %v1514, 32
    %v1579 = vpop.permute.xlu0 %1578
    %v1581 = vadd.f32 %v1536, %v1579
    %1583 = vrot.lane.b32.xlu0 %v1581, 96
    %v1584 = vpop.permute.xlu0 %1583
    %v1586 = vmul.f32 %v1577, %v1584
    %1588 = vrot.lane.b32.xlu0 %v1586, 32
    %v1589 = vpop.permute.xlu0 %1588
    %v1591 = vadd.f32 %v1436, %v1589
    %v1592 = vtanh.pop %v1591
    %v1593 = vsub.f32 1.0, %v1577
    %1595 = vrot.lane.b32.xlu0 %v1592, 112
    %v1596 = vpop.permute.xlu0 %1595
    %v1598 = vmul.f32 %v1593, %v1596
    %v1599 = vmul.f32 %v1577, 0.0
    %v1600 = vadd.f32 %v1598, %v1599
    %v1601 = vadd.f32 %v1506, %v1556
    %v1602 = vxor.u32 %v1601, 2147483648
    %v1603 = vmul.f32 %v1602, 1.442695
    %v1604 = vpow.pop %v1603
    %v1605 = vadd.f32 %v1604, 1.0
    %v1606 = vrcp.pop %v1605
    %v1607 = vmul.f32 %v1605, %v1606
    %v1608 = vsub.f32 1.0, %v1607
    %v1609 = vmul.f32 %v1606, %v1608
    %v1610 = vadd.f32 %v1606, %v1609
    %vm1611 = vweird.f32 %v1605
    %vm1612 = vweird.f32 %v1606
    %vm1613 = vmor %vm1611, %vm1612
    %v1614 = vsel %vm1613, %v1606, %v1610
    %v1615 = vand.u32 2147483647, %v1605
    %vm1616 = vcmp.eq.f32.partialorder %v1615, 8.507059e+37
    %v1617 = vand.u32 %v1605, 2147483648
    %v1618 = vor.u32 1.1754944e-38, %v1617
    %v1619 = vsel %vm1616, %v1618, %v1614
    %v1620 = vmul.f32 1.0, %v1619
    %1621 = vrot.lane.b32.xlu0 %v1517, 32
    %v1622 = vpop.permute.xlu0 %1621
    %v1624 = vadd.f32 %v1556, %v1622
    %1626 = vrot.lane.b32.xlu0 %v1624, 96
    %v1627 = vpop.permute.xlu0 %1626
    %v1629 = vmul.f32 %v1620, %v1627
    %1631 = vrot.lane.b32.xlu0 %v1629, 32
    %v1632 = vpop.permute.xlu0 %1631
    %v1634 = vadd.f32 %v1506, %v1632
    %v1635 = vtanh.pop %v1634
    %v1636 = vsub.f32 1.0, %v1620
    %1638 = vrot.lane.b32.xlu0 %v1635, 112
    %v1639 = vpop.permute.xlu0 %1638
    %v1641 = vmul.f32 %v1636, %v1639
    %v1642 = vmul.f32 %v1620, 0.0
    %v1643 = vadd.f32 %v1641, %v1642
    %1645 = vrot.lane.b32.xlu0 %v1600, 112
    %v1646 = vpop.permute.xlu0 %1645
    %v1647 = vsel %vm309, %v1646, 0
    %1649 = vmatpush.msra.mxu0 0.0
    %1650 = vmatpush.msra.mxu0 0.0
    %1651 = vmatpush.msra.mxu0 0.0
    %1652 = vmatpush.msra.mxu0 0.0
    %1653 = vmatpush.msra.mxu0 0.0
    %1654 = vmatpush.msra.mxu0 0.0
    %1655 = vmatpush.msra.mxu0 0.0
    %1656 = vmatpush.msra.mxu0 0.0
    %1657 = vmatpush.msra.mxu0 0.0
    %1658 = vmatpush.msra.mxu0 0.0
    %1659 = vmatpush.msra.mxu0 0.0
    %1660 = vmatpush.msra.mxu0 0.0
    %1661 = vmatpush.msra.mxu0 0.0
    %1662 = vmatpush.msra.mxu0 0.0
    %1663 = vmatpush.msra.mxu0 %v1509
    %1664 = vmatpush.msra.mxu0 %v1508
    %1665 = vmatmul.f32.gmra.mxu0 %v1647
    %v1666 = vpop.f32.mrf.mxu0
    %v1667 = vadd.f32 0.0, %v1666
    %1668 = vdwg.mxu0
    %1670 = vrot.lane.b32.xlu0 %v1643, 112
    %v1671 = vpop.permute.xlu0 %1670
    %v1672 = vsel %vm309, %v1671, 0
    %1674 = vmatpush.msra.mxu0 0.0
    %1675 = vmatpush.msra.mxu0 0.0
    %1676 = vmatpush.msra.mxu0 0.0
    %1677 = vmatpush.msra.mxu0 0.0
    %1678 = vmatpush.msra.mxu0 0.0
    %1679 = vmatpush.msra.mxu0 0.0
    %1680 = vmatpush.msra.mxu0 0.0
    %1681 = vmatpush.msra.mxu0 0.0
    %1682 = vmatpush.msra.mxu0 0.0
    %1683 = vmatpush.msra.mxu0 0.0
    %1684 = vmatpush.msra.mxu0 0.0
    %1685 = vmatpush.msra.mxu0 0.0
    %1686 = vmatpush.msra.mxu0 0.0
    %1687 = vmatpush.msra.mxu0 0.0
    %1688 = vmatpush.msra.mxu0 %v1511
    %1689 = vmatpush.msra.mxu0 %v1510
    %1690 = vmatmul.f32.gmra.mxu0 %v1672
    %v1691 = vpop.f32.mrf.mxu0
    %v1692 = vadd.f32 0.0, %v1691
    %1693 = vdwg.mxu0
    %v1694 = vadd.f32 %v1439, %v1667
    %v1695 = vxor.u32 %v1694, 2147483648
    %v1696 = vmul.f32 %v1695, 1.442695
    %v1697 = vpow.pop %v1696
    %v1698 = vadd.f32 %v1697, 1.0
    %v1699 = vrcp.pop %v1698
    %v1700 = vmul.f32 %v1698, %v1699
    %v1701 = vsub.f32 1.0, %v1700
    %v1702 = vmul.f32 %v1699, %v1701
    %v1703 = vadd.f32 %v1699, %v1702
    %vm1704 = vweird.f32 %v1698
    %vm1705 = vweird.f32 %v1699
    %vm1706 = vmor %vm1704, %vm1705
    %v1707 = vsel %vm1706, %v1699, %v1703
    %v1708 = vand.u32 2147483647, %v1698
    %vm1709 = vcmp.eq.f32.partialorder %v1708, 8.507059e+37
    %v1710 = vand.u32 %v1698, 2147483648
    %v1711 = vor.u32 1.1754944e-38, %v1710
    %v1712 = vsel %vm1709, %v1711, %v1707
    %v1713 = vmul.f32 1.0, %v1712
    %v1714 = vadd.f32 %v1667, %v1579
    %1716 = vrot.lane.b32.xlu0 %v1714, 96
    %v1717 = vpop.permute.xlu0 %1716
    %v1719 = vmul.f32 %v1713, %v1717
    %1721 = vrot.lane.b32.xlu0 %v1719, 32
    %v1722 = vpop.permute.xlu0 %1721
    %v1724 = vadd.f32 %v1439, %v1722
    %v1725 = vtanh.pop %v1724
    %v1726 = vsub.f32 1.0, %v1713
    %1728 = vrot.lane.b32.xlu0 %v1725, 112
    %v1729 = vpop.permute.xlu0 %1728
    %v1731 = vmul.f32 %v1726, %v1729
    %v1732 = vmul.f32 %v1713, %v1600
    %v1733 = vadd.f32 %v1731, %v1732
    %v1734 = vadd.f32 %v1503, %v1692
    %v1735 = vxor.u32 %v1734, 2147483648
    %v1736 = vmul.f32 %v1735, 1.442695
    %v1737 = vpow.pop %v1736
    %v1738 = vadd.f32 %v1737, 1.0
    %v1739 = vrcp.pop %v1738
    %v1740 = vmul.f32 %v1738, %v1739
    %v1741 = vsub.f32 1.0, %v1740
    %v1742 = vmul.f32 %v1739, %v1741
    %v1743 = vadd.f32 %v1739, %v1742
    %vm1744 = vweird.f32 %v1738
    %vm1745 = vweird.f32 %v1739
    %vm1746 = vmor %vm1744, %vm1745
    %v1747 = vsel %vm1746, %v1739, %v1743
    %v1748 = vand.u32 2147483647, %v1738
    %vm1749 = vcmp.eq.f32.partialorder %v1748, 8.507059e+37
    %v1750 = vand.u32 %v1738, 2147483648
    %v1751 = vor.u32 1.1754944e-38, %v1750
    %v1752 = vsel %vm1749, %v1751, %v1747
    %v1753 = vmul.f32 1.0, %v1752
    %v1754 = vadd.f32 %v1692, %v1622
    %1756 = vrot.lane.b32.xlu0 %v1754, 96
    %v1757 = vpop.permute.xlu0 %1756
    %v1759 = vmul.f32 %v1753, %v1757
    %1761 = vrot.lane.b32.xlu0 %v1759, 32
    %v1762 = vpop.permute.xlu0 %1761
    %v1764 = vadd.f32 %v1503, %v1762
    %v1765 = vtanh.pop %v1764
    %v1766 = vsub.f32 1.0, %v1753
    %1768 = vrot.lane.b32.xlu0 %v1765, 112
    %v1769 = vpop.permute.xlu0 %1768
    %v1771 = vmul.f32 %v1766, %v1769
    %v1772 = vmul.f32 %v1753, %v1643
    %v1773 = vadd.f32 %v1771, %v1772
    %1775 = vrot.lane.b32.xlu0 %v1733, 112
    %v1776 = vpop.permute.xlu0 %1775
    %v1777 = vsel %vm309, %v1776, 0
    %1779 = vmatpush.msra.mxu0 0.0
    %1780 = vmatpush.msra.mxu0 0.0
    %1781 = vmatpush.msra.mxu0 0.0
    %1782 = vmatpush.msra.mxu0 0.0
    %1783 = vmatpush.msra.mxu0 0.0
    %1784 = vmatpush.msra.mxu0 0.0
    %1785 = vmatpush.msra.mxu0 0.0
    %1786 = vmatpush.msra.mxu0 0.0
    %1787 = vmatpush.msra.mxu0 0.0
    %1788 = vmatpush.msra.mxu0 0.0
    %1789 = vmatpush.msra.mxu0 0.0
    %1790 = vmatpush.msra.mxu0 0.0
    %1791 = vmatpush.msra.mxu0 0.0
    %1792 = vmatpush.msra.mxu0 0.0
    %1793 = vmatpush.msra.mxu0 %v1509
    %1794 = vmatpush.msra.mxu0 %v1508
    %1795 = vmatmul.f32.gmra.mxu0 %v1777
    %v1796 = vpop.f32.mrf.mxu0
    %v1797 = vadd.f32 0.0, %v1796
    %1798 = vdwg.mxu0
    %1800 = vrot.lane.b32.xlu0 %v1773, 112
    %v1801 = vpop.permute.xlu0 %1800
    %v1802 = vsel %vm309, %v1801, 0
    %1804 = vmatpush.msra.mxu0 0.0
    %1805 = vmatpush.msra.mxu0 0.0
    %1806 = vmatpush.msra.mxu0 0.0
    %1807 = vmatpush.msra.mxu0 0.0
    %1808 = vmatpush.msra.mxu0 0.0
    %1809 = vmatpush.msra.mxu0 0.0
    %1810 = vmatpush.msra.mxu0 0.0
    %1811 = vmatpush.msra.mxu0 0.0
    %1812 = vmatpush.msra.mxu0 0.0
    %1813 = vmatpush.msra.mxu0 0.0
    %1814 = vmatpush.msra.mxu0 0.0
    %1815 = vmatpush.msra.mxu0 0.0
    %1816 = vmatpush.msra.mxu0 0.0
    %1817 = vmatpush.msra.mxu0 0.0
    %1818 = vmatpush.msra.mxu0 %v1511
    %1819 = vmatpush.msra.mxu0 %v1510
    %1820 = vmatmul.f32.gmra.mxu0 %v1802
    %v1821 = vpop.f32.mrf.mxu0
    %v1822 = vadd.f32 0.0, %v1821
    %1823 = vdwg.mxu0
    %v1824 = vadd.f32 %v1442, %v1797
    %v1825 = vxor.u32 %v1824, 2147483648
    %v1826 = vmul.f32 %v1825, 1.442695
    %v1827 = vpow.pop %v1826
    %v1828 = vadd.f32 %v1827, 1.0
    %v1829 = vrcp.pop %v1828
    %v1830 = vmul.f32 %v1828, %v1829
    %v1831 = vsub.f32 1.0, %v1830
    %v1832 = vmul.f32 %v1829, %v1831
    %v1833 = vadd.f32 %v1829, %v1832
    %vm1834 = vweird.f32 %v1828
    %vm1835 = vweird.f32 %v1829
    %vm1836 = vmor %vm1834, %vm1835
    %v1837 = vsel %vm1836, %v1829, %v1833
    %v1838 = vand.u32 2147483647, %v1828
    %vm1839 = vcmp.eq.f32.partialorder %v1838, 8.507059e+37
    %v1840 = vand.u32 %v1828, 2147483648
    %v1841 = vor.u32 1.1754944e-38, %v1840
    %v1842 = vsel %vm1839, %v1841, %v1837
    %v1843 = vmul.f32 1.0, %v1842
    %v1844 = vadd.f32 %v1797, %v1579
    %1846 = vrot.lane.b32.xlu0 %v1844, 96
    %v1847 = vpop.permute.xlu0 %1846
    %v1849 = vmul.f32 %v1843, %v1847
    %1851 = vrot.lane.b32.xlu0 %v1849, 32
    %v1852 = vpop.permute.xlu0 %1851
    %v1854 = vadd.f32 %v1442, %v1852
    %v1855 = vtanh.pop %v1854
    %v1856 = vsub.f32 1.0, %v1843
    %1858 = vrot.lane.b32.xlu0 %v1855, 112
    %v1859 = vpop.permute.xlu0 %1858
    %v1861 = vmul.f32 %v1856, %v1859
    %v1862 = vmul.f32 %v1843, %v1733
    %v1863 = vadd.f32 %v1861, %v1862
    %v1864 = vadd.f32 %v1500, %v1822
    %v1865 = vxor.u32 %v1864, 2147483648
    %v1866 = vmul.f32 %v1865, 1.442695
    %v1867 = vpow.pop %v1866
    %v1868 = vadd.f32 %v1867, 1.0
    %v1869 = vrcp.pop %v1868
    %v1870 = vmul.f32 %v1868, %v1869
    %v1871 = vsub.f32 1.0, %v1870
    %v1872 = vmul.f32 %v1869, %v1871
    %v1873 = vadd.f32 %v1869, %v1872
    %vm1874 = vweird.f32 %v1868
    %vm1875 = vweird.f32 %v1869
    %vm1876 = vmor %vm1874, %vm1875
    %v1877 = vsel %vm1876, %v1869, %v1873
    %v1878 = vand.u32 2147483647, %v1868
    %vm1879 = vcmp.eq.f32.partialorder %v1878, 8.507059e+37
    %v1880 = vand.u32 %v1868, 2147483648
    %v1881 = vor.u32 1.1754944e-38, %v1880
    %v1882 = vsel %vm1879, %v1881, %v1877
    %v1883 = vmul.f32 1.0, %v1882
    %v1884 = vadd.f32 %v1822, %v1622
    %1886 = vrot.lane.b32.xlu0 %v1884, 96
    %v1887 = vpop.permute.xlu0 %1886
    %v1889 = vmul.f32 %v1883, %v1887
    %1891 = vrot.lane.b32.xlu0 %v1889, 32
    %v1892 = vpop.permute.xlu0 %1891
    %v1894 = vadd.f32 %v1500, %v1892
    %v1895 = vtanh.pop %v1894
    %v1896 = vsub.f32 1.0, %v1883
    %1898 = vrot.lane.b32.xlu0 %v1895, 112
    %v1899 = vpop.permute.xlu0 %1898
    %v1901 = vmul.f32 %v1896, %v1899
    %v1902 = vmul.f32 %v1883, %v1773
    %v1903 = vadd.f32 %v1901, %v1902
    %1905 = vrot.lane.b32.xlu0 %v1863, 112
    %v1906 = vpop.permute.xlu0 %1905
    %v1907 = vsel %vm309, %v1906, 0
    %1909 = vmatpush.msra.mxu0 0.0
    %1910 = vmatpush.msra.mxu0 0.0
    %1911 = vmatpush.msra.mxu0 0.0
    %1912 = vmatpush.msra.mxu0 0.0
    %1913 = vmatpush.msra.mxu0 0.0
    %1914 = vmatpush.msra.mxu0 0.0
    %1915 = vmatpush.msra.mxu0 0.0
    %1916 = vmatpush.msra.mxu0 0.0
    %1917 = vmatpush.msra.mxu0 0.0
    %1918 = vmatpush.msra.mxu0 0.0
    %1919 = vmatpush.msra.mxu0 0.0
    %1920 = vmatpush.msra.mxu0 0.0
    %1921 = vmatpush.msra.mxu0 0.0
    %1922 = vmatpush.msra.mxu0 0.0
    %1923 = vmatpush.msra.mxu0 %v1509
    %1924 = vmatpush.msra.mxu0 %v1508
    %1925 = vmatmul.f32.gmra.mxu0 %v1907
    %v1926 = vpop.f32.mrf.mxu0
    %v1927 = vadd.f32 0.0, %v1926
    %1928 = vdwg.mxu0
    %1930 = vrot.lane.b32.xlu0 %v1903, 112
    %v1931 = vpop.permute.xlu0 %1930
    %v1932 = vsel %vm309, %v1931, 0
    %1934 = vmatpush.msra.mxu0 0.0
    %1935 = vmatpush.msra.mxu0 0.0
    %1936 = vmatpush.msra.mxu0 0.0
    %1937 = vmatpush.msra.mxu0 0.0
    %1938 = vmatpush.msra.mxu0 0.0
    %1939 = vmatpush.msra.mxu0 0.0
    %1940 = vmatpush.msra.mxu0 0.0
    %1941 = vmatpush.msra.mxu0 0.0
    %1942 = vmatpush.msra.mxu0 0.0
    %1943 = vmatpush.msra.mxu0 0.0
    %1944 = vmatpush.msra.mxu0 0.0
    %1945 = vmatpush.msra.mxu0 0.0
    %1946 = vmatpush.msra.mxu0 0.0
    %1947 = vmatpush.msra.mxu0 0.0
    %1948 = vmatpush.msra.mxu0 %v1511
    %1949 = vmatpush.msra.mxu0 %v1510
    %1950 = vmatmul.f32.gmra.mxu0 %v1932
    %v1951 = vpop.f32.mrf.mxu0
    %v1952 = vadd.f32 0.0, %v1951
    %1953 = vdwg.mxu0
    %v1954 = vadd.f32 %v1445, %v1927
    %v1955 = vxor.u32 %v1954, 2147483648
    %v1956 = vmul.f32 %v1955, 1.442695
    %v1957 = vpow.pop %v1956
    %v1958 = vadd.f32 %v1957, 1.0
    %v1959 = vrcp.pop %v1958
    %v1960 = vmul.f32 %v1958, %v1959
    %v1961 = vsub.f32 1.0, %v1960
    %v1962 = vmul.f32 %v1959, %v1961
    %v1963 = vadd.f32 %v1959, %v1962
    %vm1964 = vweird.f32 %v1958
    %vm1965 = vweird.f32 %v1959
    %vm1966 = vmor %vm1964, %vm1965
    %v1967 = vsel %vm1966, %v1959, %v1963
    %v1968 = vand.u32 2147483647, %v1958
    %vm1969 = vcmp.eq.f32.partialorder %v1968, 8.507059e+37
    %v1970 = vand.u32 %v1958, 2147483648
    %v1971 = vor.u32 1.1754944e-38, %v1970
    %v1972 = vsel %vm1969, %v1971, %v1967
    %v1973 = vmul.f32 1.0, %v1972
    %v1974 = vadd.f32 %v1927, %v1579
    %1976 = vrot.lane.b32.xlu0 %v1974, 96
    %v1977 = vpop.permute.xlu0 %1976
    %v1979 = vmul.f32 %v1973, %v1977
    %1981 = vrot.lane.b32.xlu0 %v1979, 32
    %v1982 = vpop.permute.xlu0 %1981
    %v1984 = vadd.f32 %v1445, %v1982
    %v1985 = vtanh.pop %v1984
    %v1986 = vsub.f32 1.0, %v1973
    %1988 = vrot.lane.b32.xlu0 %v1985, 112
    %v1989 = vpop.permute.xlu0 %1988
    %v1991 = vmul.f32 %v1986, %v1989
    %v1992 = vmul.f32 %v1973, %v1863
    %v1993 = vadd.f32 %v1991, %v1992
    %v1994 = vadd.f32 %v1497, %v1952
    %v1995 = vxor.u32 %v1994, 2147483648
    %v1996 = vmul.f32 %v1995, 1.442695
    %v1997 = vpow.pop %v1996
    %v1998 = vadd.f32 %v1997, 1.0
    %v1999 = vrcp.pop %v1998
    %v2000 = vmul.f32 %v1998, %v1999
    %v2001 = vsub.f32 1.0, %v2000
    %v2002 = vmul.f32 %v1999, %v2001
    %v2003 = vadd.f32 %v1999, %v2002
    %vm2004 = vweird.f32 %v1998
    %vm2005 = vweird.f32 %v1999
    %vm2006 = vmor %vm2004, %vm2005
    %v2007 = vsel %vm2006, %v1999, %v2003
    %v2008 = vand.u32 2147483647, %v1998
    %vm2009 = vcmp.eq.f32.partialorder %v2008, 8.507059e+37
    %v2010 = vand.u32 %v1998, 2147483648
    %v2011 = vor.u32 1.1754944e-38, %v2010
    %v2012 = vsel %vm2009, %v2011, %v2007
    %v2013 = vmul.f32 1.0, %v2012
    %v2014 = vadd.f32 %v1952, %v1622
    %2016 = vrot.lane.b32.xlu0 %v2014, 96
    %v2017 = vpop.permute.xlu0 %2016
    %v2019 = vmul.f32 %v2013, %v2017
    %2021 = vrot.lane.b32.xlu0 %v2019, 32
    %v2022 = vpop.permute.xlu0 %2021
    %v2024 = vadd.f32 %v1497, %v2022
    %v2025 = vtanh.pop %v2024
    %v2026 = vsub.f32 1.0, %v2013
    %2028 = vrot.lane.b32.xlu0 %v2025, 112
    %v2029 = vpop.permute.xlu0 %2028
    %v2031 = vmul.f32 %v2026, %v2029
    %v2032 = vmul.f32 %v2013, %v1903
    %v2033 = vadd.f32 %v2031, %v2032
    %2035 = vrot.lane.b32.xlu0 %v1993, 112
    %v2036 = vpop.permute.xlu0 %2035
    %v2037 = vsel %vm309, %v2036, 0
    %2039 = vmatpush.msra.mxu0 0.0
    %2040 = vmatpush.msra.mxu0 0.0
    %2041 = vmatpush.msra.mxu0 0.0
    %2042 = vmatpush.msra.mxu0 0.0
    %2043 = vmatpush.msra.mxu0 0.0
    %2044 = vmatpush.msra.mxu0 0.0
    %2045 = vmatpush.msra.mxu0 0.0
    %2046 = vmatpush.msra.mxu0 0.0
    %2047 = vmatpush.msra.mxu0 0.0
    %2048 = vmatpush.msra.mxu0 0.0
    %2049 = vmatpush.msra.mxu0 0.0
    %2050 = vmatpush.msra.mxu0 0.0
    %2051 = vmatpush.msra.mxu0 0.0
    %2052 = vmatpush.msra.mxu0 0.0
    %2053 = vmatpush.msra.mxu0 %v1509
    %2054 = vmatpush.msra.mxu0 %v1508
    %2055 = vmatmul.f32.gmra.mxu0 %v2037
    %v2056 = vpop.f32.mrf.mxu0
    %v2057 = vadd.f32 0.0, %v2056
    %2058 = vdwg.mxu0
    %2060 = vrot.lane.b32.xlu0 %v2033, 112
    %v2061 = vpop.permute.xlu0 %2060
    %v2062 = vsel %vm309, %v2061, 0
    %2064 = vmatpush.msra.mxu0 0.0
    %2065 = vmatpush.msra.mxu0 0.0
    %2066 = vmatpush.msra.mxu0 0.0
    %2067 = vmatpush.msra.mxu0 0.0
    %2068 = vmatpush.msra.mxu0 0.0
    %2069 = vmatpush.msra.mxu0 0.0
    %2070 = vmatpush.msra.mxu0 0.0
    %2071 = vmatpush.msra.mxu0 0.0
    %2072 = vmatpush.msra.mxu0 0.0
    %2073 = vmatpush.msra.mxu0 0.0
    %2074 = vmatpush.msra.mxu0 0.0
    %2075 = vmatpush.msra.mxu0 0.0
    %2076 = vmatpush.msra.mxu0 0.0
    %2077 = vmatpush.msra.mxu0 0.0
    %2078 = vmatpush.msra.mxu0 %v1511
    %2079 = vmatpush.msra.mxu0 %v1510
    %2080 = vmatmul.f32.gmra.mxu0 %v2062
    %v2081 = vpop.f32.mrf.mxu0
    %v2082 = vadd.f32 0.0, %v2081
    %2083 = vdwg.mxu0
    %v2084 = vadd.f32 %v1448, %v2057
    %v2085 = vxor.u32 %v2084, 2147483648
    %v2086 = vmul.f32 %v2085, 1.442695
    %v2087 = vpow.pop %v2086
    %v2088 = vadd.f32 %v2087, 1.0
    %v2089 = vrcp.pop %v2088
    %v2090 = vmul.f32 %v2088, %v2089
    %v2091 = vsub.f32 1.0, %v2090
    %v2092 = vmul.f32 %v2089, %v2091
    %v2093 = vadd.f32 %v2089, %v2092
    %vm2094 = vweird.f32 %v2088
    %vm2095 = vweird.f32 %v2089
    %vm2096 = vmor %vm2094, %vm2095
    %v2097 = vsel %vm2096, %v2089, %v2093
    %v2098 = vand.u32 2147483647, %v2088
    %vm2099 = vcmp.eq.f32.partialorder %v2098, 8.507059e+37
    %v2100 = vand.u32 %v2088, 2147483648
    %v2101 = vor.u32 1.1754944e-38, %v2100
    %v2102 = vsel %vm2099, %v2101, %v2097
    %v2103 = vmul.f32 1.0, %v2102
    %v2104 = vadd.f32 %v2057, %v1579
    %2106 = vrot.lane.b32.xlu0 %v2104, 96
    %v2107 = vpop.permute.xlu0 %2106
    %v2109 = vmul.f32 %v2103, %v2107
    %2111 = vrot.lane.b32.xlu0 %v2109, 32
    %v2112 = vpop.permute.xlu0 %2111
    %v2114 = vadd.f32 %v1448, %v2112
    %v2115 = vtanh.pop %v2114
    %v2116 = vsub.f32 1.0, %v2103
    %2118 = vrot.lane.b32.xlu0 %v2115, 112
    %v2119 = vpop.permute.xlu0 %2118
    %v2121 = vmul.f32 %v2116, %v2119
    %v2122 = vmul.f32 %v2103, %v1993
    %v2123 = vadd.f32 %v2121, %v2122
    %v2124 = vadd.f32 %v1494, %v2082
    %v2125 = vxor.u32 %v2124, 2147483648
    %v2126 = vmul.f32 %v2125, 1.442695
    %v2127 = vpow.pop %v2126
    %v2128 = vadd.f32 %v2127, 1.0
    %v2129 = vrcp.pop %v2128
    %v2130 = vmul.f32 %v2128, %v2129
    %v2131 = vsub.f32 1.0, %v2130
    %v2132 = vmul.f32 %v2129, %v2131
    %v2133 = vadd.f32 %v2129, %v2132
    %vm2134 = vweird.f32 %v2128
    %vm2135 = vweird.f32 %v2129
    %vm2136 = vmor %vm2134, %vm2135
    %v2137 = vsel %vm2136, %v2129, %v2133
    %v2138 = vand.u32 2147483647, %v2128
    %vm2139 = vcmp.eq.f32.partialorder %v2138, 8.507059e+37
    %v2140 = vand.u32 %v2128, 2147483648
    %v2141 = vor.u32 1.1754944e-38, %v2140
    %v2142 = vsel %vm2139, %v2141, %v2137
    %v2143 = vmul.f32 1.0, %v2142
    %v2144 = vadd.f32 %v2082, %v1622
    %2146 = vrot.lane.b32.xlu0 %v2144, 96
    %v2147 = vpop.permute.xlu0 %2146
    %v2149 = vmul.f32 %v2143, %v2147
    %2151 = vrot.lane.b32.xlu0 %v2149, 32
    %v2152 = vpop.permute.xlu0 %2151
    %v2154 = vadd.f32 %v1494, %v2152
    %v2155 = vtanh.pop %v2154
    %v2156 = vsub.f32 1.0, %v2143
    %2158 = vrot.lane.b32.xlu0 %v2155, 112
    %v2159 = vpop.permute.xlu0 %2158
    %v2161 = vmul.f32 %v2156, %v2159
    %v2162 = vmul.f32 %v2143, %v2033
    %v2163 = vadd.f32 %v2161, %v2162
    %2165 = vrot.lane.b32.xlu0 %v2123, 112
    %v2166 = vpop.permute.xlu0 %2165
    %v2167 = vsel %vm309, %v2166, 0
    %2169 = vmatpush.msra.mxu0 0.0
    %2170 = vmatpush.msra.mxu0 0.0
    %2171 = vmatpush.msra.mxu0 0.0
    %2172 = vmatpush.msra.mxu0 0.0
    %2173 = vmatpush.msra.mxu0 0.0
    %2174 = vmatpush.msra.mxu0 0.0
    %2175 = vmatpush.msra.mxu0 0.0
    %2176 = vmatpush.msra.mxu0 0.0
    %2177 = vmatpush.msra.mxu0 0.0
    %2178 = vmatpush.msra.mxu0 0.0
    %2179 = vmatpush.msra.mxu0 0.0
    %2180 = vmatpush.msra.mxu0 0.0
    %2181 = vmatpush.msra.mxu0 0.0
    %2182 = vmatpush.msra.mxu0 0.0
    %2183 = vmatpush.msra.mxu0 %v1509
    %2184 = vmatpush.msra.mxu0 %v1508
    %2185 = vmatmul.f32.gmra.mxu0 %v2167
    %v2186 = vpop.f32.mrf.mxu0
    %v2187 = vadd.f32 0.0, %v2186
    %2188 = vdwg.mxu0
    %2190 = vrot.lane.b32.xlu0 %v2163, 112
    %v2191 = vpop.permute.xlu0 %2190
    %v2192 = vsel %vm309, %v2191, 0
    %2194 = vmatpush.msra.mxu0 0.0
    %2195 = vmatpush.msra.mxu0 0.0
    %2196 = vmatpush.msra.mxu0 0.0
    %2197 = vmatpush.msra.mxu0 0.0
    %2198 = vmatpush.msra.mxu0 0.0
    %2199 = vmatpush.msra.mxu0 0.0
    %2200 = vmatpush.msra.mxu0 0.0
    %2201 = vmatpush.msra.mxu0 0.0
    %2202 = vmatpush.msra.mxu0 0.0
    %2203 = vmatpush.msra.mxu0 0.0
    %2204 = vmatpush.msra.mxu0 0.0
    %2205 = vmatpush.msra.mxu0 0.0
    %2206 = vmatpush.msra.mxu0 0.0
    %2207 = vmatpush.msra.mxu0 0.0
    %2208 = vmatpush.msra.mxu0 %v1511
    %2209 = vmatpush.msra.mxu0 %v1510
    %2210 = vmatmul.f32.gmra.mxu0 %v2192
    %v2211 = vpop.f32.mrf.mxu0
    %v2212 = vadd.f32 0.0, %v2211
    %2213 = vdwg.mxu0
    %v2214 = vadd.f32 %v1451, %v2187
    %v2215 = vxor.u32 %v2214, 2147483648
    %v2216 = vmul.f32 %v2215, 1.442695
    %v2217 = vpow.pop %v2216
    %v2218 = vadd.f32 %v2217, 1.0
    %v2219 = vrcp.pop %v2218
    %v2220 = vmul.f32 %v2218, %v2219
    %v2221 = vsub.f32 1.0, %v2220
    %v2222 = vmul.f32 %v2219, %v2221
    %v2223 = vadd.f32 %v2219, %v2222
    %vm2224 = vweird.f32 %v2218
    %vm2225 = vweird.f32 %v2219
    %vm2226 = vmor %vm2224, %vm2225
    %v2227 = vsel %vm2226, %v2219, %v2223
    %v2228 = vand.u32 2147483647, %v2218
    %vm2229 = vcmp.eq.f32.partialorder %v2228, 8.507059e+37
    %v2230 = vand.u32 %v2218, 2147483648
    %v2231 = vor.u32 1.1754944e-38, %v2230
    %v2232 = vsel %vm2229, %v2231, %v2227
    %v2233 = vmul.f32 1.0, %v2232
    %v2234 = vadd.f32 %v2187, %v1579
    %2236 = vrot.lane.b32.xlu0 %v2234, 96
    %v2237 = vpop.permute.xlu0 %2236
    %v2239 = vmul.f32 %v2233, %v2237
    %2241 = vrot.lane.b32.xlu0 %v2239, 32
    %v2242 = vpop.permute.xlu0 %2241
    %v2244 = vadd.f32 %v1451, %v2242
    %v2245 = vtanh.pop %v2244
    %v2246 = vsub.f32 1.0, %v2233
    %2248 = vrot.lane.b32.xlu0 %v2245, 112
    %v2249 = vpop.permute.xlu0 %2248
    %v2251 = vmul.f32 %v2246, %v2249
    %v2252 = vmul.f32 %v2233, %v2123
    %v2253 = vadd.f32 %v2251, %v2252
    %v2254 = vadd.f32 %v1491, %v2212
    %v2255 = vxor.u32 %v2254, 2147483648
    %v2256 = vmul.f32 %v2255, 1.442695
    %v2257 = vpow.pop %v2256
    %v2258 = vadd.f32 %v2257, 1.0
    %v2259 = vrcp.pop %v2258
    %v2260 = vmul.f32 %v2258, %v2259
    %v2261 = vsub.f32 1.0, %v2260
    %v2262 = vmul.f32 %v2259, %v2261
    %v2263 = vadd.f32 %v2259, %v2262
    %vm2264 = vweird.f32 %v2258
    %vm2265 = vweird.f32 %v2259
    %vm2266 = vmor %vm2264, %vm2265
    %v2267 = vsel %vm2266, %v2259, %v2263
    %v2268 = vand.u32 2147483647, %v2258
    %vm2269 = vcmp.eq.f32.partialorder %v2268, 8.507059e+37
    %v2270 = vand.u32 %v2258, 2147483648
    %v2271 = vor.u32 1.1754944e-38, %v2270
    %v2272 = vsel %vm2269, %v2271, %v2267
    %v2273 = vmul.f32 1.0, %v2272
    %v2274 = vadd.f32 %v2212, %v1622
    %2276 = vrot.lane.b32.xlu0 %v2274, 96
    %v2277 = vpop.permute.xlu0 %2276
    %v2279 = vmul.f32 %v2273, %v2277
    %2281 = vrot.lane.b32.xlu0 %v2279, 32
    %v2282 = vpop.permute.xlu0 %2281
    %v2284 = vadd.f32 %v1491, %v2282
    %v2285 = vtanh.pop %v2284
    %v2286 = vsub.f32 1.0, %v2273
    %2288 = vrot.lane.b32.xlu0 %v2285, 112
    %v2289 = vpop.permute.xlu0 %2288
    %v2291 = vmul.f32 %v2286, %v2289
    %v2292 = vmul.f32 %v2273, %v2163
    %v2293 = vadd.f32 %v2291, %v2292
    %2295 = vrot.lane.b32.xlu0 %v2253, 112
    %v2296 = vpop.permute.xlu0 %2295
    %v2297 = vsel %vm309, %v2296, 0
    %2299 = vmatpush.msra.mxu0 0.0
    %2300 = vmatpush.msra.mxu0 0.0
    %2301 = vmatpush.msra.mxu0 0.0
    %2302 = vmatpush.msra.mxu0 0.0
    %2303 = vmatpush.msra.mxu0 0.0
    %2304 = vmatpush.msra.mxu0 0.0
    %2305 = vmatpush.msra.mxu0 0.0
    %2306 = vmatpush.msra.mxu0 0.0
    %2307 = vmatpush.msra.mxu0 0.0
    %2308 = vmatpush.msra.mxu0 0.0
    %2309 = vmatpush.msra.mxu0 0.0
    %2310 = vmatpush.msra.mxu0 0.0
    %2311 = vmatpush.msra.mxu0 0.0
    %2312 = vmatpush.msra.mxu0 0.0
    %2313 = vmatpush.msra.mxu0 %v1509
    %2314 = vmatpush.msra.mxu0 %v1508
    %2315 = vmatmul.f32.gmra.mxu0 %v2297
    %v2316 = vpop.f32.mrf.mxu0
    %v2317 = vadd.f32 0.0, %v2316
    %2318 = vdwg.mxu0
    %2320 = vrot.lane.b32.xlu0 %v2293, 112
    %v2321 = vpop.permute.xlu0 %2320
    %v2322 = vsel %vm309, %v2321, 0
    %2324 = vmatpush.msra.mxu0 0.0
    %2325 = vmatpush.msra.mxu0 0.0
    %2326 = vmatpush.msra.mxu0 0.0
    %2327 = vmatpush.msra.mxu0 0.0
    %2328 = vmatpush.msra.mxu0 0.0
    %2329 = vmatpush.msra.mxu0 0.0
    %2330 = vmatpush.msra.mxu0 0.0
    %2331 = vmatpush.msra.mxu0 0.0
    %2332 = vmatpush.msra.mxu0 0.0
    %2333 = vmatpush.msra.mxu0 0.0
    %2334 = vmatpush.msra.mxu0 0.0
    %2335 = vmatpush.msra.mxu0 0.0
    %2336 = vmatpush.msra.mxu0 0.0
    %2337 = vmatpush.msra.mxu0 0.0
    %2338 = vmatpush.msra.mxu0 %v1511
    %2339 = vmatpush.msra.mxu0 %v1510
    %2340 = vmatmul.f32.gmra.mxu0 %v2322
    %v2341 = vpop.f32.mrf.mxu0
    %v2342 = vadd.f32 0.0, %v2341
    %2343 = vdwg.mxu0
    %v2344 = vadd.f32 %v1454, %v2317
    %v2345 = vxor.u32 %v2344, 2147483648
    %v2346 = vmul.f32 %v2345, 1.442695
    %v2347 = vpow.pop %v2346
    %v2348 = vadd.f32 %v2347, 1.0
    %v2349 = vrcp.pop %v2348
    %v2350 = vmul.f32 %v2348, %v2349
    %v2351 = vsub.f32 1.0, %v2350
    %v2352 = vmul.f32 %v2349, %v2351
    %v2353 = vadd.f32 %v2349, %v2352
    %vm2354 = vweird.f32 %v2348
    %vm2355 = vweird.f32 %v2349
    %vm2356 = vmor %vm2354, %vm2355
    %v2357 = vsel %vm2356, %v2349, %v2353
    %v2358 = vand.u32 2147483647, %v2348
    %vm2359 = vcmp.eq.f32.partialorder %v2358, 8.507059e+37
    %v2360 = vand.u32 %v2348, 2147483648
    %v2361 = vor.u32 1.1754944e-38, %v2360
    %v2362 = vsel %vm2359, %v2361, %v2357
    %v2363 = vmul.f32 1.0, %v2362
    %v2364 = vadd.f32 %v2317, %v1579
    %2366 = vrot.lane.b32.xlu0 %v2364, 96
    %v2367 = vpop.permute.xlu0 %2366
    %v2369 = vmul.f32 %v2363, %v2367
    %2371 = vrot.lane.b32.xlu0 %v2369, 32
    %v2372 = vpop.permute.xlu0 %2371
    %v2374 = vadd.f32 %v1454, %v2372
    %v2375 = vtanh.pop %v2374
    %v2376 = vsub.f32 1.0, %v2363
    %2378 = vrot.lane.b32.xlu0 %v2375, 112
    %v2379 = vpop.permute.xlu0 %2378
    %v2381 = vmul.f32 %v2376, %v2379
    %v2382 = vmul.f32 %v2363, %v2253
    %v2383 = vadd.f32 %v2381, %v2382
    %v2384 = vadd.f32 %v1488, %v2342
    %v2385 = vxor.u32 %v2384, 2147483648
    %v2386 = vmul.f32 %v2385, 1.442695
    %v2387 = vpow.pop %v2386
    %v2388 = vadd.f32 %v2387, 1.0
    %v2389 = vrcp.pop %v2388
    %v2390 = vmul.f32 %v2388, %v2389
    %v2391 = vsub.f32 1.0, %v2390
    %v2392 = vmul.f32 %v2389, %v2391
    %v2393 = vadd.f32 %v2389, %v2392
    %vm2394 = vweird.f32 %v2388
    %vm2395 = vweird.f32 %v2389
    %vm2396 = vmor %vm2394, %vm2395
    %v2397 = vsel %vm2396, %v2389, %v2393
    %v2398 = vand.u32 2147483647, %v2388
    %vm2399 = vcmp.eq.f32.partialorder %v2398, 8.507059e+37
    %v2400 = vand.u32 %v2388, 2147483648
    %v2401 = vor.u32 1.1754944e-38, %v2400
    %v2402 = vsel %vm2399, %v2401, %v2397
    %v2403 = vmul.f32 1.0, %v2402
    %v2404 = vadd.f32 %v2342, %v1622
    %2406 = vrot.lane.b32.xlu0 %v2404, 96
    %v2407 = vpop.permute.xlu0 %2406
    %v2409 = vmul.f32 %v2403, %v2407
    %2411 = vrot.lane.b32.xlu0 %v2409, 32
    %v2412 = vpop.permute.xlu0 %2411
    %v2414 = vadd.f32 %v1488, %v2412
    %v2415 = vtanh.pop %v2414
    %v2416 = vsub.f32 1.0, %v2403
    %2418 = vrot.lane.b32.xlu0 %v2415, 112
    %v2419 = vpop.permute.xlu0 %2418
    %v2421 = vmul.f32 %v2416, %v2419
    %v2422 = vmul.f32 %v2403, %v2293
    %v2423 = vadd.f32 %v2421, %v2422
    %2425 = vrot.lane.b32.xlu0 %v2383, 112
    %v2426 = vpop.permute.xlu0 %2425
    %v2427 = vsel %vm309, %v2426, 0
    %2429 = vmatpush.msra.mxu0 0.0
    %2430 = vmatpush.msra.mxu0 0.0
    %2431 = vmatpush.msra.mxu0 0.0
    %2432 = vmatpush.msra.mxu0 0.0
    %2433 = vmatpush.msra.mxu0 0.0
    %2434 = vmatpush.msra.mxu0 0.0
    %2435 = vmatpush.msra.mxu0 0.0
    %2436 = vmatpush.msra.mxu0 0.0
    %2437 = vmatpush.msra.mxu0 0.0
    %2438 = vmatpush.msra.mxu0 0.0
    %2439 = vmatpush.msra.mxu0 0.0
    %2440 = vmatpush.msra.mxu0 0.0
    %2441 = vmatpush.msra.mxu0 0.0
    %2442 = vmatpush.msra.mxu0 0.0
    %2443 = vmatpush.msra.mxu0 %v1509
    %2444 = vmatpush.msra.mxu0 %v1508
    %2445 = vmatmul.f32.gmra.mxu0 %v2427
    %v2446 = vpop.f32.mrf.mxu0
    %v2447 = vadd.f32 0.0, %v2446
    %2448 = vdwg.mxu0
    %2450 = vrot.lane.b32.xlu0 %v2423, 112
    %v2451 = vpop.permute.xlu0 %2450
    %v2452 = vsel %vm309, %v2451, 0
    %2454 = vmatpush.msra.mxu0 0.0
    %2455 = vmatpush.msra.mxu0 0.0
    %2456 = vmatpush.msra.mxu0 0.0
    %2457 = vmatpush.msra.mxu0 0.0
    %2458 = vmatpush.msra.mxu0 0.0
    %2459 = vmatpush.msra.mxu0 0.0
    %2460 = vmatpush.msra.mxu0 0.0
    %2461 = vmatpush.msra.mxu0 0.0
    %2462 = vmatpush.msra.mxu0 0.0
    %2463 = vmatpush.msra.mxu0 0.0
    %2464 = vmatpush.msra.mxu0 0.0
    %2465 = vmatpush.msra.mxu0 0.0
    %2466 = vmatpush.msra.mxu0 0.0
    %2467 = vmatpush.msra.mxu0 0.0
    %2468 = vmatpush.msra.mxu0 %v1511
    %2469 = vmatpush.msra.mxu0 %v1510
    %2470 = vmatmul.f32.gmra.mxu0 %v2452
    %v2471 = vpop.f32.mrf.mxu0
    %v2472 = vadd.f32 0.0, %v2471
    %2473 = vdwg.mxu0
    %v2474 = vadd.f32 %v1457, %v2447
    %v2475 = vxor.u32 %v2474, 2147483648
    %v2476 = vmul.f32 %v2475, 1.442695
    %v2477 = vpow.pop %v2476
    %v2478 = vadd.f32 %v2477, 1.0
    %v2479 = vrcp.pop %v2478
    %v2480 = vmul.f32 %v2478, %v2479
    %v2481 = vsub.f32 1.0, %v2480
    %v2482 = vmul.f32 %v2479, %v2481
    %v2483 = vadd.f32 %v2479, %v2482
    %vm2484 = vweird.f32 %v2478
    %vm2485 = vweird.f32 %v2479
    %vm2486 = vmor %vm2484, %vm2485
    %v2487 = vsel %vm2486, %v2479, %v2483
    %v2488 = vand.u32 2147483647, %v2478
    %vm2489 = vcmp.eq.f32.partialorder %v2488, 8.507059e+37
    %v2490 = vand.u32 %v2478, 2147483648
    %v2491 = vor.u32 1.1754944e-38, %v2490
    %v2492 = vsel %vm2489, %v2491, %v2487
    %v2493 = vmul.f32 1.0, %v2492
    %v2494 = vadd.f32 %v2447, %v1579
    %2496 = vrot.lane.b32.xlu0 %v2494, 96
    %v2497 = vpop.permute.xlu0 %2496
    %v2499 = vmul.f32 %v2493, %v2497
    %2501 = vrot.lane.b32.xlu0 %v2499, 32
    %v2502 = vpop.permute.xlu0 %2501
    %v2504 = vadd.f32 %v1457, %v2502
    %v2505 = vtanh.pop %v2504
    %v2506 = vsub.f32 1.0, %v2493
    %2508 = vrot.lane.b32.xlu0 %v2505, 112
    %v2509 = vpop.permute.xlu0 %2508
    %v2511 = vmul.f32 %v2506, %v2509
    %v2512 = vmul.f32 %v2493, %v2383
    %v2513 = vadd.f32 %v2511, %v2512
    %v2514 = vadd.f32 %v1485, %v2472
    %v2515 = vxor.u32 %v2514, 2147483648
    %v2516 = vmul.f32 %v2515, 1.442695
    %v2517 = vpow.pop %v2516
    %v2518 = vadd.f32 %v2517, 1.0
    %v2519 = vrcp.pop %v2518
    %v2520 = vmul.f32 %v2518, %v2519
    %v2521 = vsub.f32 1.0, %v2520
    %v2522 = vmul.f32 %v2519, %v2521
    %v2523 = vadd.f32 %v2519, %v2522
    %vm2524 = vweird.f32 %v2518
    %vm2525 = vweird.f32 %v2519
    %vm2526 = vmor %vm2524, %vm2525
    %v2527 = vsel %vm2526, %v2519, %v2523
    %v2528 = vand.u32 2147483647, %v2518
    %vm2529 = vcmp.eq.f32.partialorder %v2528, 8.507059e+37
    %v2530 = vand.u32 %v2518, 2147483648
    %v2531 = vor.u32 1.1754944e-38, %v2530
    %v2532 = vsel %vm2529, %v2531, %v2527
    %v2533 = vmul.f32 1.0, %v2532
    %v2534 = vadd.f32 %v2472, %v1622
    %2536 = vrot.lane.b32.xlu0 %v2534, 96
    %v2537 = vpop.permute.xlu0 %2536
    %v2539 = vmul.f32 %v2533, %v2537
    %2541 = vrot.lane.b32.xlu0 %v2539, 32
    %v2542 = vpop.permute.xlu0 %2541
    %v2544 = vadd.f32 %v1485, %v2542
    %v2545 = vtanh.pop %v2544
    %v2546 = vsub.f32 1.0, %v2533
    %2548 = vrot.lane.b32.xlu0 %v2545, 112
    %v2549 = vpop.permute.xlu0 %2548
    %v2551 = vmul.f32 %v2546, %v2549
    %v2552 = vmul.f32 %v2533, %v2423
    %v2553 = vadd.f32 %v2551, %v2552
    %2554 = vst.msk [vmem:[%s17] sm:$0xff] %vm309, %v1373
    %2555 = vst.msk [vmem:[%s17] sm:$0xff] %vm444, %v1370
    %2557 = vrot.lane.b32.xlu0 %v2513, 16
    %v2558 = vpop.permute.xlu0 %2557
    %vm2560 = vcmask 392448
    %2561 = vst.msk [vmem:[%s17] sm:$0xff] %vm2560, %v2558
    %2563 = vrot.lane.b32.xlu0 %v2553, 32
    %v2564 = vpop.permute.xlu0 %2563
    %vm2566 = vcmask 523648
    %2567 = vst.msk [vmem:[%s17] sm:$0xff] %vm2566, %v2564
    // Predicated region
    $region102: #{encoder_forward.1} parent=1 // pred_check
      _
    $region103: #{encoder_forward.1} parent=1 // pred_check_branch
      %2569 = sbr.rel (0) target = $region105
    $region104: #{encoder_forward.1} parent=1 // pred_region
      _
    $region105: #{encoder_forward.1} parent=1 // pred_fallthru
      _
    // Predicated region
    $region106: #{encoder_forward.1} parent=1 // pred_check
      _
    $region107: #{encoder_forward.1} parent=1 // pred_check_branch
      %2571 = sbr.rel (0) target = $region109
    $region108: #{encoder_forward.1} parent=1 // pred_region
      _
    $region109: #{encoder_forward.1} parent=1 // pred_fallthru
      _
    %2572 = vsyncpa [#allocation4], 1
    %2573 = vsyncpa [#allocation6], 1
    %2574 = vsyncpa [#allocation9], 1
    %2575 = vsyncpa [#allocation12], 1
    %2576 = vsyncpa [#allocation15], 1

</llo_original>
